<compile_context>
chip_gen: v5e
topology: v5e:2x2
jax: 0.10.0
libtpu: 0.0.40
codegen_flags: <defaults>
</compile_context>

<pallas_src>
import functools
import math

import jax
import jax.numpy as jnp
from jax import lax
from jax.experimental import pallas as pl
from jax.experimental.pallas import tpu as pltpu


def _supcon_kernel(feat_ref, featT_ref, lab_col_ref, lab_row_ref, cnt_ref,
                   out_ref, m_ref, l_ref, s_ref, zd_ref, *,
                   loss_scale, num_pad_cols, tm, tn):
    i = pl.program_id(0)                 # anchor (row) tile   -- "parallel"
    j = pl.program_id(1)                 # contrast (col) tile -- softmax reduction
    last_j = pl.num_programs(1) - 1

    @pl.when(j == 0)
    def _init():
        m_ref[...] = jnp.full_like(m_ref, -1e30)
        l_ref[...] = jnp.zeros_like(l_ref)
        s_ref[...] = jnp.zeros_like(s_ref)
        zd_ref[...] = jnp.zeros_like(zd_ref)

    # Temperature-scaled logits tile.  1/T is folded into featT in the wrapper
    # and featT is pre-transposed, so the MXU contraction is (1, 0) with no
    # in-kernel transpose and no per-tile rescale/cast of the anchor tile.
    z = lax.dot_general(feat_ref[...], featT_ref[...],
                        dimension_numbers=(((1,), (0,)), ((), ())),
                        preferred_element_type=jnp.float32)        # (TM, TN)

    # Positive-pair indicator.  Padded columns carry label -1; real labels are
    # remapped to dense ids >= 0 in the wrapper, so no collision is possible.
    posf = (lab_col_ref[...] == lab_row_ref[...]).astype(jnp.float32)

    # Online softmax stats (self-contrast and zero-logit padded columns are
    # removed analytically at finalize); exp() runs exactly once per element.
    m_prev = m_ref[...]
    m_cur = jnp.maximum(m_prev, jnp.max(z, axis=1, keepdims=True))
    alpha = jnp.exp(m_prev - m_cur)
    p = jnp.exp(z - m_cur)
    l_ref[...] = alpha * l_ref[...] + jnp.sum(p, axis=1, keepdims=True)
    m_ref[...] = m_cur

    # Positive-pair sum on RAW (scaled) logits: no max shift -> no rescale.
    s_ref[...] = s_ref[...] + jnp.sum(z * posf, axis=1, keepdims=True)

    # Self-contrast logits: only on tiles that actually cross the diagonal.
    row0 = i * tm
    col0 = j * tn
    diag_here = jnp.logical_and(row0 < col0 + tn, col0 < row0 + tm)

    @pl.when(diag_here)
    def _grab_diag():
        r_ids = lax.broadcasted_iota(jnp.int32, (tm, tn), 0) + row0
        c_ids = lax.broadcasted_iota(jnp.int32, (tm, tn), 1) + col0
        zd_ref[...] = zd_ref[...] + jnp.sum(
            jnp.where(r_ids == c_ids, z, 0.0), axis=1, keepdims=True)

    @pl.when(j == last_j)
    def _finalize():
        m = m_ref[...]
        zd = zd_ref[...]
        denom = l_ref[...] - jnp.exp(zd - m)          # drop self-contrast
        if num_pad_cols:                               # statically elided when N % tile == 0
            # Padded feature rows are exactly zero -> padded-column logits are
            # exactly 0, so their exp-sum contribution is num_pad * exp(-m).
            denom = denom - float(num_pad_cols) * jnp.exp(-m)
        s = s_ref[...] - zd                            # a label always matches itself
        cnt = cnt_ref[...]                             # precomputed positives (excl. self)
        cnt_safe = jnp.where(cnt < 0.5, 1.0, cnt)
        # fused: sum_j mask*log_prob = s - cnt*m - cnt*log(denom + 1e-8)
        mean_log_prob_pos = (s - cnt * (m + jnp.log(denom + 1e-8))) / cnt_safe
        # NOTE: output kept as a (TM, 1) column; writeback happens only once
        # per row tile at finalize so the masked-store cost is negligible.
        out_ref[...] = (loss_scale * mean_log_prob_pos).astype(out_ref.dtype)


def supcon_loss(features, labels, temperature=0.07, contrast_mode='all',
                base_temperature=0.07, block_m=512, block_n=256,
                stream_dtype=None):
    """Pallas TPU SupConLoss.forward (contrast_mode='all').

    block_m / block_n: anchor-row / contrast-column tile sizes (multiples of
    128; clamped for small N).  Larger block_m cuts contrast-side HBM
    re-streaming; sweep 256-512.
    stream_dtype: optionally cast the streamed features (e.g. jnp.bfloat16 on
    v5e/v6e); the matmul still accumulates in f32.
    """
    if features.ndim != 2:
        raise ValueError('`features` must be 2D [num_nodes, embedding_dim]')
    n, d = features.shape
    if labels.ndim != 1 or labels.shape[0] != n:
        raise ValueError('`labels` must be 1D [num_nodes]')
    if contrast_mode != 'all':
        # TODO(synk): contrast_mode='one' (anchor = first half) not implemented.
        raise ValueError('only contrast_mode="all" is implemented')
    if block_m % 128 or block_n % 128:
        raise ValueError('block_m / block_n must be multiples of 128')

    inv_temp = 1.0 / float(temperature)
    loss_scale = -(float(temperature) / float(base_temperature))

    # ---- O(N log N) label preprocessing (hoisted out of the O(N^2) sweep) ----
    # Dense non-negative label ids (equality-preserving) so the pad label (-1)
    # cannot collide with any real label, plus per-anchor positive counts.
    lab32 = labels.astype(jnp.int32)
    sorted_lab = jnp.sort(lab32)
    dense_id = jnp.searchsorted(sorted_lab, lab32, side='left').astype(jnp.int32)
    n_same = (jnp.searchsorted(sorted_lab, lab32, side='right').astype(jnp.int32)
              - dense_id)
    pos_cnt = (n_same - 1).astype(jnp.float32)         # positives excluding self

    # ---- tile sizes & padding ----
    n128 = 128 * int(pl.cdiv(n, 128))
    tm = min(block_m, n128)
    tn = min(block_n, n128, tm)
    step = (tm * tn) // math.gcd(tm, tn)               # n_pad must divide both tiles
    n_pad = step * int(pl.cdiv(n, step))

    dtype = jnp.dtype(stream_dtype) if stream_dtype is not None else features.dtype
    sub = max(8, 32 // jnp.dtype(dtype).itemsize)      # sublane multiple only (not 128)
    d_pad = sub * int(pl.cdiv(d, sub))

    feats_f32 = features.astype(jnp.float32)
    if n_pad != n or d_pad != d:
        feats_f32 = jnp.pad(feats_f32, ((0, n_pad - n), (0, d_pad - d)))
    feats = feats_f32.astype(dtype)
    # Fold 1/temperature into the streamed contrast operand (once, fused here).
    featsT = (feats_f32.T * inv_temp).astype(dtype)

    lab = dense_id
    cnt = pos_cnt
    if n_pad != n:
        lab = jnp.pad(lab, (0, n_pad - n), constant_values=-1)
        cnt = jnp.pad(cnt, (0, n_pad - n), constant_values=1.0)
    lab_col = lab.reshape(n_pad, 1)          # anchor labels, (N,1) view
    lab_row = lab.reshape(1, n_pad)          # contrast labels, (1,N) view
    cnt_col = cnt.reshape(n_pad, 1)

    grid = (n_pad // tm, n_pad // tn)
    kernel = functools.partial(
        _supcon_kernel, loss_scale=loss_scale, num_pad_cols=n_pad - n,
        tm=tm, tn=tn)

    per_anchor = pl.pallas_call(
        kernel,
        out_shape=jax.ShapeDtypeStruct((n_pad, 1), jnp.float32),
        grid_spec=pltpu.PrefetchScalarGridSpec(
            num_scalar_prefetch=0,
            grid=grid,
            in_specs=[
                pl.BlockSpec((tm, d_pad), lambda i, j: (i, 0)),   # anchor rows
                pl.BlockSpec((d_pad, tn), lambda i, j: (0, j)),   # contrast cols (pre-T, pre-scaled)
                pl.BlockSpec((tm, 1), lambda i, j: (i, 0)),       # anchor labels
                pl.BlockSpec((1, tn), lambda i, j: (0, j)),       # contrast labels
                pl.BlockSpec((tm, 1), lambda i, j: (i, 0)),       # positive counts
            ],
            out_specs=pl.BlockSpec((tm, 1), lambda i, j: (i, 0)),
            scratch_shapes=[pltpu.VMEM((tm, 1), jnp.float32) for _ in range(4)],
        ),
        compiler_params=pltpu.CompilerParams(
            # Row axis shardable across TensorCores (swap in pltpu.CORE_PARALLEL
            # on v7x); column axis is the softmax reduction.
            dimension_semantics=("parallel", "arbitrary"),
            vmem_limit_bytes=48 * 1024 * 1024,
        ),
    )(feats, featsT, lab_col, lab_row, cnt_col)

    # tiny epilogue: mean over the true anchors only (padded rows excluded)
    return jnp.sum(per_anchor[:n, 0]) / n


def _reference_loss(features, labels, temperature=0.07, base_temperature=0.07):
    """Pure-JAX reference mirroring the PyTorch forward (contrast_mode='all')."""
    n = features.shape[0]
    labels = labels.reshape(-1, 1)
    mask = (labels == labels.T).astype(jnp.float32)
    logits = (features @ features.T) / temperature
    logits = logits - jnp.max(logits, axis=1, keepdims=True)
    logits_mask = 1.0 - jnp.eye(n, dtype=jnp.float32)
    mask = mask * logits_mask
    exp_logits = jnp.exp(logits) * logits_mask
    log_prob = logits - jnp.log(exp_logits.sum(1, keepdims=True) + 1e-8)
    mpp = mask.sum(1)
    mpp = jnp.where(mpp < 1e-6, jnp.ones_like(mpp), mpp)
    mean_log_prob_pos = (mask * log_prob).sum(1) / mpp
    loss = -(temperature / base_temperature) * mean_log_prob_pos
    return loss.mean()


if __name__ == "__main__":
    key = jax.random.PRNGKey(0)
    kf, kl = jax.random.split(key)
    # Small but non-trivial: 200 nodes pad to 256 with a 256x256 tile,
    # exercising online accumulation, diagonal gating, the analytic
    # padded-column correction and the precomputed positive counts.
    num_nodes, embed_dim = 200, 64
    features = jax.random.normal(kf, (num_nodes, embed_dim), dtype=jnp.float32)
    features = features / jnp.linalg.norm(features, axis=1, keepdims=True)
    labels = jax.random.randint(kl, (num_nodes,), 0, 5, dtype=jnp.int32)

    loss = supcon_loss(features, labels)
    jax.block_until_ready(loss)

    ref = _reference_loss(features, labels)
    assert jnp.allclose(loss, ref, atol=1e-3, rtol=1e-3), (loss, ref)
    print("KERNEL_OK")
</pallas_src>

<mosaic_0001>
module attributes {stable_mosaic.version = 11 : i64} {
  func.func @_supcon_kernel(%arg0: i32, %arg1: i32, %arg2: memref<256x64xf32, #tpu.memory_space<vmem>>, %arg3: memref<64x256xf32, #tpu.memory_space<vmem>>, %arg4: memref<256x1xi32, #tpu.memory_space<vmem>>, %arg5: memref<1x256xi32, #tpu.memory_space<vmem>>, %arg6: memref<256x1xf32, #tpu.memory_space<vmem>>, %arg7: memref<256x1xf32, #tpu.memory_space<vmem>>, %arg8: memref<256x1xf32, #tpu.memory_space<vmem>>, %arg9: memref<256x1xf32, #tpu.memory_space<vmem>>, %arg10: memref<256x1xf32, #tpu.memory_space<vmem>>, %arg11: memref<256x1xf32, #tpu.memory_space<vmem>>) attributes {dimension_semantics = [#tpu.dimension_semantics<parallel>, #tpu.dimension_semantics<arbitrary>], iteration_bounds = array<i64: 1, 1>, scalar_prefetch = 0 : i64, scratch_operands = 4 : i64, tpu.core_type = #tpu.core_type<tc>, window_params = [{transform_indices = @transform_0, window_bounds = array<i64: 256, 64>}, {transform_indices = @transform_1, window_bounds = array<i64: 64, 256>}, {transform_indices = @transform_2, window_bounds = array<i64: 256, 1>}, {transform_indices = @transform_3, window_bounds = array<i64: 1, 256>}, {transform_indices = @transform_4, window_bounds = array<i64: 256, 1>}, {transform_indices = @transform_5, window_bounds = array<i64: 256, 1>}]} {
    %c0_i32 = arith.constant 0 : i32
    %0 = arith.cmpi eq, %arg1, %c0_i32 : i32
    %1 = arith.extui %0 : i1 to i32
    %c0_i32_0 = arith.constant 0 : i32
    %2 = arith.cmpi ne, %1, %c0_i32_0 : i32
    scf.if %2 {
      %cst_29 = arith.constant -1.000000e+30 : f32
      %47 = vector.broadcast %cst_29 : f32 to vector<256x1xf32>
      %c0_30 = arith.constant 0 : index
      %c0_31 = arith.constant 0 : index
      %48 = vector.load %arg8[%c0_30, %c0_31] : memref<256x1xf32, #tpu.memory_space<vmem>>, vector<256x1xf32>
      tpu.vector_store %arg8[%c0_30, %c0_31], %47 {strides = array<i32>} : memref<256x1xf32, #tpu.memory_space<vmem>>, vector<256x1xf32>,
      %cst_32 = arith.constant 0.000000e+00 : f32
      %49 = vector.broadcast %cst_32 : f32 to vector<256x1xf32>
      %c0_33 = arith.constant 0 : index
      %c0_34 = arith.constant 0 : index
      %50 = vector.load %arg9[%c0_33, %c0_34] : memref<256x1xf32, #tpu.memory_space<vmem>>, vector<256x1xf32>
      tpu.vector_store %arg9[%c0_33, %c0_34], %49 {strides = array<i32>} : memref<256x1xf32, #tpu.memory_space<vmem>>, vector<256x1xf32>,
      %cst_35 = arith.constant 0.000000e+00 : f32
      %51 = vector.broadcast %cst_35 : f32 to vector<256x1xf32>
      %c0_36 = arith.constant 0 : index
      %c0_37 = arith.constant 0 : index
      %52 = vector.load %arg10[%c0_36, %c0_37] : memref<256x1xf32, #tpu.memory_space<vmem>>, vector<256x1xf32>
      tpu.vector_store %arg10[%c0_36, %c0_37], %51 {strides = array<i32>} : memref<256x1xf32, #tpu.memory_space<vmem>>, vector<256x1xf32>,
      %cst_38 = arith.constant 0.000000e+00 : f32
      %53 = vector.broadcast %cst_38 : f32 to vector<256x1xf32>
      %c0_39 = arith.constant 0 : index
      %c0_40 = arith.constant 0 : index
      %54 = vector.load %arg11[%c0_39, %c0_40] : memref<256x1xf32, #tpu.memory_space<vmem>>, vector<256x1xf32>
      tpu.vector_store %arg11[%c0_39, %c0_40], %53 {strides = array<i32>} : memref<256x1xf32, #tpu.memory_space<vmem>>, vector<256x1xf32>,
    } else {
    }
    %c0 = arith.constant 0 : index
    %c0_1 = arith.constant 0 : index
    %3 = vector.load %arg2[%c0, %c0_1] : memref<256x64xf32, #tpu.memory_space<vmem>>, vector<256x64xf32>
    %c0_2 = arith.constant 0 : index
    %c0_3 = arith.constant 0 : index
    %4 = vector.load %arg3[%c0_2, %c0_3] : memref<64x256xf32, #tpu.memory_space<vmem>>, vector<64x256xf32>
    %cst = arith.constant dense<0.000000e+00> : vector<256x256xf32>
    %5 = tpu.matmul %3, %4, %cst {dimension_numbers = #tpu.dot_dimension_numbers<[1], [0], [0], [1], [0, 0, 1, 1], [], []>} : vector<256x64xf32>, vector<64x256xf32>, vector<256x256xf32> -> vector<256x256xf32>
    %c0_4 = arith.constant 0 : index
    %c0_5 = arith.constant 0 : index
    %6 = vector.load %arg4[%c0_4, %c0_5] : memref<256x1xi32, #tpu.memory_space<vmem>>, vector<256x1xi32>
    %c0_6 = arith.constant 0 : index
    %c0_7 = arith.constant 0 : index
    %7 = vector.load %arg5[%c0_6, %c0_7] : memref<1x256xi32, #tpu.memory_space<vmem>>, vector<1x256xi32>
    %8 = vector.broadcast %6 : vector<256x1xi32> to vector<256x256xi32>
    %9 = vector.broadcast %7 : vector<1x256xi32> to vector<256x256xi32>
    %10 = arith.cmpi eq, %8, %9 : vector<256x256xi32>
    %11 = arith.extui %10 : vector<256x256xi1> to vector<256x256xi32>
    %12 = arith.sitofp %11 : vector<256x256xi32> to vector<256x256xf32>
    %c0_8 = arith.constant 0 : index
    %c0_9 = arith.constant 0 : index
    %13 = vector.load %arg8[%c0_8, %c0_9] : memref<256x1xf32, #tpu.memory_space<vmem>>, vector<256x1xf32>
    %cst_10 = arith.constant dense<0xFF800000> : vector<256xf32>
    %14 = vector.multi_reduction <maximumf>, %5, %cst_10 [1] : vector<256x256xf32> to vector<256xf32>
    %15 = vector.shape_cast %14 : vector<256xf32> to vector<256x1xf32>
    %16 = arith.maximumf %13, %15 : vector<256x1xf32>
    %17 = arith.subf %13, %16 : vector<256x1xf32>
    %18 = math.exp %17 : vector<256x1xf32>
    %19 = vector.broadcast %16 : vector<256x1xf32> to vector<256x256xf32>
    %20 = arith.subf %5, %19 : vector<256x256xf32>
    %21 = math.exp %20 : vector<256x256xf32>
    %c0_11 = arith.constant 0 : index
    %c0_12 = arith.constant 0 : index
    %22 = vector.load %arg9[%c0_11, %c0_12] : memref<256x1xf32, #tpu.memory_space<vmem>>, vector<256x1xf32>
    %23 = arith.mulf %18, %22 : vector<256x1xf32>
    %cst_13 = arith.constant dense<0.000000e+00> : vector<256xf32>
    %24 = vector.multi_reduction <add>, %21, %cst_13 [1] : vector<256x256xf32> to vector<256xf32>
    %25 = vector.shape_cast %24 : vector<256xf32> to vector<256x1xf32>
    %26 = arith.addf %23, %25 : vector<256x1xf32>
    %c0_14 = arith.constant 0 : index
    %c0_15 = arith.constant 0 : index
    %27 = vector.load %arg9[%c0_14, %c0_15] : memref<256x1xf32, #tpu.memory_space<vmem>>, vector<256x1xf32>
    tpu.vector_store %arg9[%c0_14, %c0_15], %26 {strides = array<i32>} : memref<256x1xf32, #tpu.memory_space<vmem>>, vector<256x1xf32>,
    %c0_16 = arith.constant 0 : index
    %c0_17 = arith.constant 0 : index
    %28 = vector.load %arg8[%c0_16, %c0_17] : memref<256x1xf32, #tpu.memory_space<vmem>>, vector<256x1xf32>
    tpu.vector_store %arg8[%c0_16, %c0_17], %16 {strides = array<i32>} : memref<256x1xf32, #tpu.memory_space<vmem>>, vector<256x1xf32>,
    %c0_18 = arith.constant 0 : index
    %c0_19 = arith.constant 0 : index
    %29 = vector.load %arg10[%c0_18, %c0_19] : memref<256x1xf32, #tpu.memory_space<vmem>>, vector<256x1xf32>
    %30 = arith.mulf %5, %12 : vector<256x256xf32>
    %cst_20 = arith.constant dense<0.000000e+00> : vector<256xf32>
    %31 = vector.multi_reduction <add>, %30, %cst_20 [1] : vector<256x256xf32> to vector<256xf32>
    %32 = vector.shape_cast %31 : vector<256xf32> to vector<256x1xf32>
    %33 = arith.addf %29, %32 : vector<256x1xf32>
    %c0_21 = arith.constant 0 : index
    %c0_22 = arith.constant 0 : index
    %34 = vector.load %arg10[%c0_21, %c0_22] : memref<256x1xf32, #tpu.memory_space<vmem>>, vector<256x1xf32>
    tpu.vector_store %arg10[%c0_21, %c0_22], %33 {strides = array<i32>} : memref<256x1xf32, #tpu.memory_space<vmem>>, vector<256x1xf32>,
    %c256_i32 = arith.constant 256 : i32
    %35 = arith.muli %arg0, %c256_i32 : i32
    %c256_i32_23 = arith.constant 256 : i32
    %36 = arith.muli %arg1, %c256_i32_23 : i32
    %c256_i32_24 = arith.constant 256 : i32
    %37 = arith.addi %36, %c256_i32_24 : i32
    %38 = arith.cmpi slt, %35, %37 : i32
    %c256_i32_25 = arith.constant 256 : i32
    %39 = arith.addi %35, %c256_i32_25 : i32
    %40 = arith.cmpi slt, %36, %39 : i32
    %41 = arith.andi %38, %40 : i1
    %42 = arith.extui %41 : i1 to i32
    %c0_i32_26 = arith.constant 0 : i32
    %43 = arith.cmpi ne, %42, %c0_i32_26 : i32
    scf.if %43 {
      %47 = tpu.iota {dimensions = array<i32: 0>} : vector<256x256xi32>
      %48 = vector.broadcast %35 : i32 to vector<256x256xi32>
      %49 = arith.addi %47, %48 : vector<256x256xi32>
      %50 = tpu.iota {dimensions = array<i32: 1>} : vector<256x256xi32>
      %51 = vector.broadcast %36 : i32 to vector<256x256xi32>
      %52 = arith.addi %50, %51 : vector<256x256xi32>
      %c0_29 = arith.constant 0 : index
      %c0_30 = arith.constant 0 : index
      %53 = vector.load %arg11[%c0_29, %c0_30] : memref<256x1xf32, #tpu.memory_space<vmem>>, vector<256x1xf32>
      %54 = arith.cmpi eq, %49, %52 : vector<256x256xi32>
      %cst_31 = arith.constant 0.000000e+00 : f32
      %55 = vector.broadcast %cst_31 : f32 to vector<256x256xf32>
      %56 = arith.select %54, %5, %55 : vector<256x256xi1>, vector<256x256xf32>
      %cst_32 = arith.constant dense<0.000000e+00> : vector<256xf32>
      %57 = vector.multi_reduction <add>, %56, %cst_32 [1] : vector<256x256xf32> to vector<256xf32>
      %58 = vector.shape_cast %57 : vector<256xf32> to vector<256x1xf32>
      %59 = arith.addf %53, %58 : vector<256x1xf32>
      %c0_33 = arith.constant 0 : index
      %c0_34 = arith.constant 0 : index
      %60 = vector.load %arg11[%c0_33, %c0_34] : memref<256x1xf32, #tpu.memory_space<vmem>>, vector<256x1xf32>
      tpu.vector_store %arg11[%c0_33, %c0_34], %59 {strides = array<i32>} : memref<256x1xf32, #tpu.memory_space<vmem>>, vector<256x1xf32>,
    } else {
    }
    %c0_i32_27 = arith.constant 0 : i32
    %44 = arith.cmpi eq, %arg1, %c0_i32_27 : i32
    %45 = arith.extui %44 : i1 to i32
    %c0_i32_28 = arith.constant 0 : i32
    %46 = arith.cmpi ne, %45, %c0_i32_28 : i32
    scf.if %46 {
      %c0_29 = arith.constant 0 : index
      %c0_30 = arith.constant 0 : index
      %47 = vector.load %arg8[%c0_29, %c0_30] : memref<256x1xf32, #tpu.memory_space<vmem>>, vector<256x1xf32>
      %c0_31 = arith.constant 0 : index
      %c0_32 = arith.constant 0 : index
      %48 = vector.load %arg11[%c0_31, %c0_32] : memref<256x1xf32, #tpu.memory_space<vmem>>, vector<256x1xf32>
      %c0_33 = arith.constant 0 : index
      %c0_34 = arith.constant 0 : index
      %49 = vector.load %arg9[%c0_33, %c0_34] : memref<256x1xf32, #tpu.memory_space<vmem>>, vector<256x1xf32>
      %50 = arith.subf %48, %47 : vector<256x1xf32>
      %51 = math.exp %50 : vector<256x1xf32>
      %52 = arith.subf %49, %51 : vector<256x1xf32>
      %cst_35 = arith.constant 0.000000e+00 : f32
      %53 = vector.broadcast %cst_35 : f32 to vector<256x1xf32>
      %54 = arith.subf %53, %47 : vector<256x1xf32>
      %55 = math.exp %54 : vector<256x1xf32>
      %cst_36 = arith.constant 5.600000e+01 : f32
      %56 = vector.broadcast %cst_36 : f32 to vector<256x1xf32>
      %57 = arith.mulf %56, %55 : vector<256x1xf32>
      %58 = arith.subf %52, %57 : vector<256x1xf32>
      %c0_37 = arith.constant 0 : index
      %c0_38 = arith.constant 0 : index
      %59 = vector.load %arg10[%c0_37, %c0_38] : memref<256x1xf32, #tpu.memory_space<vmem>>, vector<256x1xf32>
      %60 = arith.subf %59, %48 : vector<256x1xf32>
      %c0_39 = arith.constant 0 : index
      %c0_40 = arith.constant 0 : index
      %61 = vector.load %arg6[%c0_39, %c0_40] : memref<256x1xf32, #tpu.memory_space<vmem>>, vector<256x1xf32>
      %cst_41 = arith.constant 5.000000e-01 : f32
      %62 = vector.broadcast %cst_41 : f32 to vector<256x1xf32>
      %63 = arith.cmpf olt, %61, %62 : vector<256x1xf32>
      %cst_42 = arith.constant 1.000000e+00 : f32
      %64 = vector.broadcast %cst_42 : f32 to vector<256x1xf32>
      %65 = arith.select %63, %64, %61 : vector<256x1xi1>, vector<256x1xf32>
      %cst_43 = arith.constant 9.99999993E-9 : f32
      %66 = vector.broadcast %cst_43 : f32 to vector<256x1xf32>
      %67 = arith.addf %58, %66 : vector<256x1xf32>
      %68 = math.log %67 : vector<256x1xf32>
      %69 = arith.addf %47, %68 : vector<256x1xf32>
      %70 = arith.mulf %61, %69 : vector<256x1xf32>
      %71 = arith.subf %60, %70 : vector<256x1xf32>
      %72 = arith.divf %71, %65 : vector<256x1xf32>
      %cst_44 = arith.constant -1.000000e+00 : f32
      %73 = vector.broadcast %cst_44 : f32 to vector<256x1xf32>
      %74 = arith.mulf %73, %72 : vector<256x1xf32>
      %c0_45 = arith.constant 0 : index
      %c0_46 = arith.constant 0 : index
      %75 = vector.load %arg7[%c0_45, %c0_46] : memref<256x1xf32, #tpu.memory_space<vmem>>, vector<256x1xf32>
      tpu.vector_store %arg7[%c0_45, %c0_46], %74 {strides = array<i32>} : memref<256x1xf32, #tpu.memory_space<vmem>>, vector<256x1xf32>,
    } else {
    }
    return
  }
  func.func @transform_0(%arg0: i32, %arg1: i32) -> (i32, i32) {
    %c0_i32 = arith.constant 0 : i32
    %c0_i32_0 = arith.constant 0 : i32
    return %arg0, %c0_i32 : i32, i32
  }
  func.func @transform_1(%arg0: i32, %arg1: i32) -> (i32, i32) {
    %c0_i32 = arith.constant 0 : i32
    %c0_i32_0 = arith.constant 0 : i32
    return %c0_i32, %arg1 : i32, i32
  }
  func.func @transform_2(%arg0: i32, %arg1: i32) -> (i32, i32) {
    %c0_i32 = arith.constant 0 : i32
    %c0_i32_0 = arith.constant 0 : i32
    return %arg0, %c0_i32 : i32, i32
  }
  func.func @transform_3(%arg0: i32, %arg1: i32) -> (i32, i32) {
    %c0_i32 = arith.constant 0 : i32
    %c0_i32_0 = arith.constant 0 : i32
    return %c0_i32, %arg1 : i32, i32
  }
  func.func @transform_4(%arg0: i32, %arg1: i32) -> (i32, i32) {
    %c0_i32 = arith.constant 0 : i32
    %c0_i32_0 = arith.constant 0 : i32
    return %arg0, %c0_i32 : i32, i32
  }
  func.func @transform_5(%arg0: i32, %arg1: i32) -> (i32, i32) {
    %c0_i32 = arith.constant 0 : i32
    %c0_i32_0 = arith.constant 0 : i32
    return %arg0, %c0_i32 : i32, i32
  }
}

</mosaic_0001>

<llo_original>
// kernel: tpu_custom_call.1
$region0: #{tpu_custom_call.1}
  #allocation0 [shape = 'u32[]', space=smem, size = 0x4, offset = 0x4, fixed_abs, tag = 'smem constant byte address 0x4 - core index']
  #allocation1 [shape = 'u32[72,128]{1,0:T(1,128)}', space=vmem, size = 0x9000, scoped, tag = 'internal scratch']
  #allocation2 [shape = 'f32[256,1]{1,0:T(8,128)}', space=vmem, size = 0x20000, scoped, tag = 'scratch operand']
  #allocation3 [shape = 'f32[256,1]{1,0:T(8,128)}', space=vmem, size = 0x20000, scoped, tag = 'scratch operand']
  #allocation4 [shape = 'f32[256,1]{1,0:T(8,128)}', space=vmem, size = 0x20000, scoped, tag = 'scratch operand']
  #allocation5 [shape = 'f32[256,1]{1,0:T(8,128)}', space=vmem, size = 0x20000, scoped, tag = 'scratch operand']
  %s0 = inlined_call_operand.vmem [shape: f32[256,64], index: 0, kind: input, shape index: {}]
  %s1 = inlined_call_operand.vmem [shape: f32[64,256], index: 1, kind: input, shape index: {}]
  %s2 = inlined_call_operand.vmem [shape: s32[256,1], index: 2, kind: input, shape index: {}]
  %s3 = inlined_call_operand.vmem [shape: s32[1,256], index: 3, kind: input, shape index: {}]
  %s4 = inlined_call_operand.vmem [shape: f32[256,1], index: 4, kind: input, shape index: {}]
  %s5 = inlined_call_operand.vmem [shape: f32[256,1], index: 5, kind: output, shape index: {}]
  %s6 = sld [smem:[#allocation0]]
  $region42: #{tpu_custom_call.1} parent=0
    _
  %s8 = ssub.s32 1, %s6
  %s9 = scalar_select 0, %s8, %s6
  // Predicated region
  $region2: #{tpu_custom_call.1} parent=0 // pred_check
    _
  $region3: #{tpu_custom_call.1} parent=0 // pred_check_branch
    %11 = sbr.rel (0) target = $region5
  $region4: #{tpu_custom_call.1} parent=0 // pred_region
    _
  $region5: #{tpu_custom_call.1} parent=0 // pred_fallthru
    _
  // Predicated region
  $region6: #{tpu_custom_call.1} parent=0 // pred_check
    _
  $region7: #{tpu_custom_call.1} parent=0 // pred_check_branch
    %13 = sbr.rel (0) target = $region9
  $region8: #{tpu_custom_call.1} parent=0 // pred_region
    _
  $region9: #{tpu_custom_call.1} parent=0 // pred_fallthru
    _
  // Predicated region
  $region10: #{tpu_custom_call.1} parent=0 // pred_check
    _
  $region11: #{tpu_custom_call.1} parent=0 // pred_check_branch
    %15 = sbr.rel (0) target = $region13
  $region12: #{tpu_custom_call.1} parent=0 // pred_region
    _
  $region13: #{tpu_custom_call.1} parent=0 // pred_fallthru
    _
  // Predicated region
  $region14: #{tpu_custom_call.1} parent=0 // pred_check
    _
  $region15: #{tpu_custom_call.1} parent=0 // pred_check_branch
    %17 = sbr.rel (0) target = $region17
  $region16: #{tpu_custom_call.1} parent=0 // pred_region
    _
  $region17: #{tpu_custom_call.1} parent=0 // pred_fallthru
    _
  // Predicated region
  $region18: #{tpu_custom_call.1} parent=0 // pred_check
    _
  $region19: #{tpu_custom_call.1} parent=0 // pred_check_branch
    %19 = sbr.rel (0) target = $region21
  $region20: #{tpu_custom_call.1} parent=0 // pred_region
    _
  $region21: #{tpu_custom_call.1} parent=0 // pred_fallthru
    _
  %p20 = scmp.eq.s32.totalorder 0, 0
  // Predicated region
  $region22: #{tpu_custom_call.1} parent=0 // pred_check
    %p21 = pneg %p20
  $region23: #{tpu_custom_call.1} parent=0 // pred_check_branch
    %23 = sbr.rel (%p21) target = $region25
  $region24: #{tpu_custom_call.1} parent=0 // pred_region
    %vm24 = vcmask 7168
    %25 = vst.msk [vmem:[#allocation2] sm:$0xff] %vm24, -1e+30
    %26 = vst.msk [vmem:[#allocation2 + $0x8] sm:$0xff] %vm24, -1e+30
    %27 = vst.msk [vmem:[#allocation2 + $0x10] sm:$0xff] %vm24, -1e+30
    %28 = vst.msk [vmem:[#allocation2 + $0x18] sm:$0xff] %vm24, -1e+30
    %29 = vst.msk [vmem:[#allocation2 + $0x20] sm:$0xff] %vm24, -1e+30
    %30 = vst.msk [vmem:[#allocation2 + $0x28] sm:$0xff] %vm24, -1e+30
    %31 = vst.msk [vmem:[#allocation2 + $0x30] sm:$0xff] %vm24, -1e+30
    %32 = vst.msk [vmem:[#allocation2 + $0x38] sm:$0xff] %vm24, -1e+30
    %33 = vst.msk [vmem:[#allocation2 + $0x40] sm:$0xff] %vm24, -1e+30
    %34 = vst.msk [vmem:[#allocation2 + $0x48] sm:$0xff] %vm24, -1e+30
    %35 = vst.msk [vmem:[#allocation2 + $0x50] sm:$0xff] %vm24, -1e+30
    %36 = vst.msk [vmem:[#allocation2 + $0x58] sm:$0xff] %vm24, -1e+30
    %37 = vst.msk [vmem:[#allocation2 + $0x60] sm:$0xff] %vm24, -1e+30
    %38 = vst.msk [vmem:[#allocation2 + $0x68] sm:$0xff] %vm24, -1e+30
    %39 = vst.msk [vmem:[#allocation2 + $0x70] sm:$0xff] %vm24, -1e+30
    %40 = vst.msk [vmem:[#allocation2 + $0x78] sm:$0xff] %vm24, -1e+30
    %41 = vst.msk [vmem:[#allocation2 + $0x80] sm:$0xff] %vm24, -1e+30
    %42 = vst.msk [vmem:[#allocation2 + $0x88] sm:$0xff] %vm24, -1e+30
    %43 = vst.msk [vmem:[#allocation2 + $0x90] sm:$0xff] %vm24, -1e+30
    %44 = vst.msk [vmem:[#allocation2 + $0x98] sm:$0xff] %vm24, -1e+30
    %45 = vst.msk [vmem:[#allocation2 + $0xa0] sm:$0xff] %vm24, -1e+30
    %46 = vst.msk [vmem:[#allocation2 + $0xa8] sm:$0xff] %vm24, -1e+30
    %47 = vst.msk [vmem:[#allocation2 + $0xb0] sm:$0xff] %vm24, -1e+30
    %48 = vst.msk [vmem:[#allocation2 + $0xb8] sm:$0xff] %vm24, -1e+30
    %49 = vst.msk [vmem:[#allocation2 + $0xc0] sm:$0xff] %vm24, -1e+30
    %50 = vst.msk [vmem:[#allocation2 + $0xc8] sm:$0xff] %vm24, -1e+30
    %51 = vst.msk [vmem:[#allocation2 + $0xd0] sm:$0xff] %vm24, -1e+30
    %52 = vst.msk [vmem:[#allocation2 + $0xd8] sm:$0xff] %vm24, -1e+30
    %53 = vst.msk [vmem:[#allocation2 + $0xe0] sm:$0xff] %vm24, -1e+30
    %54 = vst.msk [vmem:[#allocation2 + $0xe8] sm:$0xff] %vm24, -1e+30
    %55 = vst.msk [vmem:[#allocation2 + $0xf0] sm:$0xff] %vm24, -1e+30
    %56 = vst.msk [vmem:[#allocation2 + $0xf8] sm:$0xff] %vm24, -1e+30
    %57 = vst.msk [vmem:[#allocation3] sm:$0xff] %vm24, 0.0
    %58 = vst.msk [vmem:[#allocation3 + $0x8] sm:$0xff] %vm24, 0.0
    %59 = vst.msk [vmem:[#allocation3 + $0x10] sm:$0xff] %vm24, 0.0
    %60 = vst.msk [vmem:[#allocation3 + $0x18] sm:$0xff] %vm24, 0.0
    %61 = vst.msk [vmem:[#allocation3 + $0x20] sm:$0xff] %vm24, 0.0
    %62 = vst.msk [vmem:[#allocation3 + $0x28] sm:$0xff] %vm24, 0.0
    %63 = vst.msk [vmem:[#allocation3 + $0x30] sm:$0xff] %vm24, 0.0
    %64 = vst.msk [vmem:[#allocation3 + $0x38] sm:$0xff] %vm24, 0.0
    %65 = vst.msk [vmem:[#allocation3 + $0x40] sm:$0xff] %vm24, 0.0
    %66 = vst.msk [vmem:[#allocation3 + $0x48] sm:$0xff] %vm24, 0.0
    %67 = vst.msk [vmem:[#allocation3 + $0x50] sm:$0xff] %vm24, 0.0
    %68 = vst.msk [vmem:[#allocation3 + $0x58] sm:$0xff] %vm24, 0.0
    %69 = vst.msk [vmem:[#allocation3 + $0x60] sm:$0xff] %vm24, 0.0
    %70 = vst.msk [vmem:[#allocation3 + $0x68] sm:$0xff] %vm24, 0.0
    %71 = vst.msk [vmem:[#allocation3 + $0x70] sm:$0xff] %vm24, 0.0
    %72 = vst.msk [vmem:[#allocation3 + $0x78] sm:$0xff] %vm24, 0.0
    %73 = vst.msk [vmem:[#allocation3 + $0x80] sm:$0xff] %vm24, 0.0
    %74 = vst.msk [vmem:[#allocation3 + $0x88] sm:$0xff] %vm24, 0.0
    %75 = vst.msk [vmem:[#allocation3 + $0x90] sm:$0xff] %vm24, 0.0
    %76 = vst.msk [vmem:[#allocation3 + $0x98] sm:$0xff] %vm24, 0.0
    %77 = vst.msk [vmem:[#allocation3 + $0xa0] sm:$0xff] %vm24, 0.0
    %78 = vst.msk [vmem:[#allocation3 + $0xa8] sm:$0xff] %vm24, 0.0
    %79 = vst.msk [vmem:[#allocation3 + $0xb0] sm:$0xff] %vm24, 0.0
    %80 = vst.msk [vmem:[#allocation3 + $0xb8] sm:$0xff] %vm24, 0.0
    %81 = vst.msk [vmem:[#allocation3 + $0xc0] sm:$0xff] %vm24, 0.0
    %82 = vst.msk [vmem:[#allocation3 + $0xc8] sm:$0xff] %vm24, 0.0
    %83 = vst.msk [vmem:[#allocation3 + $0xd0] sm:$0xff] %vm24, 0.0
    %84 = vst.msk [vmem:[#allocation3 + $0xd8] sm:$0xff] %vm24, 0.0
    %85 = vst.msk [vmem:[#allocation3 + $0xe0] sm:$0xff] %vm24, 0.0
    %86 = vst.msk [vmem:[#allocation3 + $0xe8] sm:$0xff] %vm24, 0.0
    %87 = vst.msk [vmem:[#allocation3 + $0xf0] sm:$0xff] %vm24, 0.0
    %88 = vst.msk [vmem:[#allocation3 + $0xf8] sm:$0xff] %vm24, 0.0
    %89 = vst.msk [vmem:[#allocation4] sm:$0xff] %vm24, 0.0
    %90 = vst.msk [vmem:[#allocation4 + $0x8] sm:$0xff] %vm24, 0.0
    %91 = vst.msk [vmem:[#allocation4 + $0x10] sm:$0xff] %vm24, 0.0
    %92 = vst.msk [vmem:[#allocation4 + $0x18] sm:$0xff] %vm24, 0.0
    %93 = vst.msk [vmem:[#allocation4 + $0x20] sm:$0xff] %vm24, 0.0
    %94 = vst.msk [vmem:[#allocation4 + $0x28] sm:$0xff] %vm24, 0.0
    %95 = vst.msk [vmem:[#allocation4 + $0x30] sm:$0xff] %vm24, 0.0
    %96 = vst.msk [vmem:[#allocation4 + $0x38] sm:$0xff] %vm24, 0.0
    %97 = vst.msk [vmem:[#allocation4 + $0x40] sm:$0xff] %vm24, 0.0
    %98 = vst.msk [vmem:[#allocation4 + $0x48] sm:$0xff] %vm24, 0.0
    %99 = vst.msk [vmem:[#allocation4 + $0x50] sm:$0xff] %vm24, 0.0
    %100 = vst.msk [vmem:[#allocation4 + $0x58] sm:$0xff] %vm24, 0.0
    %101 = vst.msk [vmem:[#allocation4 + $0x60] sm:$0xff] %vm24, 0.0
    %102 = vst.msk [vmem:[#allocation4 + $0x68] sm:$0xff] %vm24, 0.0
    %103 = vst.msk [vmem:[#allocation4 + $0x70] sm:$0xff] %vm24, 0.0
    %104 = vst.msk [vmem:[#allocation4 + $0x78] sm:$0xff] %vm24, 0.0
    %105 = vst.msk [vmem:[#allocation4 + $0x80] sm:$0xff] %vm24, 0.0
    %106 = vst.msk [vmem:[#allocation4 + $0x88] sm:$0xff] %vm24, 0.0
    %107 = vst.msk [vmem:[#allocation4 + $0x90] sm:$0xff] %vm24, 0.0
    %108 = vst.msk [vmem:[#allocation4 + $0x98] sm:$0xff] %vm24, 0.0
    %109 = vst.msk [vmem:[#allocation4 + $0xa0] sm:$0xff] %vm24, 0.0
    %110 = vst.msk [vmem:[#allocation4 + $0xa8] sm:$0xff] %vm24, 0.0
    %111 = vst.msk [vmem:[#allocation4 + $0xb0] sm:$0xff] %vm24, 0.0
    %112 = vst.msk [vmem:[#allocation4 + $0xb8] sm:$0xff] %vm24, 0.0
    %113 = vst.msk [vmem:[#allocation4 + $0xc0] sm:$0xff] %vm24, 0.0
    %114 = vst.msk [vmem:[#allocation4 + $0xc8] sm:$0xff] %vm24, 0.0
    %115 = vst.msk [vmem:[#allocation4 + $0xd0] sm:$0xff] %vm24, 0.0
    %116 = vst.msk [vmem:[#allocation4 + $0xd8] sm:$0xff] %vm24, 0.0
    %117 = vst.msk [vmem:[#allocation4 + $0xe0] sm:$0xff] %vm24, 0.0
    %118 = vst.msk [vmem:[#allocation4 + $0xe8] sm:$0xff] %vm24, 0.0
    %119 = vst.msk [vmem:[#allocation4 + $0xf0] sm:$0xff] %vm24, 0.0
    %120 = vst.msk [vmem:[#allocation4 + $0xf8] sm:$0xff] %vm24, 0.0
    %121 = vst.msk [vmem:[#allocation5] sm:$0xff] %vm24, 0.0
    %122 = vst.msk [vmem:[#allocation5 + $0x8] sm:$0xff] %vm24, 0.0
    %123 = vst.msk [vmem:[#allocation5 + $0x10] sm:$0xff] %vm24, 0.0
    %124 = vst.msk [vmem:[#allocation5 + $0x18] sm:$0xff] %vm24, 0.0
    %125 = vst.msk [vmem:[#allocation5 + $0x20] sm:$0xff] %vm24, 0.0
    %126 = vst.msk [vmem:[#allocation5 + $0x28] sm:$0xff] %vm24, 0.0
    %127 = vst.msk [vmem:[#allocation5 + $0x30] sm:$0xff] %vm24, 0.0
    %128 = vst.msk [vmem:[#allocation5 + $0x38] sm:$0xff] %vm24, 0.0
    %129 = vst.msk [vmem:[#allocation5 + $0x40] sm:$0xff] %vm24, 0.0
    %130 = vst.msk [vmem:[#allocation5 + $0x48] sm:$0xff] %vm24, 0.0
    %131 = vst.msk [vmem:[#allocation5 + $0x50] sm:$0xff] %vm24, 0.0
    %132 = vst.msk [vmem:[#allocation5 + $0x58] sm:$0xff] %vm24, 0.0
    %133 = vst.msk [vmem:[#allocation5 + $0x60] sm:$0xff] %vm24, 0.0
    %134 = vst.msk [vmem:[#allocation5 + $0x68] sm:$0xff] %vm24, 0.0
    %135 = vst.msk [vmem:[#allocation5 + $0x70] sm:$0xff] %vm24, 0.0
    %136 = vst.msk [vmem:[#allocation5 + $0x78] sm:$0xff] %vm24, 0.0
    %137 = vst.msk [vmem:[#allocation5 + $0x80] sm:$0xff] %vm24, 0.0
    %138 = vst.msk [vmem:[#allocation5 + $0x88] sm:$0xff] %vm24, 0.0
    %139 = vst.msk [vmem:[#allocation5 + $0x90] sm:$0xff] %vm24, 0.0
    %140 = vst.msk [vmem:[#allocation5 + $0x98] sm:$0xff] %vm24, 0.0
    %141 = vst.msk [vmem:[#allocation5 + $0xa0] sm:$0xff] %vm24, 0.0
    %142 = vst.msk [vmem:[#allocation5 + $0xa8] sm:$0xff] %vm24, 0.0
    %143 = vst.msk [vmem:[#allocation5 + $0xb0] sm:$0xff] %vm24, 0.0
    %144 = vst.msk [vmem:[#allocation5 + $0xb8] sm:$0xff] %vm24, 0.0
    %145 = vst.msk [vmem:[#allocation5 + $0xc0] sm:$0xff] %vm24, 0.0
    %146 = vst.msk [vmem:[#allocation5 + $0xc8] sm:$0xff] %vm24, 0.0
    %147 = vst.msk [vmem:[#allocation5 + $0xd0] sm:$0xff] %vm24, 0.0
    %148 = vst.msk [vmem:[#allocation5 + $0xd8] sm:$0xff] %vm24, 0.0
    %149 = vst.msk [vmem:[#allocation5 + $0xe0] sm:$0xff] %vm24, 0.0
    %150 = vst.msk [vmem:[#allocation5 + $0xe8] sm:$0xff] %vm24, 0.0
    %151 = vst.msk [vmem:[#allocation5 + $0xf0] sm:$0xff] %vm24, 0.0
    %152 = vst.msk [vmem:[#allocation5 + $0xf8] sm:$0xff] %vm24, 0.0
  $region25: #{tpu_custom_call.1} parent=0 // pred_fallthru
    _
  %v153 = vld [vmem:[%s0] sm:$0xff]
  %v154 = vld [vmem:[%s0 + $0x8] sm:$0xff]
  %v155 = vld [vmem:[%s0 + $0x10] sm:$0xff]
  %v156 = vld [vmem:[%s0 + $0x18] sm:$0xff]
  %v157 = vld [vmem:[%s0 + $0x20] sm:$0xff]
  %v158 = vld [vmem:[%s0 + $0x28] sm:$0xff]
  %v159 = vld [vmem:[%s0 + $0x30] sm:$0xff]
  %v160 = vld [vmem:[%s0 + $0x38] sm:$0xff]
  %v161 = vld [vmem:[%s0 + $0x40] sm:$0xff]
  %v162 = vld [vmem:[%s0 + $0x48] sm:$0xff]
  %v163 = vld [vmem:[%s0 + $0x50] sm:$0xff]
  %v164 = vld [vmem:[%s0 + $0x58] sm:$0xff]
  %v165 = vld [vmem:[%s0 + $0x60] sm:$0xff]
  %v166 = vld [vmem:[%s0 + $0x68] sm:$0xff]
  %v167 = vld [vmem:[%s0 + $0x70] sm:$0xff]
  %v168 = vld [vmem:[%s0 + $0x78] sm:$0xff]
  %v169 = vld [vmem:[%s0 + $0x80] sm:$0xff]
  %v170 = vld [vmem:[%s0 + $0x88] sm:$0xff]
  %v171 = vld [vmem:[%s0 + $0x90] sm:$0xff]
  %v172 = vld [vmem:[%s0 + $0x98] sm:$0xff]
  %v173 = vld [vmem:[%s0 + $0xa0] sm:$0xff]
  %v174 = vld [vmem:[%s0 + $0xa8] sm:$0xff]
  %v175 = vld [vmem:[%s0 + $0xb0] sm:$0xff]
  %v176 = vld [vmem:[%s0 + $0xb8] sm:$0xff]
  %v177 = vld [vmem:[%s0 + $0xc0] sm:$0xff]
  %v178 = vld [vmem:[%s0 + $0xc8] sm:$0xff]
  %v179 = vld [vmem:[%s0 + $0xd0] sm:$0xff]
  %v180 = vld [vmem:[%s0 + $0xd8] sm:$0xff]
  %v181 = vld [vmem:[%s0 + $0xe0] sm:$0xff]
  %v182 = vld [vmem:[%s0 + $0xe8] sm:$0xff]
  %v183 = vld [vmem:[%s0 + $0xf0] sm:$0xff]
  %v184 = vld [vmem:[%s0 + $0xf8] sm:$0xff]
  %v185 = vld [vmem:[%s1] sm:$0xff]
  %v186 = vld [vmem:[%s1 + $0x8] sm:$0xff]
  %v187 = vld [vmem:[%s1 + $0x10] sm:$0xff]
  %v188 = vld [vmem:[%s1 + $0x18] sm:$0xff]
  %v189 = vld [vmem:[%s1 + $0x20] sm:$0xff]
  %v190 = vld [vmem:[%s1 + $0x28] sm:$0xff]
  %v191 = vld [vmem:[%s1 + $0x30] sm:$0xff]
  %v192 = vld [vmem:[%s1 + $0x38] sm:$0xff]
  %v193 = vld [vmem:[%s1 + $0x40] sm:$0xff]
  %v194 = vld [vmem:[%s1 + $0x48] sm:$0xff]
  %v195 = vld [vmem:[%s1 + $0x50] sm:$0xff]
  %v196 = vld [vmem:[%s1 + $0x58] sm:$0xff]
  %v197 = vld [vmem:[%s1 + $0x60] sm:$0xff]
  %v198 = vld [vmem:[%s1 + $0x68] sm:$0xff]
  %v199 = vld [vmem:[%s1 + $0x70] sm:$0xff]
  %v200 = vld [vmem:[%s1 + $0x78] sm:$0xff]
  %vm201 = vcmask 523264
  %v203 = vsel %vm201, %v153, 0
  %v206 = vsel %vm201, %v154, 0
  %v209 = vsel %vm201, %v155, 0
  %v212 = vsel %vm201, %v156, 0
  %v215 = vsel %vm201, %v157, 0
  %v218 = vsel %vm201, %v158, 0
  %v221 = vsel %vm201, %v159, 0
  %v224 = vsel %vm201, %v160, 0
  %v227 = vsel %vm201, %v161, 0
  %v230 = vsel %vm201, %v162, 0
  %v233 = vsel %vm201, %v163, 0
  %v236 = vsel %vm201, %v164, 0
  %v239 = vsel %vm201, %v165, 0
  %v242 = vsel %vm201, %v166, 0
  %v245 = vsel %vm201, %v167, 0
  %v248 = vsel %vm201, %v168, 0
  %v251 = vsel %vm201, %v169, 0
  %v254 = vsel %vm201, %v170, 0
  %v257 = vsel %vm201, %v171, 0
  %v260 = vsel %vm201, %v172, 0
  %v263 = vsel %vm201, %v173, 0
  %v266 = vsel %vm201, %v174, 0
  %v269 = vsel %vm201, %v175, 0
  %v272 = vsel %vm201, %v176, 0
  %v275 = vsel %vm201, %v177, 0
  %v278 = vsel %vm201, %v178, 0
  %v281 = vsel %vm201, %v179, 0
  %v284 = vsel %vm201, %v180, 0
  %v287 = vsel %vm201, %v181, 0
  %v290 = vsel %vm201, %v182, 0
  %v293 = vsel %vm201, %v183, 0
  %v296 = vsel %vm201, %v184, 0
  %298 = vmatpush.msra.mxu0 0.0
  %299 = vmatpush.msra.mxu0 0.0
  %300 = vmatpush.msra.mxu0 0.0
  %301 = vmatpush.msra.mxu0 0.0
  %302 = vmatpush.msra.mxu0 0.0
  %303 = vmatpush.msra.mxu0 0.0
  %304 = vmatpush.msra.mxu0 0.0
  %305 = vmatpush.msra.mxu0 0.0
  %306 = vmatpush.msra.mxu0 %v199
  %307 = vmatpush.msra.mxu0 %v197
  %308 = vmatpush.msra.mxu0 %v195
  %309 = vmatpush.msra.mxu0 %v193
  %310 = vmatpush.msra.mxu0 %v191
  %311 = vmatpush.msra.mxu0 %v189
  %312 = vmatpush.msra.mxu0 %v187
  %313 = vmatpush.msra.mxu0 %v185
  %314 = vmatmul.f32.gmra.mxu0 %v203
  %v315 = vpop.f32.mrf.mxu0
  %v316 = vadd.f32 0.0, %v315
  %317 = vmatmul.f32.gmra.mxu0 %v206
  %v318 = vpop.f32.mrf.mxu0
  %v319 = vadd.f32 0.0, %v318
  %320 = vmatmul.f32.gmra.mxu0 %v209
  %v321 = vpop.f32.mrf.mxu0
  %v322 = vadd.f32 0.0, %v321
  %323 = vmatmul.f32.gmra.mxu0 %v212
  %v324 = vpop.f32.mrf.mxu0
  %v325 = vadd.f32 0.0, %v324
  %326 = vmatmul.f32.gmra.mxu0 %v215
  %v327 = vpop.f32.mrf.mxu0
  %v328 = vadd.f32 0.0, %v327
  %329 = vmatmul.f32.gmra.mxu0 %v218
  %v330 = vpop.f32.mrf.mxu0
  %v331 = vadd.f32 0.0, %v330
  %332 = vmatmul.f32.gmra.mxu0 %v221
  %v333 = vpop.f32.mrf.mxu0
  %v334 = vadd.f32 0.0, %v333
  %335 = vmatmul.f32.gmra.mxu0 %v224
  %v336 = vpop.f32.mrf.mxu0
  %v337 = vadd.f32 0.0, %v336
  %338 = vmatmul.f32.gmra.mxu0 %v227
  %v339 = vpop.f32.mrf.mxu0
  %v340 = vadd.f32 0.0, %v339
  %341 = vmatmul.f32.gmra.mxu0 %v230
  %v342 = vpop.f32.mrf.mxu0
  %v343 = vadd.f32 0.0, %v342
  %344 = vmatmul.f32.gmra.mxu0 %v233
  %v345 = vpop.f32.mrf.mxu0
  %v346 = vadd.f32 0.0, %v345
  %347 = vmatmul.f32.gmra.mxu0 %v236
  %v348 = vpop.f32.mrf.mxu0
  %v349 = vadd.f32 0.0, %v348
  %350 = vmatmul.f32.gmra.mxu0 %v239
  %v351 = vpop.f32.mrf.mxu0
  %v352 = vadd.f32 0.0, %v351
  %353 = vmatmul.f32.gmra.mxu0 %v242
  %v354 = vpop.f32.mrf.mxu0
  %v355 = vadd.f32 0.0, %v354
  %356 = vmatmul.f32.gmra.mxu0 %v245
  %v357 = vpop.f32.mrf.mxu0
  %v358 = vadd.f32 0.0, %v357
  %359 = vmatmul.f32.gmra.mxu0 %v248
  %v360 = vpop.f32.mrf.mxu0
  %v361 = vadd.f32 0.0, %v360
  %362 = vmatmul.f32.gmra.mxu0 %v251
  %v363 = vpop.f32.mrf.mxu0
  %v364 = vadd.f32 0.0, %v363
  %365 = vmatmul.f32.gmra.mxu0 %v254
  %v366 = vpop.f32.mrf.mxu0
  %v367 = vadd.f32 0.0, %v366
  %368 = vmatmul.f32.gmra.mxu0 %v257
  %v369 = vpop.f32.mrf.mxu0
  %v370 = vadd.f32 0.0, %v369
  %371 = vmatmul.f32.gmra.mxu0 %v260
  %v372 = vpop.f32.mrf.mxu0
  %v373 = vadd.f32 0.0, %v372
  %374 = vmatmul.f32.gmra.mxu0 %v263
  %v375 = vpop.f32.mrf.mxu0
  %v376 = vadd.f32 0.0, %v375
  %377 = vmatmul.f32.gmra.mxu0 %v266
  %v378 = vpop.f32.mrf.mxu0
  %v379 = vadd.f32 0.0, %v378
  %380 = vmatmul.f32.gmra.mxu0 %v269
  %v381 = vpop.f32.mrf.mxu0
  %v382 = vadd.f32 0.0, %v381
  %383 = vmatmul.f32.gmra.mxu0 %v272
  %v384 = vpop.f32.mrf.mxu0
  %v385 = vadd.f32 0.0, %v384
  %386 = vmatmul.f32.gmra.mxu0 %v275
  %v387 = vpop.f32.mrf.mxu0
  %v388 = vadd.f32 0.0, %v387
  %389 = vmatmul.f32.gmra.mxu0 %v278
  %v390 = vpop.f32.mrf.mxu0
  %v391 = vadd.f32 0.0, %v390
  %392 = vmatmul.f32.gmra.mxu0 %v281
  %v393 = vpop.f32.mrf.mxu0
  %v394 = vadd.f32 0.0, %v393
  %395 = vmatmul.f32.gmra.mxu0 %v284
  %v396 = vpop.f32.mrf.mxu0
  %v397 = vadd.f32 0.0, %v396
  %398 = vmatmul.f32.gmra.mxu0 %v287
  %v399 = vpop.f32.mrf.mxu0
  %v400 = vadd.f32 0.0, %v399
  %401 = vmatmul.f32.gmra.mxu0 %v290
  %v402 = vpop.f32.mrf.mxu0
  %v403 = vadd.f32 0.0, %v402
  %404 = vmatmul.f32.gmra.mxu0 %v293
  %v405 = vpop.f32.mrf.mxu0
  %v406 = vadd.f32 0.0, %v405
  %407 = vmatmul.f32.gmra.mxu0 %v296
  %v408 = vpop.f32.mrf.mxu0
  %v409 = vadd.f32 0.0, %v408
  %410 = vdwg.mxu0
  %411 = vmatpush.msra.mxu0 0.0
  %412 = vmatpush.msra.mxu0 0.0
  %413 = vmatpush.msra.mxu0 0.0
  %414 = vmatpush.msra.mxu0 0.0
  %415 = vmatpush.msra.mxu0 0.0
  %416 = vmatpush.msra.mxu0 0.0
  %417 = vmatpush.msra.mxu0 0.0
  %418 = vmatpush.msra.mxu0 0.0
  %419 = vmatpush.msra.mxu0 %v200
  %420 = vmatpush.msra.mxu0 %v198
  %421 = vmatpush.msra.mxu0 %v196
  %422 = vmatpush.msra.mxu0 %v194
  %423 = vmatpush.msra.mxu0 %v192
  %424 = vmatpush.msra.mxu0 %v190
  %425 = vmatpush.msra.mxu0 %v188
  %426 = vmatpush.msra.mxu0 %v186
  %427 = vmatmul.f32.gmra.mxu0 %v203
  %v428 = vpop.f32.mrf.mxu0
  %v429 = vadd.f32 0.0, %v428
  %430 = vmatmul.f32.gmra.mxu0 %v206
  %v431 = vpop.f32.mrf.mxu0
  %v432 = vadd.f32 0.0, %v431
  %433 = vmatmul.f32.gmra.mxu0 %v209
  %v434 = vpop.f32.mrf.mxu0
  %v435 = vadd.f32 0.0, %v434
  %436 = vmatmul.f32.gmra.mxu0 %v212
  %v437 = vpop.f32.mrf.mxu0
  %v438 = vadd.f32 0.0, %v437
  %439 = vmatmul.f32.gmra.mxu0 %v215
  %v440 = vpop.f32.mrf.mxu0
  %v441 = vadd.f32 0.0, %v440
  %442 = vmatmul.f32.gmra.mxu0 %v218
  %v443 = vpop.f32.mrf.mxu0
  %v444 = vadd.f32 0.0, %v443
  %445 = vmatmul.f32.gmra.mxu0 %v221
  %v446 = vpop.f32.mrf.mxu0
  %v447 = vadd.f32 0.0, %v446
  %448 = vmatmul.f32.gmra.mxu0 %v224
  %v449 = vpop.f32.mrf.mxu0
  %v450 = vadd.f32 0.0, %v449
  %451 = vmatmul.f32.gmra.mxu0 %v227
  %v452 = vpop.f32.mrf.mxu0
  %v453 = vadd.f32 0.0, %v452
  %454 = vmatmul.f32.gmra.mxu0 %v230
  %v455 = vpop.f32.mrf.mxu0
  %v456 = vadd.f32 0.0, %v455
  %457 = vmatmul.f32.gmra.mxu0 %v233
  %v458 = vpop.f32.mrf.mxu0
  %v459 = vadd.f32 0.0, %v458
  %460 = vmatmul.f32.gmra.mxu0 %v236
  %v461 = vpop.f32.mrf.mxu0
  %v462 = vadd.f32 0.0, %v461
  %463 = vmatmul.f32.gmra.mxu0 %v239
  %v464 = vpop.f32.mrf.mxu0
  %v465 = vadd.f32 0.0, %v464
  %466 = vmatmul.f32.gmra.mxu0 %v242
  %v467 = vpop.f32.mrf.mxu0
  %v468 = vadd.f32 0.0, %v467
  %469 = vmatmul.f32.gmra.mxu0 %v245
  %v470 = vpop.f32.mrf.mxu0
  %v471 = vadd.f32 0.0, %v470
  %472 = vmatmul.f32.gmra.mxu0 %v248
  %v473 = vpop.f32.mrf.mxu0
  %v474 = vadd.f32 0.0, %v473
  %475 = vmatmul.f32.gmra.mxu0 %v251
  %v476 = vpop.f32.mrf.mxu0
  %v477 = vadd.f32 0.0, %v476
  %478 = vmatmul.f32.gmra.mxu0 %v254
  %v479 = vpop.f32.mrf.mxu0
  %v480 = vadd.f32 0.0, %v479
  %481 = vmatmul.f32.gmra.mxu0 %v257
  %v482 = vpop.f32.mrf.mxu0
  %v483 = vadd.f32 0.0, %v482
  %484 = vmatmul.f32.gmra.mxu0 %v260
  %v485 = vpop.f32.mrf.mxu0
  %v486 = vadd.f32 0.0, %v485
  %487 = vmatmul.f32.gmra.mxu0 %v263
  %v488 = vpop.f32.mrf.mxu0
  %v489 = vadd.f32 0.0, %v488
  %490 = vmatmul.f32.gmra.mxu0 %v266
  %v491 = vpop.f32.mrf.mxu0
  %v492 = vadd.f32 0.0, %v491
  %493 = vmatmul.f32.gmra.mxu0 %v269
  %v494 = vpop.f32.mrf.mxu0
  %v495 = vadd.f32 0.0, %v494
  %496 = vmatmul.f32.gmra.mxu0 %v272
  %v497 = vpop.f32.mrf.mxu0
  %v498 = vadd.f32 0.0, %v497
  %499 = vmatmul.f32.gmra.mxu0 %v275
  %v500 = vpop.f32.mrf.mxu0
  %v501 = vadd.f32 0.0, %v500
  %502 = vmatmul.f32.gmra.mxu0 %v278
  %v503 = vpop.f32.mrf.mxu0
  %v504 = vadd.f32 0.0, %v503
  %505 = vmatmul.f32.gmra.mxu0 %v281
  %v506 = vpop.f32.mrf.mxu0
  %v507 = vadd.f32 0.0, %v506
  %508 = vmatmul.f32.gmra.mxu0 %v284
  %v509 = vpop.f32.mrf.mxu0
  %v510 = vadd.f32 0.0, %v509
  %511 = vmatmul.f32.gmra.mxu0 %v287
  %v512 = vpop.f32.mrf.mxu0
  %v513 = vadd.f32 0.0, %v512
  %514 = vmatmul.f32.gmra.mxu0 %v290
  %v515 = vpop.f32.mrf.mxu0
  %v516 = vadd.f32 0.0, %v515
  %517 = vmatmul.f32.gmra.mxu0 %v293
  %v518 = vpop.f32.mrf.mxu0
  %v519 = vadd.f32 0.0, %v518
  %520 = vmatmul.f32.gmra.mxu0 %v296
  %v521 = vpop.f32.mrf.mxu0
  %v522 = vadd.f32 0.0, %v521
  %523 = vdwg.mxu0
  %v524 = vld [vmem:[%s2] sm:$0xff]
  %v525 = vld [vmem:[%s2 + $0x8] sm:$0xff]
  %v526 = vld [vmem:[%s2 + $0x10] sm:$0xff]
  %v527 = vld [vmem:[%s2 + $0x18] sm:$0xff]
  %v528 = vld [vmem:[%s2 + $0x20] sm:$0xff]
  %v529 = vld [vmem:[%s2 + $0x28] sm:$0xff]
  %v530 = vld [vmem:[%s2 + $0x30] sm:$0xff]
  %v531 = vld [vmem:[%s2 + $0x38] sm:$0xff]
  %v532 = vld [vmem:[%s2 + $0x40] sm:$0xff]
  %v533 = vld [vmem:[%s2 + $0x48] sm:$0xff]
  %v534 = vld [vmem:[%s2 + $0x50] sm:$0xff]
  %v535 = vld [vmem:[%s2 + $0x58] sm:$0xff]
  %v536 = vld [vmem:[%s2 + $0x60] sm:$0xff]
  %v537 = vld [vmem:[%s2 + $0x68] sm:$0xff]
  %v538 = vld [vmem:[%s2 + $0x70] sm:$0xff]
  %v539 = vld [vmem:[%s2 + $0x78] sm:$0xff]
  %v540 = vld [vmem:[%s2 + $0x80] sm:$0xff]
  %v541 = vld [vmem:[%s2 + $0x88] sm:$0xff]
  %v542 = vld [vmem:[%s2 + $0x90] sm:$0xff]
  %v543 = vld [vmem:[%s2 + $0x98] sm:$0xff]
  %v544 = vld [vmem:[%s2 + $0xa0] sm:$0xff]
  %v545 = vld [vmem:[%s2 + $0xa8] sm:$0xff]
  %v546 = vld [vmem:[%s2 + $0xb0] sm:$0xff]
  %v547 = vld [vmem:[%s2 + $0xb8] sm:$0xff]
  %v548 = vld [vmem:[%s2 + $0xc0] sm:$0xff]
  %v549 = vld [vmem:[%s2 + $0xc8] sm:$0xff]
  %v550 = vld [vmem:[%s2 + $0xd0] sm:$0xff]
  %v551 = vld [vmem:[%s2 + $0xd8] sm:$0xff]
  %v552 = vld [vmem:[%s2 + $0xe0] sm:$0xff]
  %v553 = vld [vmem:[%s2 + $0xe8] sm:$0xff]
  %v554 = vld [vmem:[%s2 + $0xf0] sm:$0xff]
  %v555 = vld [vmem:[%s2 + $0xf8] sm:$0xff]
  %v556 = vld [vmem:[%s3] sm:$0x3]
  %557 = vset.pattern.permute.xlu0 0
  %558 = vperm.xlu0 %557, %v524
  %v559 = vpop.permute.xlu0 %558
  %560 = vset.pattern.permute.xlu0 0
  %561 = vperm.xlu0 %560, %v525
  %v562 = vpop.permute.xlu0 %561
  %563 = vset.pattern.permute.xlu0 0
  %564 = vperm.xlu0 %563, %v526
  %v565 = vpop.permute.xlu0 %564
  %566 = vset.pattern.permute.xlu0 0
  %567 = vperm.xlu0 %566, %v527
  %v568 = vpop.permute.xlu0 %567
  %569 = vset.pattern.permute.xlu0 0
  %570 = vperm.xlu0 %569, %v528
  %v571 = vpop.permute.xlu0 %570
  %572 = vset.pattern.permute.xlu0 0
  %573 = vperm.xlu0 %572, %v529
  %v574 = vpop.permute.xlu0 %573
  %575 = vset.pattern.permute.xlu0 0
  %576 = vperm.xlu0 %575, %v530
  %v577 = vpop.permute.xlu0 %576
  %578 = vset.pattern.permute.xlu0 0
  %579 = vperm.xlu0 %578, %v531
  %v580 = vpop.permute.xlu0 %579
  %581 = vset.pattern.permute.xlu0 0
  %582 = vperm.xlu0 %581, %v532
  %v583 = vpop.permute.xlu0 %582
  %584 = vset.pattern.permute.xlu0 0
  %585 = vperm.xlu0 %584, %v533
  %v586 = vpop.permute.xlu0 %585
  %587 = vset.pattern.permute.xlu0 0
  %588 = vperm.xlu0 %587, %v534
  %v589 = vpop.permute.xlu0 %588
  %590 = vset.pattern.permute.xlu0 0
  %591 = vperm.xlu0 %590, %v535
  %v592 = vpop.permute.xlu0 %591
  %593 = vset.pattern.permute.xlu0 0
  %594 = vperm.xlu0 %593, %v536
  %v595 = vpop.permute.xlu0 %594
  %596 = vset.pattern.permute.xlu0 0
  %597 = vperm.xlu0 %596, %v537
  %v598 = vpop.permute.xlu0 %597
  %599 = vset.pattern.permute.xlu0 0
  %600 = vperm.xlu0 %599, %v538
  %v601 = vpop.permute.xlu0 %600
  %602 = vset.pattern.permute.xlu0 0
  %603 = vperm.xlu0 %602, %v539
  %v604 = vpop.permute.xlu0 %603
  %605 = vset.pattern.permute.xlu0 0
  %606 = vperm.xlu0 %605, %v540
  %v607 = vpop.permute.xlu0 %606
  %608 = vset.pattern.permute.xlu0 0
  %609 = vperm.xlu0 %608, %v541
  %v610 = vpop.permute.xlu0 %609
  %611 = vset.pattern.permute.xlu0 0
  %612 = vperm.xlu0 %611, %v542
  %v613 = vpop.permute.xlu0 %612
  %614 = vset.pattern.permute.xlu0 0
  %615 = vperm.xlu0 %614, %v543
  %v616 = vpop.permute.xlu0 %615
  %617 = vset.pattern.permute.xlu0 0
  %618 = vperm.xlu0 %617, %v544
  %v619 = vpop.permute.xlu0 %618
  %620 = vset.pattern.permute.xlu0 0
  %621 = vperm.xlu0 %620, %v545
  %v622 = vpop.permute.xlu0 %621
  %623 = vset.pattern.permute.xlu0 0
  %624 = vperm.xlu0 %623, %v546
  %v625 = vpop.permute.xlu0 %624
  %626 = vset.pattern.permute.xlu0 0
  %627 = vperm.xlu0 %626, %v547
  %v628 = vpop.permute.xlu0 %627
  %629 = vset.pattern.permute.xlu0 0
  %630 = vperm.xlu0 %629, %v548
  %v631 = vpop.permute.xlu0 %630
  %632 = vset.pattern.permute.xlu0 0
  %633 = vperm.xlu0 %632, %v549
  %v634 = vpop.permute.xlu0 %633
  %635 = vset.pattern.permute.xlu0 0
  %636 = vperm.xlu0 %635, %v550
  %v637 = vpop.permute.xlu0 %636
  %638 = vset.pattern.permute.xlu0 0
  %639 = vperm.xlu0 %638, %v551
  %v640 = vpop.permute.xlu0 %639
  %641 = vset.pattern.permute.xlu0 0
  %642 = vperm.xlu0 %641, %v552
  %v643 = vpop.permute.xlu0 %642
  %644 = vset.pattern.permute.xlu0 0
  %645 = vperm.xlu0 %644, %v553
  %v646 = vpop.permute.xlu0 %645
  %647 = vset.pattern.permute.xlu0 0
  %648 = vperm.xlu0 %647, %v554
  %v649 = vpop.permute.xlu0 %648
  %650 = vset.pattern.permute.xlu0 0
  %651 = vperm.xlu0 %650, %v555
  %v652 = vpop.permute.xlu0 %651
  %v653 = vperm.slane %v556, 0
  %v654 = vperm.slane %v556, 1
  %vm655 = vcmp.eq.s32.totalorder %v559, %v653
  %vm656 = vcmp.eq.s32.totalorder %v559, %v654
  %vm657 = vcmp.eq.s32.totalorder %v562, %v653
  %vm658 = vcmp.eq.s32.totalorder %v562, %v654
  %vm659 = vcmp.eq.s32.totalorder %v565, %v653
  %vm660 = vcmp.eq.s32.totalorder %v565, %v654
  %vm661 = vcmp.eq.s32.totalorder %v568, %v653
  %vm662 = vcmp.eq.s32.totalorder %v568, %v654
  %vm663 = vcmp.eq.s32.totalorder %v571, %v653
  %vm664 = vcmp.eq.s32.totalorder %v571, %v654
  %vm665 = vcmp.eq.s32.totalorder %v574, %v653
  %vm666 = vcmp.eq.s32.totalorder %v574, %v654
  %vm667 = vcmp.eq.s32.totalorder %v577, %v653
  %vm668 = vcmp.eq.s32.totalorder %v577, %v654
  %vm669 = vcmp.eq.s32.totalorder %v580, %v653
  %vm670 = vcmp.eq.s32.totalorder %v580, %v654
  %vm671 = vcmp.eq.s32.totalorder %v583, %v653
  %vm672 = vcmp.eq.s32.totalorder %v583, %v654
  %vm673 = vcmp.eq.s32.totalorder %v586, %v653
  %vm674 = vcmp.eq.s32.totalorder %v586, %v654
  %vm675 = vcmp.eq.s32.totalorder %v589, %v653
  %vm676 = vcmp.eq.s32.totalorder %v589, %v654
  %vm677 = vcmp.eq.s32.totalorder %v592, %v653
  %vm678 = vcmp.eq.s32.totalorder %v592, %v654
  %vm679 = vcmp.eq.s32.totalorder %v595, %v653
  %vm680 = vcmp.eq.s32.totalorder %v595, %v654
  %vm681 = vcmp.eq.s32.totalorder %v598, %v653
  %vm682 = vcmp.eq.s32.totalorder %v598, %v654
  %vm683 = vcmp.eq.s32.totalorder %v601, %v653
  %vm684 = vcmp.eq.s32.totalorder %v601, %v654
  %vm685 = vcmp.eq.s32.totalorder %v604, %v653
  %vm686 = vcmp.eq.s32.totalorder %v604, %v654
  %vm687 = vcmp.eq.s32.totalorder %v607, %v653
  %vm688 = vcmp.eq.s32.totalorder %v607, %v654
  %vm689 = vcmp.eq.s32.totalorder %v610, %v653
  %vm690 = vcmp.eq.s32.totalorder %v610, %v654
  %vm691 = vcmp.eq.s32.totalorder %v613, %v653
  %vm692 = vcmp.eq.s32.totalorder %v613, %v654
  %vm693 = vcmp.eq.s32.totalorder %v616, %v653
  %vm694 = vcmp.eq.s32.totalorder %v616, %v654
  %vm695 = vcmp.eq.s32.totalorder %v619, %v653
  %vm696 = vcmp.eq.s32.totalorder %v619, %v654
  %vm697 = vcmp.eq.s32.totalorder %v622, %v653
  %vm698 = vcmp.eq.s32.totalorder %v622, %v654
  %vm699 = vcmp.eq.s32.totalorder %v625, %v653
  %vm700 = vcmp.eq.s32.totalorder %v625, %v654
  %vm701 = vcmp.eq.s32.totalorder %v628, %v653
  %vm702 = vcmp.eq.s32.totalorder %v628, %v654
  %vm703 = vcmp.eq.s32.totalorder %v631, %v653
  %vm704 = vcmp.eq.s32.totalorder %v631, %v654
  %vm705 = vcmp.eq.s32.totalorder %v634, %v653
  %vm706 = vcmp.eq.s32.totalorder %v634, %v654
  %vm707 = vcmp.eq.s32.totalorder %v637, %v653
  %vm708 = vcmp.eq.s32.totalorder %v637, %v654
  %vm709 = vcmp.eq.s32.totalorder %v640, %v653
  %vm710 = vcmp.eq.s32.totalorder %v640, %v654
  %vm711 = vcmp.eq.s32.totalorder %v643, %v653
  %vm712 = vcmp.eq.s32.totalorder %v643, %v654
  %vm713 = vcmp.eq.s32.totalorder %v646, %v653
  %vm714 = vcmp.eq.s32.totalorder %v646, %v654
  %vm715 = vcmp.eq.s32.totalorder %v649, %v653
  %vm716 = vcmp.eq.s32.totalorder %v649, %v654
  %vm717 = vcmp.eq.s32.totalorder %v652, %v653
  %vm718 = vcmp.eq.s32.totalorder %v652, %v654
  %v719 = vsel %vm655, 1, 0
  %v720 = vsel %vm656, 1, 0
  %v721 = vsel %vm657, 1, 0
  %v722 = vsel %vm658, 1, 0
  %v723 = vsel %vm659, 1, 0
  %v724 = vsel %vm660, 1, 0
  %v725 = vsel %vm661, 1, 0
  %v726 = vsel %vm662, 1, 0
  %v727 = vsel %vm663, 1, 0
  %v728 = vsel %vm664, 1, 0
  %v729 = vsel %vm665, 1, 0
  %v730 = vsel %vm666, 1, 0
  %v731 = vsel %vm667, 1, 0
  %v732 = vsel %vm668, 1, 0
  %v733 = vsel %vm669, 1, 0
  %v734 = vsel %vm670, 1, 0
  %v735 = vsel %vm671, 1, 0
  %v736 = vsel %vm672, 1, 0
  %v737 = vsel %vm673, 1, 0
  %v738 = vsel %vm674, 1, 0
  %v739 = vsel %vm675, 1, 0
  %v740 = vsel %vm676, 1, 0
  %v741 = vsel %vm677, 1, 0
  %v742 = vsel %vm678, 1, 0
  %v743 = vsel %vm679, 1, 0
  %v744 = vsel %vm680, 1, 0
  %v745 = vsel %vm681, 1, 0
  %v746 = vsel %vm682, 1, 0
  %v747 = vsel %vm683, 1, 0
  %v748 = vsel %vm684, 1, 0
  %v749 = vsel %vm685, 1, 0
  %v750 = vsel %vm686, 1, 0
  %v751 = vsel %vm687, 1, 0
  %v752 = vsel %vm688, 1, 0
  %v753 = vsel %vm689, 1, 0
  %v754 = vsel %vm690, 1, 0
  %v755 = vsel %vm691, 1, 0
  %v756 = vsel %vm692, 1, 0
  %v757 = vsel %vm693, 1, 0
  %v758 = vsel %vm694, 1, 0
  %v759 = vsel %vm695, 1, 0
  %v760 = vsel %vm696, 1, 0
  %v761 = vsel %vm697, 1, 0
  %v762 = vsel %vm698, 1, 0
  %v763 = vsel %vm699, 1, 0
  %v764 = vsel %vm700, 1, 0
  %v765 = vsel %vm701, 1, 0
  %v766 = vsel %vm702, 1, 0
  %v767 = vsel %vm703, 1, 0
  %v768 = vsel %vm704, 1, 0
  %v769 = vsel %vm705, 1, 0
  %v770 = vsel %vm706, 1, 0
  %v771 = vsel %vm707, 1, 0
  %v772 = vsel %vm708, 1, 0
  %v773 = vsel %vm709, 1, 0
  %v774 = vsel %vm710, 1, 0
  %v775 = vsel %vm711, 1, 0
  %v776 = vsel %vm712, 1, 0
  %v777 = vsel %vm713, 1, 0
  %v778 = vsel %vm714, 1, 0
  %v779 = vsel %vm715, 1, 0
  %v780 = vsel %vm716, 1, 0
  %v781 = vsel %vm717, 1, 0
  %v782 = vsel %vm718, 1, 0
  %v783 = vcvt.s32.f32 %v719
  %v784 = vcvt.s32.f32 %v720
  %v785 = vcvt.s32.f32 %v721
  %v786 = vcvt.s32.f32 %v722
  %v787 = vcvt.s32.f32 %v723
  %v788 = vcvt.s32.f32 %v724
  %v789 = vcvt.s32.f32 %v725
  %v790 = vcvt.s32.f32 %v726
  %v791 = vcvt.s32.f32 %v727
  %v792 = vcvt.s32.f32 %v728
  %v793 = vcvt.s32.f32 %v729
  %v794 = vcvt.s32.f32 %v730
  %v795 = vcvt.s32.f32 %v731
  %v796 = vcvt.s32.f32 %v732
  %v797 = vcvt.s32.f32 %v733
  %v798 = vcvt.s32.f32 %v734
  %v799 = vcvt.s32.f32 %v735
  %v800 = vcvt.s32.f32 %v736
  %v801 = vcvt.s32.f32 %v737
  %v802 = vcvt.s32.f32 %v738
  %v803 = vcvt.s32.f32 %v739
  %v804 = vcvt.s32.f32 %v740
  %v805 = vcvt.s32.f32 %v741
  %v806 = vcvt.s32.f32 %v742
  %v807 = vcvt.s32.f32 %v743
  %v808 = vcvt.s32.f32 %v744
  %v809 = vcvt.s32.f32 %v745
  %v810 = vcvt.s32.f32 %v746
  %v811 = vcvt.s32.f32 %v747
  %v812 = vcvt.s32.f32 %v748
  %v813 = vcvt.s32.f32 %v749
  %v814 = vcvt.s32.f32 %v750
  %v815 = vcvt.s32.f32 %v751
  %v816 = vcvt.s32.f32 %v752
  %v817 = vcvt.s32.f32 %v753
  %v818 = vcvt.s32.f32 %v754
  %v819 = vcvt.s32.f32 %v755
  %v820 = vcvt.s32.f32 %v756
  %v821 = vcvt.s32.f32 %v757
  %v822 = vcvt.s32.f32 %v758
  %v823 = vcvt.s32.f32 %v759
  %v824 = vcvt.s32.f32 %v760
  %v825 = vcvt.s32.f32 %v761
  %v826 = vcvt.s32.f32 %v762
  %v827 = vcvt.s32.f32 %v763
  %v828 = vcvt.s32.f32 %v764
  %v829 = vcvt.s32.f32 %v765
  %v830 = vcvt.s32.f32 %v766
  %v831 = vcvt.s32.f32 %v767
  %v832 = vcvt.s32.f32 %v768
  %v833 = vcvt.s32.f32 %v769
  %v834 = vcvt.s32.f32 %v770
  %v835 = vcvt.s32.f32 %v771
  %v836 = vcvt.s32.f32 %v772
  %v837 = vcvt.s32.f32 %v773
  %v838 = vcvt.s32.f32 %v774
  %v839 = vcvt.s32.f32 %v775
  %v840 = vcvt.s32.f32 %v776
  %v841 = vcvt.s32.f32 %v777
  %v842 = vcvt.s32.f32 %v778
  %v843 = vcvt.s32.f32 %v779
  %v844 = vcvt.s32.f32 %v780
  %v845 = vcvt.s32.f32 %v781
  %v846 = vcvt.s32.f32 %v782
  %v847 = vld [vmem:[#allocation2] sm:$0xff]
  %v848 = vld [vmem:[#allocation2 + $0x8] sm:$0xff]
  %v849 = vld [vmem:[#allocation2 + $0x10] sm:$0xff]
  %v850 = vld [vmem:[#allocation2 + $0x18] sm:$0xff]
  %v851 = vld [vmem:[#allocation2 + $0x20] sm:$0xff]
  %v852 = vld [vmem:[#allocation2 + $0x28] sm:$0xff]
  %v853 = vld [vmem:[#allocation2 + $0x30] sm:$0xff]
  %v854 = vld [vmem:[#allocation2 + $0x38] sm:$0xff]
  %v855 = vld [vmem:[#allocation2 + $0x40] sm:$0xff]
  %v856 = vld [vmem:[#allocation2 + $0x48] sm:$0xff]
  %v857 = vld [vmem:[#allocation2 + $0x50] sm:$0xff]
  %v858 = vld [vmem:[#allocation2 + $0x58] sm:$0xff]
  %v859 = vld [vmem:[#allocation2 + $0x60] sm:$0xff]
  %v860 = vld [vmem:[#allocation2 + $0x68] sm:$0xff]
  %v861 = vld [vmem:[#allocation2 + $0x70] sm:$0xff]
  %v862 = vld [vmem:[#allocation2 + $0x78] sm:$0xff]
  %v863 = vld [vmem:[#allocation2 + $0x80] sm:$0xff]
  %v864 = vld [vmem:[#allocation2 + $0x88] sm:$0xff]
  %v865 = vld [vmem:[#allocation2 + $0x90] sm:$0xff]
  %v866 = vld [vmem:[#allocation2 + $0x98] sm:$0xff]
  %v867 = vld [vmem:[#allocation2 + $0xa0] sm:$0xff]
  %v868 = vld [vmem:[#allocation2 + $0xa8] sm:$0xff]
  %v869 = vld [vmem:[#allocation2 + $0xb0] sm:$0xff]
  %v870 = vld [vmem:[#allocation2 + $0xb8] sm:$0xff]
  %v871 = vld [vmem:[#allocation2 + $0xc0] sm:$0xff]
  %v872 = vld [vmem:[#allocation2 + $0xc8] sm:$0xff]
  %v873 = vld [vmem:[#allocation2 + $0xd0] sm:$0xff]
  %v874 = vld [vmem:[#allocation2 + $0xd8] sm:$0xff]
  %v875 = vld [vmem:[#allocation2 + $0xe0] sm:$0xff]
  %v876 = vld [vmem:[#allocation2 + $0xe8] sm:$0xff]
  %v877 = vld [vmem:[#allocation2 + $0xf0] sm:$0xff]
  %v878 = vld [vmem:[#allocation2 + $0xf8] sm:$0xff]
  %v879 = vmax.f32 %v316, %v429
  %880 = vmax.xlane.f32.xlu0 %v879
  %v881 = vpop.xlane.xlu0 %880
  %v882 = vmax.f32 %v319, %v432
  %883 = vmax.xlane.f32.xlu0 %v882
  %v884 = vpop.xlane.xlu0 %883
  %v885 = vmax.f32 %v322, %v435
  %886 = vmax.xlane.f32.xlu0 %v885
  %v887 = vpop.xlane.xlu0 %886
  %v888 = vmax.f32 %v325, %v438
  %889 = vmax.xlane.f32.xlu0 %v888
  %v890 = vpop.xlane.xlu0 %889
  %v891 = vmax.f32 %v328, %v441
  %892 = vmax.xlane.f32.xlu0 %v891
  %v893 = vpop.xlane.xlu0 %892
  %v894 = vmax.f32 %v331, %v444
  %895 = vmax.xlane.f32.xlu0 %v894
  %v896 = vpop.xlane.xlu0 %895
  %v897 = vmax.f32 %v334, %v447
  %898 = vmax.xlane.f32.xlu0 %v897
  %v899 = vpop.xlane.xlu0 %898
  %v900 = vmax.f32 %v337, %v450
  %901 = vmax.xlane.f32.xlu0 %v900
  %v902 = vpop.xlane.xlu0 %901
  %v903 = vmax.f32 %v340, %v453
  %904 = vmax.xlane.f32.xlu0 %v903
  %v905 = vpop.xlane.xlu0 %904
  %v906 = vmax.f32 %v343, %v456
  %907 = vmax.xlane.f32.xlu0 %v906
  %v908 = vpop.xlane.xlu0 %907
  %v909 = vmax.f32 %v346, %v459
  %910 = vmax.xlane.f32.xlu0 %v909
  %v911 = vpop.xlane.xlu0 %910
  %v912 = vmax.f32 %v349, %v462
  %913 = vmax.xlane.f32.xlu0 %v912
  %v914 = vpop.xlane.xlu0 %913
  %v915 = vmax.f32 %v352, %v465
  %916 = vmax.xlane.f32.xlu0 %v915
  %v917 = vpop.xlane.xlu0 %916
  %v918 = vmax.f32 %v355, %v468
  %919 = vmax.xlane.f32.xlu0 %v918
  %v920 = vpop.xlane.xlu0 %919
  %v921 = vmax.f32 %v358, %v471
  %922 = vmax.xlane.f32.xlu0 %v921
  %v923 = vpop.xlane.xlu0 %922
  %v924 = vmax.f32 %v361, %v474
  %925 = vmax.xlane.f32.xlu0 %v924
  %v926 = vpop.xlane.xlu0 %925
  %v927 = vmax.f32 %v364, %v477
  %928 = vmax.xlane.f32.xlu0 %v927
  %v929 = vpop.xlane.xlu0 %928
  %v930 = vmax.f32 %v367, %v480
  %931 = vmax.xlane.f32.xlu0 %v930
  %v932 = vpop.xlane.xlu0 %931
  %v933 = vmax.f32 %v370, %v483
  %934 = vmax.xlane.f32.xlu0 %v933
  %v935 = vpop.xlane.xlu0 %934
  %v936 = vmax.f32 %v373, %v486
  %937 = vmax.xlane.f32.xlu0 %v936
  %v938 = vpop.xlane.xlu0 %937
  %v939 = vmax.f32 %v376, %v489
  %940 = vmax.xlane.f32.xlu0 %v939
  %v941 = vpop.xlane.xlu0 %940
  %v942 = vmax.f32 %v379, %v492
  %943 = vmax.xlane.f32.xlu0 %v942
  %v944 = vpop.xlane.xlu0 %943
  %v945 = vmax.f32 %v382, %v495
  %946 = vmax.xlane.f32.xlu0 %v945
  %v947 = vpop.xlane.xlu0 %946
  %v948 = vmax.f32 %v385, %v498
  %949 = vmax.xlane.f32.xlu0 %v948
  %v950 = vpop.xlane.xlu0 %949
  %v951 = vmax.f32 %v388, %v501
  %952 = vmax.xlane.f32.xlu0 %v951
  %v953 = vpop.xlane.xlu0 %952
  %v954 = vmax.f32 %v391, %v504
  %955 = vmax.xlane.f32.xlu0 %v954
  %v956 = vpop.xlane.xlu0 %955
  %v957 = vmax.f32 %v394, %v507
  %958 = vmax.xlane.f32.xlu0 %v957
  %v959 = vpop.xlane.xlu0 %958
  %v960 = vmax.f32 %v397, %v510
  %961 = vmax.xlane.f32.xlu0 %v960
  %v962 = vpop.xlane.xlu0 %961
  %v963 = vmax.f32 %v400, %v513
  %964 = vmax.xlane.f32.xlu0 %v963
  %v965 = vpop.xlane.xlu0 %964
  %v966 = vmax.f32 %v403, %v516
  %967 = vmax.xlane.f32.xlu0 %v966
  %v968 = vpop.xlane.xlu0 %967
  %v969 = vmax.f32 %v406, %v519
  %970 = vmax.xlane.f32.xlu0 %v969
  %v971 = vpop.xlane.xlu0 %970
  %v972 = vmax.f32 %v409, %v522
  %973 = vmax.xlane.f32.xlu0 %v972
  %v974 = vpop.xlane.xlu0 %973
  %v975 = vmax.f32 %v847, %v881
  %v976 = vmax.f32 %v848, %v884
  %v977 = vmax.f32 %v849, %v887
  %v978 = vmax.f32 %v850, %v890
  %v979 = vmax.f32 %v851, %v893
  %v980 = vmax.f32 %v852, %v896
  %v981 = vmax.f32 %v853, %v899
  %v982 = vmax.f32 %v854, %v902
  %v983 = vmax.f32 %v855, %v905
  %v984 = vmax.f32 %v856, %v908
  %v985 = vmax.f32 %v857, %v911
  %v986 = vmax.f32 %v858, %v914
  %v987 = vmax.f32 %v859, %v917
  %v988 = vmax.f32 %v860, %v920
  %v989 = vmax.f32 %v861, %v923
  %v990 = vmax.f32 %v862, %v926
  %v991 = vmax.f32 %v863, %v929
  %v992 = vmax.f32 %v864, %v932
  %v993 = vmax.f32 %v865, %v935
  %v994 = vmax.f32 %v866, %v938
  %v995 = vmax.f32 %v867, %v941
  %v996 = vmax.f32 %v868, %v944
  %v997 = vmax.f32 %v869, %v947
  %v998 = vmax.f32 %v870, %v950
  %v999 = vmax.f32 %v871, %v953
  %v1000 = vmax.f32 %v872, %v956
  %v1001 = vmax.f32 %v873, %v959
  %v1002 = vmax.f32 %v874, %v962
  %v1003 = vmax.f32 %v875, %v965
  %v1004 = vmax.f32 %v876, %v968
  %v1005 = vmax.f32 %v877, %v971
  %v1006 = vmax.f32 %v878, %v974
  %v1007 = vsub.f32 %v847, %v975
  %v1008 = vsub.f32 %v848, %v976
  %v1009 = vsub.f32 %v849, %v977
  %v1010 = vsub.f32 %v850, %v978
  %v1011 = vsub.f32 %v851, %v979
  %v1012 = vsub.f32 %v852, %v980
  %v1013 = vsub.f32 %v853, %v981
  %v1014 = vsub.f32 %v854, %v982
  %v1015 = vsub.f32 %v855, %v983
  %v1016 = vsub.f32 %v856, %v984
  %v1017 = vsub.f32 %v857, %v985
  %v1018 = vsub.f32 %v858, %v986
  %v1019 = vsub.f32 %v859, %v987
  %v1020 = vsub.f32 %v860, %v988
  %v1021 = vsub.f32 %v861, %v989
  %v1022 = vsub.f32 %v862, %v990
  %v1023 = vsub.f32 %v863, %v991
  %v1024 = vsub.f32 %v864, %v992
  %v1025 = vsub.f32 %v865, %v993
  %v1026 = vsub.f32 %v866, %v994
  %v1027 = vsub.f32 %v867, %v995
  %v1028 = vsub.f32 %v868, %v996
  %v1029 = vsub.f32 %v869, %v997
  %v1030 = vsub.f32 %v870, %v998
  %v1031 = vsub.f32 %v871, %v999
  %v1032 = vsub.f32 %v872, %v1000
  %v1033 = vsub.f32 %v873, %v1001
  %v1034 = vsub.f32 %v874, %v1002
  %v1035 = vsub.f32 %v875, %v1003
  %v1036 = vsub.f32 %v876, %v1004
  %v1037 = vsub.f32 %v877, %v1005
  %v1038 = vsub.f32 %v878, %v1006
  %v1039 = vmul.f32 %v1007, 1.442695
  %v1040 = vpow.pop %v1039
  %v1041 = vmul.f32 %v1008, 1.442695
  %v1042 = vpow.pop %v1041
  %v1043 = vmul.f32 %v1009, 1.442695
  %v1044 = vpow.pop %v1043
  %v1045 = vmul.f32 %v1010, 1.442695
  %v1046 = vpow.pop %v1045
  %v1047 = vmul.f32 %v1011, 1.442695
  %v1048 = vpow.pop %v1047
  %v1049 = vmul.f32 %v1012, 1.442695
  %v1050 = vpow.pop %v1049
  %v1051 = vmul.f32 %v1013, 1.442695
  %v1052 = vpow.pop %v1051
  %v1053 = vmul.f32 %v1014, 1.442695
  %v1054 = vpow.pop %v1053
  %v1055 = vmul.f32 %v1015, 1.442695
  %v1056 = vpow.pop %v1055
  %v1057 = vmul.f32 %v1016, 1.442695
  %v1058 = vpow.pop %v1057
  %v1059 = vmul.f32 %v1017, 1.442695
  %v1060 = vpow.pop %v1059
  %v1061 = vmul.f32 %v1018, 1.442695
  %v1062 = vpow.pop %v1061
  %v1063 = vmul.f32 %v1019, 1.442695
  %v1064 = vpow.pop %v1063
  %v1065 = vmul.f32 %v1020, 1.442695
  %v1066 = vpow.pop %v1065
  %v1067 = vmul.f32 %v1021, 1.442695
  %v1068 = vpow.pop %v1067
  %v1069 = vmul.f32 %v1022, 1.442695
  %v1070 = vpow.pop %v1069
  %v1071 = vmul.f32 %v1023, 1.442695
  %v1072 = vpow.pop %v1071
  %v1073 = vmul.f32 %v1024, 1.442695
  %v1074 = vpow.pop %v1073
  %v1075 = vmul.f32 %v1025, 1.442695
  %v1076 = vpow.pop %v1075
  %v1077 = vmul.f32 %v1026, 1.442695
  %v1078 = vpow.pop %v1077
  %v1079 = vmul.f32 %v1027, 1.442695
  %v1080 = vpow.pop %v1079
  %v1081 = vmul.f32 %v1028, 1.442695
  %v1082 = vpow.pop %v1081
  %v1083 = vmul.f32 %v1029, 1.442695
  %v1084 = vpow.pop %v1083
  %v1085 = vmul.f32 %v1030, 1.442695
  %v1086 = vpow.pop %v1085
  %v1087 = vmul.f32 %v1031, 1.442695
  %v1088 = vpow.pop %v1087
  %v1089 = vmul.f32 %v1032, 1.442695
  %v1090 = vpow.pop %v1089
  %v1091 = vmul.f32 %v1033, 1.442695
  %v1092 = vpow.pop %v1091
  %v1093 = vmul.f32 %v1034, 1.442695
  %v1094 = vpow.pop %v1093
  %v1095 = vmul.f32 %v1035, 1.442695
  %v1096 = vpow.pop %v1095
  %v1097 = vmul.f32 %v1036, 1.442695
  %v1098 = vpow.pop %v1097
  %v1099 = vmul.f32 %v1037, 1.442695
  %v1100 = vpow.pop %v1099
  %v1101 = vmul.f32 %v1038, 1.442695
  %v1102 = vpow.pop %v1101
  %1104 = vset.pattern.permute.xlu0 0
  %1105 = vperm.xlu0 %1104, %v975
  %v1106 = vpop.permute.xlu0 %1105
  %1109 = vset.pattern.permute.xlu0 0
  %1110 = vperm.xlu0 %1109, %v976
  %v1111 = vpop.permute.xlu0 %1110
  %1114 = vset.pattern.permute.xlu0 0
  %1115 = vperm.xlu0 %1114, %v977
  %v1116 = vpop.permute.xlu0 %1115
  %1119 = vset.pattern.permute.xlu0 0
  %1120 = vperm.xlu0 %1119, %v978
  %v1121 = vpop.permute.xlu0 %1120
  %1124 = vset.pattern.permute.xlu0 0
  %1125 = vperm.xlu0 %1124, %v979
  %v1126 = vpop.permute.xlu0 %1125
  %1129 = vset.pattern.permute.xlu0 0
  %1130 = vperm.xlu0 %1129, %v980
  %v1131 = vpop.permute.xlu0 %1130
  %1134 = vset.pattern.permute.xlu0 0
  %1135 = vperm.xlu0 %1134, %v981
  %v1136 = vpop.permute.xlu0 %1135
  %1139 = vset.pattern.permute.xlu0 0
  %1140 = vperm.xlu0 %1139, %v982
  %v1141 = vpop.permute.xlu0 %1140
  %1144 = vset.pattern.permute.xlu0 0
  %1145 = vperm.xlu0 %1144, %v983
  %v1146 = vpop.permute.xlu0 %1145
  %1149 = vset.pattern.permute.xlu0 0
  %1150 = vperm.xlu0 %1149, %v984
  %v1151 = vpop.permute.xlu0 %1150
  %1154 = vset.pattern.permute.xlu0 0
  %1155 = vperm.xlu0 %1154, %v985
  %v1156 = vpop.permute.xlu0 %1155
  %1159 = vset.pattern.permute.xlu0 0
  %1160 = vperm.xlu0 %1159, %v986
  %v1161 = vpop.permute.xlu0 %1160
  %1164 = vset.pattern.permute.xlu0 0
  %1165 = vperm.xlu0 %1164, %v987
  %v1166 = vpop.permute.xlu0 %1165
  %1169 = vset.pattern.permute.xlu0 0
  %1170 = vperm.xlu0 %1169, %v988
  %v1171 = vpop.permute.xlu0 %1170
  %1174 = vset.pattern.permute.xlu0 0
  %1175 = vperm.xlu0 %1174, %v989
  %v1176 = vpop.permute.xlu0 %1175
  %1179 = vset.pattern.permute.xlu0 0
  %1180 = vperm.xlu0 %1179, %v990
  %v1181 = vpop.permute.xlu0 %1180
  %1184 = vset.pattern.permute.xlu0 0
  %1185 = vperm.xlu0 %1184, %v991
  %v1186 = vpop.permute.xlu0 %1185
  %1189 = vset.pattern.permute.xlu0 0
  %1190 = vperm.xlu0 %1189, %v992
  %v1191 = vpop.permute.xlu0 %1190
  %1194 = vset.pattern.permute.xlu0 0
  %1195 = vperm.xlu0 %1194, %v993
  %v1196 = vpop.permute.xlu0 %1195
  %1199 = vset.pattern.permute.xlu0 0
  %1200 = vperm.xlu0 %1199, %v994
  %v1201 = vpop.permute.xlu0 %1200
  %1204 = vset.pattern.permute.xlu0 0
  %1205 = vperm.xlu0 %1204, %v995
  %v1206 = vpop.permute.xlu0 %1205
  %1209 = vset.pattern.permute.xlu0 0
  %1210 = vperm.xlu0 %1209, %v996
  %v1211 = vpop.permute.xlu0 %1210
  %1214 = vset.pattern.permute.xlu0 0
  %1215 = vperm.xlu0 %1214, %v997
  %v1216 = vpop.permute.xlu0 %1215
  %1219 = vset.pattern.permute.xlu0 0
  %1220 = vperm.xlu0 %1219, %v998
  %v1221 = vpop.permute.xlu0 %1220
  %1224 = vset.pattern.permute.xlu0 0
  %1225 = vperm.xlu0 %1224, %v999
  %v1226 = vpop.permute.xlu0 %1225
  %1229 = vset.pattern.permute.xlu0 0
  %1230 = vperm.xlu0 %1229, %v1000
  %v1231 = vpop.permute.xlu0 %1230
  %1234 = vset.pattern.permute.xlu0 0
  %1235 = vperm.xlu0 %1234, %v1001
  %v1236 = vpop.permute.xlu0 %1235
  %1239 = vset.pattern.permute.xlu0 0
  %1240 = vperm.xlu0 %1239, %v1002
  %v1241 = vpop.permute.xlu0 %1240
  %1244 = vset.pattern.permute.xlu0 0
  %1245 = vperm.xlu0 %1244, %v1003
  %v1246 = vpop.permute.xlu0 %1245
  %1249 = vset.pattern.permute.xlu0 0
  %1250 = vperm.xlu0 %1249, %v1004
  %v1251 = vpop.permute.xlu0 %1250
  %1254 = vset.pattern.permute.xlu0 0
  %1255 = vperm.xlu0 %1254, %v1005
  %v1256 = vpop.permute.xlu0 %1255
  %1259 = vset.pattern.permute.xlu0 0
  %1260 = vperm.xlu0 %1259, %v1006
  %v1261 = vpop.permute.xlu0 %1260
  %v1263 = vsub.f32 %v316, %v1106
  %v1264 = vsub.f32 %v429, %v1106
  %v1265 = vsub.f32 %v319, %v1111
  %v1266 = vsub.f32 %v432, %v1111
  %v1267 = vsub.f32 %v322, %v1116
  %v1268 = vsub.f32 %v435, %v1116
  %v1269 = vsub.f32 %v325, %v1121
  %v1270 = vsub.f32 %v438, %v1121
  %v1271 = vsub.f32 %v328, %v1126
  %v1272 = vsub.f32 %v441, %v1126
  %v1273 = vsub.f32 %v331, %v1131
  %v1274 = vsub.f32 %v444, %v1131
  %v1275 = vsub.f32 %v334, %v1136
  %v1276 = vsub.f32 %v447, %v1136
  %v1277 = vsub.f32 %v337, %v1141
  %v1278 = vsub.f32 %v450, %v1141
  %v1279 = vsub.f32 %v340, %v1146
  %v1280 = vsub.f32 %v453, %v1146
  %v1281 = vsub.f32 %v343, %v1151
  %v1282 = vsub.f32 %v456, %v1151
  %v1283 = vsub.f32 %v346, %v1156
  %v1284 = vsub.f32 %v459, %v1156
  %v1285 = vsub.f32 %v349, %v1161
  %v1286 = vsub.f32 %v462, %v1161
  %v1287 = vsub.f32 %v352, %v1166
  %v1288 = vsub.f32 %v465, %v1166
  %v1289 = vsub.f32 %v355, %v1171
  %v1290 = vsub.f32 %v468, %v1171
  %v1291 = vsub.f32 %v358, %v1176
  %v1292 = vsub.f32 %v471, %v1176
  %v1293 = vsub.f32 %v361, %v1181
  %v1294 = vsub.f32 %v474, %v1181
  %v1295 = vsub.f32 %v364, %v1186
  %v1296 = vsub.f32 %v477, %v1186
  %v1297 = vsub.f32 %v367, %v1191
  %v1298 = vsub.f32 %v480, %v1191
  %v1299 = vsub.f32 %v370, %v1196
  %v1300 = vsub.f32 %v483, %v1196
  %v1301 = vsub.f32 %v373, %v1201
  %v1302 = vsub.f32 %v486, %v1201
  %v1303 = vsub.f32 %v376, %v1206
  %v1304 = vsub.f32 %v489, %v1206
  %v1305 = vsub.f32 %v379, %v1211
  %v1306 = vsub.f32 %v492, %v1211
  %v1307 = vsub.f32 %v382, %v1216
  %v1308 = vsub.f32 %v495, %v1216
  %v1309 = vsub.f32 %v385, %v1221
  %v1310 = vsub.f32 %v498, %v1221
  %v1311 = vsub.f32 %v388, %v1226
  %v1312 = vsub.f32 %v501, %v1226
  %v1313 = vsub.f32 %v391, %v1231
  %v1314 = vsub.f32 %v504, %v1231
  %v1315 = vsub.f32 %v394, %v1236
  %v1316 = vsub.f32 %v507, %v1236
  %v1317 = vsub.f32 %v397, %v1241
  %v1318 = vsub.f32 %v510, %v1241
  %v1319 = vsub.f32 %v400, %v1246
  %v1320 = vsub.f32 %v513, %v1246
  %v1321 = vsub.f32 %v403, %v1251
  %v1322 = vsub.f32 %v516, %v1251
  %v1323 = vsub.f32 %v406, %v1256
  %v1324 = vsub.f32 %v519, %v1256
  %v1325 = vsub.f32 %v409, %v1261
  %v1326 = vsub.f32 %v522, %v1261
  %v1327 = vmul.f32 %v1263, 1.442695
  %v1328 = vpow.pop %v1327
  %v1329 = vmul.f32 %v1264, 1.442695
  %v1330 = vpow.pop %v1329
  %v1331 = vmul.f32 %v1265, 1.442695
  %v1332 = vpow.pop %v1331
  %v1333 = vmul.f32 %v1266, 1.442695
  %v1334 = vpow.pop %v1333
  %v1335 = vmul.f32 %v1267, 1.442695
  %v1336 = vpow.pop %v1335
  %v1337 = vmul.f32 %v1268, 1.442695
  %v1338 = vpow.pop %v1337
  %v1339 = vmul.f32 %v1269, 1.442695
  %v1340 = vpow.pop %v1339
  %v1341 = vmul.f32 %v1270, 1.442695
  %v1342 = vpow.pop %v1341
  %v1343 = vmul.f32 %v1271, 1.442695
  %v1344 = vpow.pop %v1343
  %v1345 = vmul.f32 %v1272, 1.442695
  %v1346 = vpow.pop %v1345
  %v1347 = vmul.f32 %v1273, 1.442695
  %v1348 = vpow.pop %v1347
  %v1349 = vmul.f32 %v1274, 1.442695
  %v1350 = vpow.pop %v1349
  %v1351 = vmul.f32 %v1275, 1.442695
  %v1352 = vpow.pop %v1351
  %v1353 = vmul.f32 %v1276, 1.442695
  %v1354 = vpow.pop %v1353
  %v1355 = vmul.f32 %v1277, 1.442695
  %v1356 = vpow.pop %v1355
  %v1357 = vmul.f32 %v1278, 1.442695
  %v1358 = vpow.pop %v1357
  %v1359 = vmul.f32 %v1279, 1.442695
  %v1360 = vpow.pop %v1359
  %v1361 = vmul.f32 %v1280, 1.442695
  %v1362 = vpow.pop %v1361
  %v1363 = vmul.f32 %v1281, 1.442695
  %v1364 = vpow.pop %v1363
  %v1365 = vmul.f32 %v1282, 1.442695
  %v1366 = vpow.pop %v1365
  %v1367 = vmul.f32 %v1283, 1.442695
  %v1368 = vpow.pop %v1367
  %v1369 = vmul.f32 %v1284, 1.442695
  %v1370 = vpow.pop %v1369
  %v1371 = vmul.f32 %v1285, 1.442695
  %v1372 = vpow.pop %v1371
  %v1373 = vmul.f32 %v1286, 1.442695
  %v1374 = vpow.pop %v1373
  %v1375 = vmul.f32 %v1287, 1.442695
  %v1376 = vpow.pop %v1375
  %v1377 = vmul.f32 %v1288, 1.442695
  %v1378 = vpow.pop %v1377
  %v1379 = vmul.f32 %v1289, 1.442695
  %v1380 = vpow.pop %v1379
  %v1381 = vmul.f32 %v1290, 1.442695
  %v1382 = vpow.pop %v1381
  %v1383 = vmul.f32 %v1291, 1.442695
  %v1384 = vpow.pop %v1383
  %v1385 = vmul.f32 %v1292, 1.442695
  %v1386 = vpow.pop %v1385
  %v1387 = vmul.f32 %v1293, 1.442695
  %v1388 = vpow.pop %v1387
  %v1389 = vmul.f32 %v1294, 1.442695
  %v1390 = vpow.pop %v1389
  %v1391 = vmul.f32 %v1295, 1.442695
  %v1392 = vpow.pop %v1391
  %v1393 = vmul.f32 %v1296, 1.442695
  %v1394 = vpow.pop %v1393
  %v1395 = vmul.f32 %v1297, 1.442695
  %v1396 = vpow.pop %v1395
  %v1397 = vmul.f32 %v1298, 1.442695
  %v1398 = vpow.pop %v1397
  %v1399 = vmul.f32 %v1299, 1.442695
  %v1400 = vpow.pop %v1399
  %v1401 = vmul.f32 %v1300, 1.442695
  %v1402 = vpow.pop %v1401
  %v1403 = vmul.f32 %v1301, 1.442695
  %v1404 = vpow.pop %v1403
  %v1405 = vmul.f32 %v1302, 1.442695
  %v1406 = vpow.pop %v1405
  %v1407 = vmul.f32 %v1303, 1.442695
  %v1408 = vpow.pop %v1407
  %v1409 = vmul.f32 %v1304, 1.442695
  %v1410 = vpow.pop %v1409
  %v1411 = vmul.f32 %v1305, 1.442695
  %v1412 = vpow.pop %v1411
  %v1413 = vmul.f32 %v1306, 1.442695
  %v1414 = vpow.pop %v1413
  %v1415 = vmul.f32 %v1307, 1.442695
  %v1416 = vpow.pop %v1415
  %v1417 = vmul.f32 %v1308, 1.442695
  %v1418 = vpow.pop %v1417
  %v1419 = vmul.f32 %v1309, 1.442695
  %v1420 = vpow.pop %v1419
  %v1421 = vmul.f32 %v1310, 1.442695
  %v1422 = vpow.pop %v1421
  %v1423 = vmul.f32 %v1311, 1.442695
  %v1424 = vpow.pop %v1423
  %v1425 = vmul.f32 %v1312, 1.442695
  %v1426 = vpow.pop %v1425
  %v1427 = vmul.f32 %v1313, 1.442695
  %v1428 = vpow.pop %v1427
  %v1429 = vmul.f32 %v1314, 1.442695
  %v1430 = vpow.pop %v1429
  %v1431 = vmul.f32 %v1315, 1.442695
  %v1432 = vpow.pop %v1431
  %v1433 = vmul.f32 %v1316, 1.442695
  %v1434 = vpow.pop %v1433
  %v1435 = vmul.f32 %v1317, 1.442695
  %v1436 = vpow.pop %v1435
  %v1437 = vmul.f32 %v1318, 1.442695
  %v1438 = vpow.pop %v1437
  %v1439 = vmul.f32 %v1319, 1.442695
  %v1440 = vpow.pop %v1439
  %v1441 = vmul.f32 %v1320, 1.442695
  %v1442 = vpow.pop %v1441
  %v1443 = vmul.f32 %v1321, 1.442695
  %v1444 = vpow.pop %v1443
  %v1445 = vmul.f32 %v1322, 1.442695
  %v1446 = vpow.pop %v1445
  %v1447 = vmul.f32 %v1323, 1.442695
  %v1448 = vpow.pop %v1447
  %v1449 = vmul.f32 %v1324, 1.442695
  %v1450 = vpow.pop %v1449
  %v1451 = vmul.f32 %v1325, 1.442695
  %v1452 = vpow.pop %v1451
  %v1453 = vmul.f32 %v1326, 1.442695
  %v1454 = vpow.pop %v1453
  %v1455 = vld [vmem:[#allocation3] sm:$0xff]
  %v1456 = vld [vmem:[#allocation3 + $0x8] sm:$0xff]
  %v1457 = vld [vmem:[#allocation3 + $0x10] sm:$0xff]
  %v1458 = vld [vmem:[#allocation3 + $0x18] sm:$0xff]
  %v1459 = vld [vmem:[#allocation3 + $0x20] sm:$0xff]
  %v1460 = vld [vmem:[#allocation3 + $0x28] sm:$0xff]
  %v1461 = vld [vmem:[#allocation3 + $0x30] sm:$0xff]
  %v1462 = vld [vmem:[#allocation3 + $0x38] sm:$0xff]
  %v1463 = vld [vmem:[#allocation3 + $0x40] sm:$0xff]
  %v1464 = vld [vmem:[#allocation3 + $0x48] sm:$0xff]
  %v1465 = vld [vmem:[#allocation3 + $0x50] sm:$0xff]
  %v1466 = vld [vmem:[#allocation3 + $0x58] sm:$0xff]
  %v1467 = vld [vmem:[#allocation3 + $0x60] sm:$0xff]
  %v1468 = vld [vmem:[#allocation3 + $0x68] sm:$0xff]
  %v1469 = vld [vmem:[#allocation3 + $0x70] sm:$0xff]
  %v1470 = vld [vmem:[#allocation3 + $0x78] sm:$0xff]
  %v1471 = vld [vmem:[#allocation3 + $0x80] sm:$0xff]
  %v1472 = vld [vmem:[#allocation3 + $0x88] sm:$0xff]
  %v1473 = vld [vmem:[#allocation3 + $0x90] sm:$0xff]
  %v1474 = vld [vmem:[#allocation3 + $0x98] sm:$0xff]
  %v1475 = vld [vmem:[#allocation3 + $0xa0] sm:$0xff]
  %v1476 = vld [vmem:[#allocation3 + $0xa8] sm:$0xff]
  %v1477 = vld [vmem:[#allocation3 + $0xb0] sm:$0xff]
  %v1478 = vld [vmem:[#allocation3 + $0xb8] sm:$0xff]
  %v1479 = vld [vmem:[#allocation3 + $0xc0] sm:$0xff]
  %v1480 = vld [vmem:[#allocation3 + $0xc8] sm:$0xff]
  %v1481 = vld [vmem:[#allocation3 + $0xd0] sm:$0xff]
  %v1482 = vld [vmem:[#allocation3 + $0xd8] sm:$0xff]
  %v1483 = vld [vmem:[#allocation3 + $0xe0] sm:$0xff]
  %v1484 = vld [vmem:[#allocation3 + $0xe8] sm:$0xff]
  %v1485 = vld [vmem:[#allocation3 + $0xf0] sm:$0xff]
  %v1486 = vld [vmem:[#allocation3 + $0xf8] sm:$0xff]
  %v1487 = vmul.f32 %v1040, %v1455
  %v1488 = vmul.f32 %v1042, %v1456
  %v1489 = vmul.f32 %v1044, %v1457
  %v1490 = vmul.f32 %v1046, %v1458
  %v1491 = vmul.f32 %v1048, %v1459
  %v1492 = vmul.f32 %v1050, %v1460
  %v1493 = vmul.f32 %v1052, %v1461
  %v1494 = vmul.f32 %v1054, %v1462
  %v1495 = vmul.f32 %v1056, %v1463
  %v1496 = vmul.f32 %v1058, %v1464
  %v1497 = vmul.f32 %v1060, %v1465
  %v1498 = vmul.f32 %v1062, %v1466
  %v1499 = vmul.f32 %v1064, %v1467
  %v1500 = vmul.f32 %v1066, %v1468
  %v1501 = vmul.f32 %v1068, %v1469
  %v1502 = vmul.f32 %v1070, %v1470
  %v1503 = vmul.f32 %v1072, %v1471
  %v1504 = vmul.f32 %v1074, %v1472
  %v1505 = vmul.f32 %v1076, %v1473
  %v1506 = vmul.f32 %v1078, %v1474
  %v1507 = vmul.f32 %v1080, %v1475
  %v1508 = vmul.f32 %v1082, %v1476
  %v1509 = vmul.f32 %v1084, %v1477
  %v1510 = vmul.f32 %v1086, %v1478
  %v1511 = vmul.f32 %v1088, %v1479
  %v1512 = vmul.f32 %v1090, %v1480
  %v1513 = vmul.f32 %v1092, %v1481
  %v1514 = vmul.f32 %v1094, %v1482
  %v1515 = vmul.f32 %v1096, %v1483
  %v1516 = vmul.f32 %v1098, %v1484
  %v1517 = vmul.f32 %v1100, %v1485
  %v1518 = vmul.f32 %v1102, %v1486
  %v1519 = vadd.f32 %v1328, %v1330
  %1520 = vadd.xlane.f32.xlu0 %v1519
  %v1521 = vpop.xlane.xlu0 %1520
  %v1522 = vadd.f32 %v1332, %v1334
  %1523 = vadd.xlane.f32.xlu0 %v1522
  %v1524 = vpop.xlane.xlu0 %1523
  %v1525 = vadd.f32 %v1336, %v1338
  %1526 = vadd.xlane.f32.xlu0 %v1525
  %v1527 = vpop.xlane.xlu0 %1526
  %v1528 = vadd.f32 %v1340, %v1342
  %1529 = vadd.xlane.f32.xlu0 %v1528
  %v1530 = vpop.xlane.xlu0 %1529
  %v1531 = vadd.f32 %v1344, %v1346
  %1532 = vadd.xlane.f32.xlu0 %v1531
  %v1533 = vpop.xlane.xlu0 %1532
  %v1534 = vadd.f32 %v1348, %v1350
  %1535 = vadd.xlane.f32.xlu0 %v1534
  %v1536 = vpop.xlane.xlu0 %1535
  %v1537 = vadd.f32 %v1352, %v1354
  %1538 = vadd.xlane.f32.xlu0 %v1537
  %v1539 = vpop.xlane.xlu0 %1538
  %v1540 = vadd.f32 %v1356, %v1358
  %1541 = vadd.xlane.f32.xlu0 %v1540
  %v1542 = vpop.xlane.xlu0 %1541
  %v1543 = vadd.f32 %v1360, %v1362
  %1544 = vadd.xlane.f32.xlu0 %v1543
  %v1545 = vpop.xlane.xlu0 %1544
  %v1546 = vadd.f32 %v1364, %v1366
  %1547 = vadd.xlane.f32.xlu0 %v1546
  %v1548 = vpop.xlane.xlu0 %1547
  %v1549 = vadd.f32 %v1368, %v1370
  %1550 = vadd.xlane.f32.xlu0 %v1549
  %v1551 = vpop.xlane.xlu0 %1550
  %v1552 = vadd.f32 %v1372, %v1374
  %1553 = vadd.xlane.f32.xlu0 %v1552
  %v1554 = vpop.xlane.xlu0 %1553
  %v1555 = vadd.f32 %v1376, %v1378
  %1556 = vadd.xlane.f32.xlu0 %v1555
  %v1557 = vpop.xlane.xlu0 %1556
  %v1558 = vadd.f32 %v1380, %v1382
  %1559 = vadd.xlane.f32.xlu0 %v1558
  %v1560 = vpop.xlane.xlu0 %1559
  %v1561 = vadd.f32 %v1384, %v1386
  %1562 = vadd.xlane.f32.xlu0 %v1561
  %v1563 = vpop.xlane.xlu0 %1562
  %v1564 = vadd.f32 %v1388, %v1390
  %1565 = vadd.xlane.f32.xlu0 %v1564
  %v1566 = vpop.xlane.xlu0 %1565
  %v1567 = vadd.f32 %v1392, %v1394
  %1568 = vadd.xlane.f32.xlu0 %v1567
  %v1569 = vpop.xlane.xlu0 %1568
  %v1570 = vadd.f32 %v1396, %v1398
  %1571 = vadd.xlane.f32.xlu0 %v1570
  %v1572 = vpop.xlane.xlu0 %1571
  %v1573 = vadd.f32 %v1400, %v1402
  %1574 = vadd.xlane.f32.xlu0 %v1573
  %v1575 = vpop.xlane.xlu0 %1574
  %v1576 = vadd.f32 %v1404, %v1406
  %1577 = vadd.xlane.f32.xlu0 %v1576
  %v1578 = vpop.xlane.xlu0 %1577
  %v1579 = vadd.f32 %v1408, %v1410
  %1580 = vadd.xlane.f32.xlu0 %v1579
  %v1581 = vpop.xlane.xlu0 %1580
  %v1582 = vadd.f32 %v1412, %v1414
  %1583 = vadd.xlane.f32.xlu0 %v1582
  %v1584 = vpop.xlane.xlu0 %1583
  %v1585 = vadd.f32 %v1416, %v1418
  %1586 = vadd.xlane.f32.xlu0 %v1585
  %v1587 = vpop.xlane.xlu0 %1586
  %v1588 = vadd.f32 %v1420, %v1422
  %1589 = vadd.xlane.f32.xlu0 %v1588
  %v1590 = vpop.xlane.xlu0 %1589
  %v1591 = vadd.f32 %v1424, %v1426
  %1592 = vadd.xlane.f32.xlu0 %v1591
  %v1593 = vpop.xlane.xlu0 %1592
  %v1594 = vadd.f32 %v1428, %v1430
  %1595 = vadd.xlane.f32.xlu0 %v1594
  %v1596 = vpop.xlane.xlu0 %1595
  %v1597 = vadd.f32 %v1432, %v1434
  %1598 = vadd.xlane.f32.xlu0 %v1597
  %v1599 = vpop.xlane.xlu0 %1598
  %v1600 = vadd.f32 %v1436, %v1438
  %1601 = vadd.xlane.f32.xlu0 %v1600
  %v1602 = vpop.xlane.xlu0 %1601
  %v1603 = vadd.f32 %v1440, %v1442
  %1604 = vadd.xlane.f32.xlu0 %v1603
  %v1605 = vpop.xlane.xlu0 %1604
  %v1606 = vadd.f32 %v1444, %v1446
  %1607 = vadd.xlane.f32.xlu0 %v1606
  %v1608 = vpop.xlane.xlu0 %1607
  %v1609 = vadd.f32 %v1448, %v1450
  %1610 = vadd.xlane.f32.xlu0 %v1609
  %v1611 = vpop.xlane.xlu0 %1610
  %v1612 = vadd.f32 %v1452, %v1454
  %1613 = vadd.xlane.f32.xlu0 %v1612
  %v1614 = vpop.xlane.xlu0 %1613
  %v1615 = vadd.f32 %v1487, %v1521
  %v1616 = vadd.f32 %v1488, %v1524
  %v1617 = vadd.f32 %v1489, %v1527
  %v1618 = vadd.f32 %v1490, %v1530
  %v1619 = vadd.f32 %v1491, %v1533
  %v1620 = vadd.f32 %v1492, %v1536
  %v1621 = vadd.f32 %v1493, %v1539
  %v1622 = vadd.f32 %v1494, %v1542
  %v1623 = vadd.f32 %v1495, %v1545
  %v1624 = vadd.f32 %v1496, %v1548
  %v1625 = vadd.f32 %v1497, %v1551
  %v1626 = vadd.f32 %v1498, %v1554
  %v1627 = vadd.f32 %v1499, %v1557
  %v1628 = vadd.f32 %v1500, %v1560
  %v1629 = vadd.f32 %v1501, %v1563
  %v1630 = vadd.f32 %v1502, %v1566
  %v1631 = vadd.f32 %v1503, %v1569
  %v1632 = vadd.f32 %v1504, %v1572
  %v1633 = vadd.f32 %v1505, %v1575
  %v1634 = vadd.f32 %v1506, %v1578
  %v1635 = vadd.f32 %v1507, %v1581
  %v1636 = vadd.f32 %v1508, %v1584
  %v1637 = vadd.f32 %v1509, %v1587
  %v1638 = vadd.f32 %v1510, %v1590
  %v1639 = vadd.f32 %v1511, %v1593
  %v1640 = vadd.f32 %v1512, %v1596
  %v1641 = vadd.f32 %v1513, %v1599
  %v1642 = vadd.f32 %v1514, %v1602
  %v1643 = vadd.f32 %v1515, %v1605
  %v1644 = vadd.f32 %v1516, %v1608
  %v1645 = vadd.f32 %v1517, %v1611
  %v1646 = vadd.f32 %v1518, %v1614
  %vm1647 = vcmask 7168
  %1648 = vst.msk [vmem:[#allocation3] sm:$0xff] %vm1647, %v1615
  %1649 = vst.msk [vmem:[#allocation3 + $0x8] sm:$0xff] %vm1647, %v1616
  %1650 = vst.msk [vmem:[#allocation3 + $0x10] sm:$0xff] %vm1647, %v1617
  %1651 = vst.msk [vmem:[#allocation3 + $0x18] sm:$0xff] %vm1647, %v1618
  %1652 = vst.msk [vmem:[#allocation3 + $0x20] sm:$0xff] %vm1647, %v1619
  %1653 = vst.msk [vmem:[#allocation3 + $0x28] sm:$0xff] %vm1647, %v1620
  %1654 = vst.msk [vmem:[#allocation3 + $0x30] sm:$0xff] %vm1647, %v1621
  %1655 = vst.msk [vmem:[#allocation3 + $0x38] sm:$0xff] %vm1647, %v1622
  %1656 = vst.msk [vmem:[#allocation3 + $0x40] sm:$0xff] %vm1647, %v1623
  %1657 = vst.msk [vmem:[#allocation3 + $0x48] sm:$0xff] %vm1647, %v1624
  %1658 = vst.msk [vmem:[#allocation3 + $0x50] sm:$0xff] %vm1647, %v1625
  %1659 = vst.msk [vmem:[#allocation3 + $0x58] sm:$0xff] %vm1647, %v1626
  %1660 = vst.msk [vmem:[#allocation3 + $0x60] sm:$0xff] %vm1647, %v1627
  %1661 = vst.msk [vmem:[#allocation3 + $0x68] sm:$0xff] %vm1647, %v1628
  %1662 = vst.msk [vmem:[#allocation3 + $0x70] sm:$0xff] %vm1647, %v1629
  %1663 = vst.msk [vmem:[#allocation3 + $0x78] sm:$0xff] %vm1647, %v1630
  %1664 = vst.msk [vmem:[#allocation3 + $0x80] sm:$0xff] %vm1647, %v1631
  %1665 = vst.msk [vmem:[#allocation3 + $0x88] sm:$0xff] %vm1647, %v1632
  %1666 = vst.msk [vmem:[#allocation3 + $0x90] sm:$0xff] %vm1647, %v1633
  %1667 = vst.msk [vmem:[#allocation3 + $0x98] sm:$0xff] %vm1647, %v1634
  %1668 = vst.msk [vmem:[#allocation3 + $0xa0] sm:$0xff] %vm1647, %v1635
  %1669 = vst.msk [vmem:[#allocation3 + $0xa8] sm:$0xff] %vm1647, %v1636
  %1670 = vst.msk [vmem:[#allocation3 + $0xb0] sm:$0xff] %vm1647, %v1637
  %1671 = vst.msk [vmem:[#allocation3 + $0xb8] sm:$0xff] %vm1647, %v1638
  %1672 = vst.msk [vmem:[#allocation3 + $0xc0] sm:$0xff] %vm1647, %v1639
  %1673 = vst.msk [vmem:[#allocation3 + $0xc8] sm:$0xff] %vm1647, %v1640
  %1674 = vst.msk [vmem:[#allocation3 + $0xd0] sm:$0xff] %vm1647, %v1641
  %1675 = vst.msk [vmem:[#allocation3 + $0xd8] sm:$0xff] %vm1647, %v1642
  %1676 = vst.msk [vmem:[#allocation3 + $0xe0] sm:$0xff] %vm1647, %v1643
  %1677 = vst.msk [vmem:[#allocation3 + $0xe8] sm:$0xff] %vm1647, %v1644
  %1678 = vst.msk [vmem:[#allocation3 + $0xf0] sm:$0xff] %vm1647, %v1645
  %1679 = vst.msk [vmem:[#allocation3 + $0xf8] sm:$0xff] %vm1647, %v1646
  %1680 = vst.msk [vmem:[#allocation2] sm:$0xff] %vm1647, %v975
  %1681 = vst.msk [vmem:[#allocation2 + $0x8] sm:$0xff] %vm1647, %v976
  %1682 = vst.msk [vmem:[#allocation2 + $0x10] sm:$0xff] %vm1647, %v977
  %1683 = vst.msk [vmem:[#allocation2 + $0x18] sm:$0xff] %vm1647, %v978
  %1684 = vst.msk [vmem:[#allocation2 + $0x20] sm:$0xff] %vm1647, %v979
  %1685 = vst.msk [vmem:[#allocation2 + $0x28] sm:$0xff] %vm1647, %v980
  %1686 = vst.msk [vmem:[#allocation2 + $0x30] sm:$0xff] %vm1647, %v981
  %1687 = vst.msk [vmem:[#allocation2 + $0x38] sm:$0xff] %vm1647, %v982
  %1688 = vst.msk [vmem:[#allocation2 + $0x40] sm:$0xff] %vm1647, %v983
  %1689 = vst.msk [vmem:[#allocation2 + $0x48] sm:$0xff] %vm1647, %v984
  %1690 = vst.msk [vmem:[#allocation2 + $0x50] sm:$0xff] %vm1647, %v985
  %1691 = vst.msk [vmem:[#allocation2 + $0x58] sm:$0xff] %vm1647, %v986
  %1692 = vst.msk [vmem:[#allocation2 + $0x60] sm:$0xff] %vm1647, %v987
  %1693 = vst.msk [vmem:[#allocation2 + $0x68] sm:$0xff] %vm1647, %v988
  %1694 = vst.msk [vmem:[#allocation2 + $0x70] sm:$0xff] %vm1647, %v989
  %1695 = vst.msk [vmem:[#allocation2 + $0x78] sm:$0xff] %vm1647, %v990
  %1696 = vst.msk [vmem:[#allocation2 + $0x80] sm:$0xff] %vm1647, %v991
  %1697 = vst.msk [vmem:[#allocation2 + $0x88] sm:$0xff] %vm1647, %v992
  %1698 = vst.msk [vmem:[#allocation2 + $0x90] sm:$0xff] %vm1647, %v993
  %1699 = vst.msk [vmem:[#allocation2 + $0x98] sm:$0xff] %vm1647, %v994
  %1700 = vst.msk [vmem:[#allocation2 + $0xa0] sm:$0xff] %vm1647, %v995
  %1701 = vst.msk [vmem:[#allocation2 + $0xa8] sm:$0xff] %vm1647, %v996
  %1702 = vst.msk [vmem:[#allocation2 + $0xb0] sm:$0xff] %vm1647, %v997
  %1703 = vst.msk [vmem:[#allocation2 + $0xb8] sm:$0xff] %vm1647, %v998
  %1704 = vst.msk [vmem:[#allocation2 + $0xc0] sm:$0xff] %vm1647, %v999
  %1705 = vst.msk [vmem:[#allocation2 + $0xc8] sm:$0xff] %vm1647, %v1000
  %1706 = vst.msk [vmem:[#allocation2 + $0xd0] sm:$0xff] %vm1647, %v1001
  %1707 = vst.msk [vmem:[#allocation2 + $0xd8] sm:$0xff] %vm1647, %v1002
  %1708 = vst.msk [vmem:[#allocation2 + $0xe0] sm:$0xff] %vm1647, %v1003
  %1709 = vst.msk [vmem:[#allocation2 + $0xe8] sm:$0xff] %vm1647, %v1004
  %1710 = vst.msk [vmem:[#allocation2 + $0xf0] sm:$0xff] %vm1647, %v1005
  %1711 = vst.msk [vmem:[#allocation2 + $0xf8] sm:$0xff] %vm1647, %v1006
  %v1712 = vld [vmem:[#allocation4] sm:$0xff]
  %v1713 = vld [vmem:[#allocation4 + $0x8] sm:$0xff]
  %v1714 = vld [vmem:[#allocation4 + $0x10] sm:$0xff]
  %v1715 = vld [vmem:[#allocation4 + $0x18] sm:$0xff]
  %v1716 = vld [vmem:[#allocation4 + $0x20] sm:$0xff]
  %v1717 = vld [vmem:[#allocation4 + $0x28] sm:$0xff]
  %v1718 = vld [vmem:[#allocation4 + $0x30] sm:$0xff]
  %v1719 = vld [vmem:[#allocation4 + $0x38] sm:$0xff]
  %v1720 = vld [vmem:[#allocation4 + $0x40] sm:$0xff]
  %v1721 = vld [vmem:[#allocation4 + $0x48] sm:$0xff]
  %v1722 = vld [vmem:[#allocation4 + $0x50] sm:$0xff]
  %v1723 = vld [vmem:[#allocation4 + $0x58] sm:$0xff]
  %v1724 = vld [vmem:[#allocation4 + $0x60] sm:$0xff]
  %v1725 = vld [vmem:[#allocation4 + $0x68] sm:$0xff]
  %v1726 = vld [vmem:[#allocation4 + $0x70] sm:$0xff]
  %v1727 = vld [vmem:[#allocation4 + $0x78] sm:$0xff]
  %v1728 = vld [vmem:[#allocation4 + $0x80] sm:$0xff]
  %v1729 = vld [vmem:[#allocation4 + $0x88] sm:$0xff]
  %v1730 = vld [vmem:[#allocation4 + $0x90] sm:$0xff]
  %v1731 = vld [vmem:[#allocation4 + $0x98] sm:$0xff]
  %v1732 = vld [vmem:[#allocation4 + $0xa0] sm:$0xff]
  %v1733 = vld [vmem:[#allocation4 + $0xa8] sm:$0xff]
  %v1734 = vld [vmem:[#allocation4 + $0xb0] sm:$0xff]
  %v1735 = vld [vmem:[#allocation4 + $0xb8] sm:$0xff]
  %v1736 = vld [vmem:[#allocation4 + $0xc0] sm:$0xff]
  %v1737 = vld [vmem:[#allocation4 + $0xc8] sm:$0xff]
  %v1738 = vld [vmem:[#allocation4 + $0xd0] sm:$0xff]
  %v1739 = vld [vmem:[#allocation4 + $0xd8] sm:$0xff]
  %v1740 = vld [vmem:[#allocation4 + $0xe0] sm:$0xff]
  %v1741 = vld [vmem:[#allocation4 + $0xe8] sm:$0xff]
  %v1742 = vld [vmem:[#allocation4 + $0xf0] sm:$0xff]
  %v1743 = vld [vmem:[#allocation4 + $0xf8] sm:$0xff]
  %v1744 = vmul.f32 %v316, %v783
  %v1745 = vmul.f32 %v429, %v784
  %v1746 = vmul.f32 %v319, %v785
  %v1747 = vmul.f32 %v432, %v786
  %v1748 = vmul.f32 %v322, %v787
  %v1749 = vmul.f32 %v435, %v788
  %v1750 = vmul.f32 %v325, %v789
  %v1751 = vmul.f32 %v438, %v790
  %v1752 = vmul.f32 %v328, %v791
  %v1753 = vmul.f32 %v441, %v792
  %v1754 = vmul.f32 %v331, %v793
  %v1755 = vmul.f32 %v444, %v794
  %v1756 = vmul.f32 %v334, %v795
  %v1757 = vmul.f32 %v447, %v796
  %v1758 = vmul.f32 %v337, %v797
  %v1759 = vmul.f32 %v450, %v798
  %v1760 = vmul.f32 %v340, %v799
  %v1761 = vmul.f32 %v453, %v800
  %v1762 = vmul.f32 %v343, %v801
  %v1763 = vmul.f32 %v456, %v802
  %v1764 = vmul.f32 %v346, %v803
  %v1765 = vmul.f32 %v459, %v804
  %v1766 = vmul.f32 %v349, %v805
  %v1767 = vmul.f32 %v462, %v806
  %v1768 = vmul.f32 %v352, %v807
  %v1769 = vmul.f32 %v465, %v808
  %v1770 = vmul.f32 %v355, %v809
  %v1771 = vmul.f32 %v468, %v810
  %v1772 = vmul.f32 %v358, %v811
  %v1773 = vmul.f32 %v471, %v812
  %v1774 = vmul.f32 %v361, %v813
  %v1775 = vmul.f32 %v474, %v814
  %v1776 = vmul.f32 %v364, %v815
  %v1777 = vmul.f32 %v477, %v816
  %v1778 = vmul.f32 %v367, %v817
  %v1779 = vmul.f32 %v480, %v818
  %v1780 = vmul.f32 %v370, %v819
  %v1781 = vmul.f32 %v483, %v820
  %v1782 = vmul.f32 %v373, %v821
  %v1783 = vmul.f32 %v486, %v822
  %v1784 = vmul.f32 %v376, %v823
  %v1785 = vmul.f32 %v489, %v824
  %v1786 = vmul.f32 %v379, %v825
  %v1787 = vmul.f32 %v492, %v826
  %v1788 = vmul.f32 %v382, %v827
  %v1789 = vmul.f32 %v495, %v828
  %v1790 = vmul.f32 %v385, %v829
  %v1791 = vmul.f32 %v498, %v830
  %v1792 = vmul.f32 %v388, %v831
  %v1793 = vmul.f32 %v501, %v832
  %v1794 = vmul.f32 %v391, %v833
  %v1795 = vmul.f32 %v504, %v834
  %v1796 = vmul.f32 %v394, %v835
  %v1797 = vmul.f32 %v507, %v836
  %v1798 = vmul.f32 %v397, %v837
  %v1799 = vmul.f32 %v510, %v838
  %v1800 = vmul.f32 %v400, %v839
  %v1801 = vmul.f32 %v513, %v840
  %v1802 = vmul.f32 %v403, %v841
  %v1803 = vmul.f32 %v516, %v842
  %v1804 = vmul.f32 %v406, %v843
  %v1805 = vmul.f32 %v519, %v844
  %v1806 = vmul.f32 %v409, %v845
  %v1807 = vmul.f32 %v522, %v846
  %v1808 = vadd.f32 %v1744, %v1745
  %1809 = vadd.xlane.f32.xlu0 %v1808
  %v1810 = vpop.xlane.xlu0 %1809
  %v1811 = vadd.f32 %v1746, %v1747
  %1812 = vadd.xlane.f32.xlu0 %v1811
  %v1813 = vpop.xlane.xlu0 %1812
  %v1814 = vadd.f32 %v1748, %v1749
  %1815 = vadd.xlane.f32.xlu0 %v1814
  %v1816 = vpop.xlane.xlu0 %1815
  %v1817 = vadd.f32 %v1750, %v1751
  %1818 = vadd.xlane.f32.xlu0 %v1817
  %v1819 = vpop.xlane.xlu0 %1818
  %v1820 = vadd.f32 %v1752, %v1753
  %1821 = vadd.xlane.f32.xlu0 %v1820
  %v1822 = vpop.xlane.xlu0 %1821
  %v1823 = vadd.f32 %v1754, %v1755
  %1824 = vadd.xlane.f32.xlu0 %v1823
  %v1825 = vpop.xlane.xlu0 %1824
  %v1826 = vadd.f32 %v1756, %v1757
  %1827 = vadd.xlane.f32.xlu0 %v1826
  %v1828 = vpop.xlane.xlu0 %1827
  %v1829 = vadd.f32 %v1758, %v1759
  %1830 = vadd.xlane.f32.xlu0 %v1829
  %v1831 = vpop.xlane.xlu0 %1830
  %v1832 = vadd.f32 %v1760, %v1761
  %1833 = vadd.xlane.f32.xlu0 %v1832
  %v1834 = vpop.xlane.xlu0 %1833
  %v1835 = vadd.f32 %v1762, %v1763
  %1836 = vadd.xlane.f32.xlu0 %v1835
  %v1837 = vpop.xlane.xlu0 %1836
  %v1838 = vadd.f32 %v1764, %v1765
  %1839 = vadd.xlane.f32.xlu0 %v1838
  %v1840 = vpop.xlane.xlu0 %1839
  %v1841 = vadd.f32 %v1766, %v1767
  %1842 = vadd.xlane.f32.xlu0 %v1841
  %v1843 = vpop.xlane.xlu0 %1842
  %v1844 = vadd.f32 %v1768, %v1769
  %1845 = vadd.xlane.f32.xlu0 %v1844
  %v1846 = vpop.xlane.xlu0 %1845
  %v1847 = vadd.f32 %v1770, %v1771
  %1848 = vadd.xlane.f32.xlu0 %v1847
  %v1849 = vpop.xlane.xlu0 %1848
  %v1850 = vadd.f32 %v1772, %v1773
  %1851 = vadd.xlane.f32.xlu0 %v1850
  %v1852 = vpop.xlane.xlu0 %1851
  %v1853 = vadd.f32 %v1774, %v1775
  %1854 = vadd.xlane.f32.xlu0 %v1853
  %v1855 = vpop.xlane.xlu0 %1854
  %v1856 = vadd.f32 %v1776, %v1777
  %1857 = vadd.xlane.f32.xlu0 %v1856
  %v1858 = vpop.xlane.xlu0 %1857
  %v1859 = vadd.f32 %v1778, %v1779
  %1860 = vadd.xlane.f32.xlu0 %v1859
  %v1861 = vpop.xlane.xlu0 %1860
  %v1862 = vadd.f32 %v1780, %v1781
  %1863 = vadd.xlane.f32.xlu0 %v1862
  %v1864 = vpop.xlane.xlu0 %1863
  %v1865 = vadd.f32 %v1782, %v1783
  %1866 = vadd.xlane.f32.xlu0 %v1865
  %v1867 = vpop.xlane.xlu0 %1866
  %v1868 = vadd.f32 %v1784, %v1785
  %1869 = vadd.xlane.f32.xlu0 %v1868
  %v1870 = vpop.xlane.xlu0 %1869
  %v1871 = vadd.f32 %v1786, %v1787
  %1872 = vadd.xlane.f32.xlu0 %v1871
  %v1873 = vpop.xlane.xlu0 %1872
  %v1874 = vadd.f32 %v1788, %v1789
  %1875 = vadd.xlane.f32.xlu0 %v1874
  %v1876 = vpop.xlane.xlu0 %1875
  %v1877 = vadd.f32 %v1790, %v1791
  %1878 = vadd.xlane.f32.xlu0 %v1877
  %v1879 = vpop.xlane.xlu0 %1878
  %v1880 = vadd.f32 %v1792, %v1793
  %1881 = vadd.xlane.f32.xlu0 %v1880
  %v1882 = vpop.xlane.xlu0 %1881
  %v1883 = vadd.f32 %v1794, %v1795
  %1884 = vadd.xlane.f32.xlu0 %v1883
  %v1885 = vpop.xlane.xlu0 %1884
  %v1886 = vadd.f32 %v1796, %v1797
  %1887 = vadd.xlane.f32.xlu0 %v1886
  %v1888 = vpop.xlane.xlu0 %1887
  %v1889 = vadd.f32 %v1798, %v1799
  %1890 = vadd.xlane.f32.xlu0 %v1889
  %v1891 = vpop.xlane.xlu0 %1890
  %v1892 = vadd.f32 %v1800, %v1801
  %1893 = vadd.xlane.f32.xlu0 %v1892
  %v1894 = vpop.xlane.xlu0 %1893
  %v1895 = vadd.f32 %v1802, %v1803
  %1896 = vadd.xlane.f32.xlu0 %v1895
  %v1897 = vpop.xlane.xlu0 %1896
  %v1898 = vadd.f32 %v1804, %v1805
  %1899 = vadd.xlane.f32.xlu0 %v1898
  %v1900 = vpop.xlane.xlu0 %1899
  %v1901 = vadd.f32 %v1806, %v1807
  %1902 = vadd.xlane.f32.xlu0 %v1901
  %v1903 = vpop.xlane.xlu0 %1902
  %v1904 = vadd.f32 %v1712, %v1810
  %v1905 = vadd.f32 %v1713, %v1813
  %v1906 = vadd.f32 %v1714, %v1816
  %v1907 = vadd.f32 %v1715, %v1819
  %v1908 = vadd.f32 %v1716, %v1822
  %v1909 = vadd.f32 %v1717, %v1825
  %v1910 = vadd.f32 %v1718, %v1828
  %v1911 = vadd.f32 %v1719, %v1831
  %v1912 = vadd.f32 %v1720, %v1834
  %v1913 = vadd.f32 %v1721, %v1837
  %v1914 = vadd.f32 %v1722, %v1840
  %v1915 = vadd.f32 %v1723, %v1843
  %v1916 = vadd.f32 %v1724, %v1846
  %v1917 = vadd.f32 %v1725, %v1849
  %v1918 = vadd.f32 %v1726, %v1852
  %v1919 = vadd.f32 %v1727, %v1855
  %v1920 = vadd.f32 %v1728, %v1858
  %v1921 = vadd.f32 %v1729, %v1861
  %v1922 = vadd.f32 %v1730, %v1864
  %v1923 = vadd.f32 %v1731, %v1867
  %v1924 = vadd.f32 %v1732, %v1870
  %v1925 = vadd.f32 %v1733, %v1873
  %v1926 = vadd.f32 %v1734, %v1876
  %v1927 = vadd.f32 %v1735, %v1879
  %v1928 = vadd.f32 %v1736, %v1882
  %v1929 = vadd.f32 %v1737, %v1885
  %v1930 = vadd.f32 %v1738, %v1888
  %v1931 = vadd.f32 %v1739, %v1891
  %v1932 = vadd.f32 %v1740, %v1894
  %v1933 = vadd.f32 %v1741, %v1897
  %v1934 = vadd.f32 %v1742, %v1900
  %v1935 = vadd.f32 %v1743, %v1903
  %1936 = vst.msk [vmem:[#allocation4] sm:$0xff] %vm1647, %v1904
  %1937 = vst.msk [vmem:[#allocation4 + $0x8] sm:$0xff] %vm1647, %v1905
  %1938 = vst.msk [vmem:[#allocation4 + $0x10] sm:$0xff] %vm1647, %v1906
  %1939 = vst.msk [vmem:[#allocation4 + $0x18] sm:$0xff] %vm1647, %v1907
  %1940 = vst.msk [vmem:[#allocation4 + $0x20] sm:$0xff] %vm1647, %v1908
  %1941 = vst.msk [vmem:[#allocation4 + $0x28] sm:$0xff] %vm1647, %v1909
  %1942 = vst.msk [vmem:[#allocation4 + $0x30] sm:$0xff] %vm1647, %v1910
  %1943 = vst.msk [vmem:[#allocation4 + $0x38] sm:$0xff] %vm1647, %v1911
  %1944 = vst.msk [vmem:[#allocation4 + $0x40] sm:$0xff] %vm1647, %v1912
  %1945 = vst.msk [vmem:[#allocation4 + $0x48] sm:$0xff] %vm1647, %v1913
  %1946 = vst.msk [vmem:[#allocation4 + $0x50] sm:$0xff] %vm1647, %v1914
  %1947 = vst.msk [vmem:[#allocation4 + $0x58] sm:$0xff] %vm1647, %v1915
  %1948 = vst.msk [vmem:[#allocation4 + $0x60] sm:$0xff] %vm1647, %v1916
  %1949 = vst.msk [vmem:[#allocation4 + $0x68] sm:$0xff] %vm1647, %v1917
  %1950 = vst.msk [vmem:[#allocation4 + $0x70] sm:$0xff] %vm1647, %v1918
  %1951 = vst.msk [vmem:[#allocation4 + $0x78] sm:$0xff] %vm1647, %v1919
  %1952 = vst.msk [vmem:[#allocation4 + $0x80] sm:$0xff] %vm1647, %v1920
  %1953 = vst.msk [vmem:[#allocation4 + $0x88] sm:$0xff] %vm1647, %v1921
  %1954 = vst.msk [vmem:[#allocation4 + $0x90] sm:$0xff] %vm1647, %v1922
  %1955 = vst.msk [vmem:[#allocation4 + $0x98] sm:$0xff] %vm1647, %v1923
  %1956 = vst.msk [vmem:[#allocation4 + $0xa0] sm:$0xff] %vm1647, %v1924
  %1957 = vst.msk [vmem:[#allocation4 + $0xa8] sm:$0xff] %vm1647, %v1925
  %1958 = vst.msk [vmem:[#allocation4 + $0xb0] sm:$0xff] %vm1647, %v1926
  %1959 = vst.msk [vmem:[#allocation4 + $0xb8] sm:$0xff] %vm1647, %v1927
  %1960 = vst.msk [vmem:[#allocation4 + $0xc0] sm:$0xff] %vm1647, %v1928
  %1961 = vst.msk [vmem:[#allocation4 + $0xc8] sm:$0xff] %vm1647, %v1929
  %1962 = vst.msk [vmem:[#allocation4 + $0xd0] sm:$0xff] %vm1647, %v1930
  %1963 = vst.msk [vmem:[#allocation4 + $0xd8] sm:$0xff] %vm1647, %v1931
  %1964 = vst.msk [vmem:[#allocation4 + $0xe0] sm:$0xff] %vm1647, %v1932
  %1965 = vst.msk [vmem:[#allocation4 + $0xe8] sm:$0xff] %vm1647, %v1933
  %1966 = vst.msk [vmem:[#allocation4 + $0xf0] sm:$0xff] %vm1647, %v1934
  %1967 = vst.msk [vmem:[#allocation4 + $0xf8] sm:$0xff] %vm1647, %v1935
  %s1968 = smul.u32 0, 256
  %s1969 = smul.u32 0, 256
  %s1970 = sadd.s32 %s1969, 256
  %p1971 = scmp.lt.s32.totalorder %s1968, %s1970
  %s1972 = sadd.s32 %s1968, 256
  %p1973 = scmp.lt.s32.totalorder %s1969, %s1972
  %p1974 = pnand %p1971, %p1973
  %p1975 = pneg %p1974
  // Predicated region
  $region26: #{tpu_custom_call.1} parent=0 // pred_check
    _
  $region27: #{tpu_custom_call.1} parent=0 // pred_check_branch
    %1977 = sbr.rel (%p1974) target = $region29
  $region28: #{tpu_custom_call.1} parent=0 // pred_region
    %v1978 = vlaneseq
    %v1979 = vshrl.u32 %v1978, 7
    %v1980 = vadd.s32 %v1979, 8
    %v1981 = vadd.s32 %v1979, 16
    %v1982 = vadd.s32 %v1979, 24
    %v1983 = vadd.s32 %v1979, 32
    %v1984 = vadd.s32 %v1979, 40
    %v1985 = vadd.s32 %v1979, 48
    %v1986 = vadd.s32 %v1979, 56
    %v1987 = vadd.s32 %v1979, 64
    %v1988 = vadd.s32 %v1979, 72
    %v1989 = vadd.s32 %v1979, 80
    %v1990 = vadd.s32 %v1979, 88
    %v1991 = vadd.s32 %v1979, 96
    %v1992 = vadd.s32 %v1979, 104
    %v1993 = vadd.s32 %v1979, 112
    %v1994 = vadd.s32 %v1979, 120
    %v1995 = vadd.s32 %v1979, 128
    %v1996 = vadd.s32 %v1979, 136
    %v1997 = vadd.s32 %v1979, 144
    %v1998 = vadd.s32 %v1979, 152
    %v1999 = vadd.s32 %v1979, 160
    %v2000 = vadd.s32 %v1979, 168
    %v2001 = vadd.s32 %v1979, 176
    %v2002 = vadd.s32 %v1979, 184
    %v2003 = vadd.s32 %v1979, 192
    %v2004 = vadd.s32 %v1979, 200
    %v2005 = vadd.s32 %v1979, 208
    %v2006 = vadd.s32 %v1979, 216
    %v2007 = vadd.s32 %v1979, 224
    %v2008 = vadd.s32 %v1979, 232
    %v2009 = vadd.s32 %v1979, 240
    %v2010 = vadd.s32 %v1979, 248
    %v2011 = vstv %s1968
    %v2012 = vadd.s32 %v1979, %v2011
    %v2013 = vadd.s32 %v1980, %v2011
    %v2014 = vadd.s32 %v1981, %v2011
    %v2015 = vadd.s32 %v1982, %v2011
    %v2016 = vadd.s32 %v1983, %v2011
    %v2017 = vadd.s32 %v1984, %v2011
    %v2018 = vadd.s32 %v1985, %v2011
    %v2019 = vadd.s32 %v1986, %v2011
    %v2020 = vadd.s32 %v1987, %v2011
    %v2021 = vadd.s32 %v1988, %v2011
    %v2022 = vadd.s32 %v1989, %v2011
    %v2023 = vadd.s32 %v1990, %v2011
    %v2024 = vadd.s32 %v1991, %v2011
    %v2025 = vadd.s32 %v1992, %v2011
    %v2026 = vadd.s32 %v1993, %v2011
    %v2027 = vadd.s32 %v1994, %v2011
    %v2028 = vadd.s32 %v1995, %v2011
    %v2029 = vadd.s32 %v1996, %v2011
    %v2030 = vadd.s32 %v1997, %v2011
    %v2031 = vadd.s32 %v1998, %v2011
    %v2032 = vadd.s32 %v1999, %v2011
    %v2033 = vadd.s32 %v2000, %v2011
    %v2034 = vadd.s32 %v2001, %v2011
    %v2035 = vadd.s32 %v2002, %v2011
    %v2036 = vadd.s32 %v2003, %v2011
    %v2037 = vadd.s32 %v2004, %v2011
    %v2038 = vadd.s32 %v2005, %v2011
    %v2039 = vadd.s32 %v2006, %v2011
    %v2040 = vadd.s32 %v2007, %v2011
    %v2041 = vadd.s32 %v2008, %v2011
    %v2042 = vadd.s32 %v2009, %v2011
    %v2043 = vadd.s32 %v2010, %v2011
    %v2044 = vlaneseq
    %v2045 = vand.u32 %v2044, 127
    %v2046 = vadd.s32 %v2045, 128
    %v2047 = vstv %s1969
    %v2048 = vadd.s32 %v2045, %v2047
    %v2049 = vadd.s32 %v2046, %v2047
    %v2050 = vld [vmem:[#allocation5] sm:$0xff]
    %v2051 = vld [vmem:[#allocation5 + $0x8] sm:$0xff]
    %v2052 = vld [vmem:[#allocation5 + $0x10] sm:$0xff]
    %v2053 = vld [vmem:[#allocation5 + $0x18] sm:$0xff]
    %v2054 = vld [vmem:[#allocation5 + $0x20] sm:$0xff]
    %v2055 = vld [vmem:[#allocation5 + $0x28] sm:$0xff]
    %v2056 = vld [vmem:[#allocation5 + $0x30] sm:$0xff]
    %v2057 = vld [vmem:[#allocation5 + $0x38] sm:$0xff]
    %v2058 = vld [vmem:[#allocation5 + $0x40] sm:$0xff]
    %v2059 = vld [vmem:[#allocation5 + $0x48] sm:$0xff]
    %v2060 = vld [vmem:[#allocation5 + $0x50] sm:$0xff]
    %v2061 = vld [vmem:[#allocation5 + $0x58] sm:$0xff]
    %v2062 = vld [vmem:[#allocation5 + $0x60] sm:$0xff]
    %v2063 = vld [vmem:[#allocation5 + $0x68] sm:$0xff]
    %v2064 = vld [vmem:[#allocation5 + $0x70] sm:$0xff]
    %v2065 = vld [vmem:[#allocation5 + $0x78] sm:$0xff]
    %v2066 = vld [vmem:[#allocation5 + $0x80] sm:$0xff]
    %v2067 = vld [vmem:[#allocation5 + $0x88] sm:$0xff]
    %v2068 = vld [vmem:[#allocation5 + $0x90] sm:$0xff]
    %v2069 = vld [vmem:[#allocation5 + $0x98] sm:$0xff]
    %v2070 = vld [vmem:[#allocation5 + $0xa0] sm:$0xff]
    %v2071 = vld [vmem:[#allocation5 + $0xa8] sm:$0xff]
    %v2072 = vld [vmem:[#allocation5 + $0xb0] sm:$0xff]
    %v2073 = vld [vmem:[#allocation5 + $0xb8] sm:$0xff]
    %v2074 = vld [vmem:[#allocation5 + $0xc0] sm:$0xff]
    %v2075 = vld [vmem:[#allocation5 + $0xc8] sm:$0xff]
    %v2076 = vld [vmem:[#allocation5 + $0xd0] sm:$0xff]
    %v2077 = vld [vmem:[#allocation5 + $0xd8] sm:$0xff]
    %v2078 = vld [vmem:[#allocation5 + $0xe0] sm:$0xff]
    %v2079 = vld [vmem:[#allocation5 + $0xe8] sm:$0xff]
    %v2080 = vld [vmem:[#allocation5 + $0xf0] sm:$0xff]
    %v2081 = vld [vmem:[#allocation5 + $0xf8] sm:$0xff]
    %vm2082 = vcmp.eq.s32.totalorder %v2012, %v2048
    %vm2083 = vcmp.eq.s32.totalorder %v2012, %v2049
    %vm2084 = vcmp.eq.s32.totalorder %v2013, %v2048
    %vm2085 = vcmp.eq.s32.totalorder %v2013, %v2049
    %vm2086 = vcmp.eq.s32.totalorder %v2014, %v2048
    %vm2087 = vcmp.eq.s32.totalorder %v2014, %v2049
    %vm2088 = vcmp.eq.s32.totalorder %v2015, %v2048
    %vm2089 = vcmp.eq.s32.totalorder %v2015, %v2049
    %vm2090 = vcmp.eq.s32.totalorder %v2016, %v2048
    %vm2091 = vcmp.eq.s32.totalorder %v2016, %v2049
    %vm2092 = vcmp.eq.s32.totalorder %v2017, %v2048
    %vm2093 = vcmp.eq.s32.totalorder %v2017, %v2049
    %vm2094 = vcmp.eq.s32.totalorder %v2018, %v2048
    %vm2095 = vcmp.eq.s32.totalorder %v2018, %v2049
    %vm2096 = vcmp.eq.s32.totalorder %v2019, %v2048
    %vm2097 = vcmp.eq.s32.totalorder %v2019, %v2049
    %vm2098 = vcmp.eq.s32.totalorder %v2020, %v2048
    %vm2099 = vcmp.eq.s32.totalorder %v2020, %v2049
    %vm2100 = vcmp.eq.s32.totalorder %v2021, %v2048
    %vm2101 = vcmp.eq.s32.totalorder %v2021, %v2049
    %vm2102 = vcmp.eq.s32.totalorder %v2022, %v2048
    %vm2103 = vcmp.eq.s32.totalorder %v2022, %v2049
    %vm2104 = vcmp.eq.s32.totalorder %v2023, %v2048
    %vm2105 = vcmp.eq.s32.totalorder %v2023, %v2049
    %vm2106 = vcmp.eq.s32.totalorder %v2024, %v2048
    %vm2107 = vcmp.eq.s32.totalorder %v2024, %v2049
    %vm2108 = vcmp.eq.s32.totalorder %v2025, %v2048
    %vm2109 = vcmp.eq.s32.totalorder %v2025, %v2049
    %vm2110 = vcmp.eq.s32.totalorder %v2026, %v2048
    %vm2111 = vcmp.eq.s32.totalorder %v2026, %v2049
    %vm2112 = vcmp.eq.s32.totalorder %v2027, %v2048
    %vm2113 = vcmp.eq.s32.totalorder %v2027, %v2049
    %vm2114 = vcmp.eq.s32.totalorder %v2028, %v2048
    %vm2115 = vcmp.eq.s32.totalorder %v2028, %v2049
    %vm2116 = vcmp.eq.s32.totalorder %v2029, %v2048
    %vm2117 = vcmp.eq.s32.totalorder %v2029, %v2049
    %vm2118 = vcmp.eq.s32.totalorder %v2030, %v2048
    %vm2119 = vcmp.eq.s32.totalorder %v2030, %v2049
    %vm2120 = vcmp.eq.s32.totalorder %v2031, %v2048
    %vm2121 = vcmp.eq.s32.totalorder %v2031, %v2049
    %vm2122 = vcmp.eq.s32.totalorder %v2032, %v2048
    %vm2123 = vcmp.eq.s32.totalorder %v2032, %v2049
    %vm2124 = vcmp.eq.s32.totalorder %v2033, %v2048
    %vm2125 = vcmp.eq.s32.totalorder %v2033, %v2049
    %vm2126 = vcmp.eq.s32.totalorder %v2034, %v2048
    %vm2127 = vcmp.eq.s32.totalorder %v2034, %v2049
    %vm2128 = vcmp.eq.s32.totalorder %v2035, %v2048
    %vm2129 = vcmp.eq.s32.totalorder %v2035, %v2049
    %vm2130 = vcmp.eq.s32.totalorder %v2036, %v2048
    %vm2131 = vcmp.eq.s32.totalorder %v2036, %v2049
    %vm2132 = vcmp.eq.s32.totalorder %v2037, %v2048
    %vm2133 = vcmp.eq.s32.totalorder %v2037, %v2049
    %vm2134 = vcmp.eq.s32.totalorder %v2038, %v2048
    %vm2135 = vcmp.eq.s32.totalorder %v2038, %v2049
    %vm2136 = vcmp.eq.s32.totalorder %v2039, %v2048
    %vm2137 = vcmp.eq.s32.totalorder %v2039, %v2049
    %vm2138 = vcmp.eq.s32.totalorder %v2040, %v2048
    %vm2139 = vcmp.eq.s32.totalorder %v2040, %v2049
    %vm2140 = vcmp.eq.s32.totalorder %v2041, %v2048
    %vm2141 = vcmp.eq.s32.totalorder %v2041, %v2049
    %vm2142 = vcmp.eq.s32.totalorder %v2042, %v2048
    %vm2143 = vcmp.eq.s32.totalorder %v2042, %v2049
    %vm2144 = vcmp.eq.s32.totalorder %v2043, %v2048
    %vm2145 = vcmp.eq.s32.totalorder %v2043, %v2049
    %v2146 = vsel %vm2082, %v316, 0.0
    %v2147 = vsel %vm2083, %v429, 0.0
    %v2148 = vsel %vm2084, %v319, 0.0
    %v2149 = vsel %vm2085, %v432, 0.0
    %v2150 = vsel %vm2086, %v322, 0.0
    %v2151 = vsel %vm2087, %v435, 0.0
    %v2152 = vsel %vm2088, %v325, 0.0
    %v2153 = vsel %vm2089, %v438, 0.0
    %v2154 = vsel %vm2090, %v328, 0.0
    %v2155 = vsel %vm2091, %v441, 0.0
    %v2156 = vsel %vm2092, %v331, 0.0
    %v2157 = vsel %vm2093, %v444, 0.0
    %v2158 = vsel %vm2094, %v334, 0.0
    %v2159 = vsel %vm2095, %v447, 0.0
    %v2160 = vsel %vm2096, %v337, 0.0
    %v2161 = vsel %vm2097, %v450, 0.0
    %v2162 = vsel %vm2098, %v340, 0.0
    %v2163 = vsel %vm2099, %v453, 0.0
    %v2164 = vsel %vm2100, %v343, 0.0
    %v2165 = vsel %vm2101, %v456, 0.0
    %v2166 = vsel %vm2102, %v346, 0.0
    %v2167 = vsel %vm2103, %v459, 0.0
    %v2168 = vsel %vm2104, %v349, 0.0
    %v2169 = vsel %vm2105, %v462, 0.0
    %v2170 = vsel %vm2106, %v352, 0.0
    %v2171 = vsel %vm2107, %v465, 0.0
    %v2172 = vsel %vm2108, %v355, 0.0
    %v2173 = vsel %vm2109, %v468, 0.0
    %v2174 = vsel %vm2110, %v358, 0.0
    %v2175 = vsel %vm2111, %v471, 0.0
    %v2176 = vsel %vm2112, %v361, 0.0
    %v2177 = vsel %vm2113, %v474, 0.0
    %v2178 = vsel %vm2114, %v364, 0.0
    %v2179 = vsel %vm2115, %v477, 0.0
    %v2180 = vsel %vm2116, %v367, 0.0
    %v2181 = vsel %vm2117, %v480, 0.0
    %v2182 = vsel %vm2118, %v370, 0.0
    %v2183 = vsel %vm2119, %v483, 0.0
    %v2184 = vsel %vm2120, %v373, 0.0
    %v2185 = vsel %vm2121, %v486, 0.0
    %v2186 = vsel %vm2122, %v376, 0.0
    %v2187 = vsel %vm2123, %v489, 0.0
    %v2188 = vsel %vm2124, %v379, 0.0
    %v2189 = vsel %vm2125, %v492, 0.0
    %v2190 = vsel %vm2126, %v382, 0.0
    %v2191 = vsel %vm2127, %v495, 0.0
    %v2192 = vsel %vm2128, %v385, 0.0
    %v2193 = vsel %vm2129, %v498, 0.0
    %v2194 = vsel %vm2130, %v388, 0.0
    %v2195 = vsel %vm2131, %v501, 0.0
    %v2196 = vsel %vm2132, %v391, 0.0
    %v2197 = vsel %vm2133, %v504, 0.0
    %v2198 = vsel %vm2134, %v394, 0.0
    %v2199 = vsel %vm2135, %v507, 0.0
    %v2200 = vsel %vm2136, %v397, 0.0
    %v2201 = vsel %vm2137, %v510, 0.0
    %v2202 = vsel %vm2138, %v400, 0.0
    %v2203 = vsel %vm2139, %v513, 0.0
    %v2204 = vsel %vm2140, %v403, 0.0
    %v2205 = vsel %vm2141, %v516, 0.0
    %v2206 = vsel %vm2142, %v406, 0.0
    %v2207 = vsel %vm2143, %v519, 0.0
    %v2208 = vsel %vm2144, %v409, 0.0
    %v2209 = vsel %vm2145, %v522, 0.0
    %v2210 = vadd.f32 %v2146, %v2147
    %2211 = vadd.xlane.f32.xlu0 %v2210
    %v2212 = vpop.xlane.xlu0 %2211
    %v2213 = vadd.f32 %v2148, %v2149
    %2214 = vadd.xlane.f32.xlu0 %v2213
    %v2215 = vpop.xlane.xlu0 %2214
    %v2216 = vadd.f32 %v2150, %v2151
    %2217 = vadd.xlane.f32.xlu0 %v2216
    %v2218 = vpop.xlane.xlu0 %2217
    %v2219 = vadd.f32 %v2152, %v2153
    %2220 = vadd.xlane.f32.xlu0 %v2219
    %v2221 = vpop.xlane.xlu0 %2220
    %v2222 = vadd.f32 %v2154, %v2155
    %2223 = vadd.xlane.f32.xlu0 %v2222
    %v2224 = vpop.xlane.xlu0 %2223
    %v2225 = vadd.f32 %v2156, %v2157
    %2226 = vadd.xlane.f32.xlu0 %v2225
    %v2227 = vpop.xlane.xlu0 %2226
    %v2228 = vadd.f32 %v2158, %v2159
    %2229 = vadd.xlane.f32.xlu0 %v2228
    %v2230 = vpop.xlane.xlu0 %2229
    %v2231 = vadd.f32 %v2160, %v2161
    %2232 = vadd.xlane.f32.xlu0 %v2231
    %v2233 = vpop.xlane.xlu0 %2232
    %v2234 = vadd.f32 %v2162, %v2163
    %2235 = vadd.xlane.f32.xlu0 %v2234
    %v2236 = vpop.xlane.xlu0 %2235
    %v2237 = vadd.f32 %v2164, %v2165
    %2238 = vadd.xlane.f32.xlu0 %v2237
    %v2239 = vpop.xlane.xlu0 %2238
    %v2240 = vadd.f32 %v2166, %v2167
    %2241 = vadd.xlane.f32.xlu0 %v2240
    %v2242 = vpop.xlane.xlu0 %2241
    %v2243 = vadd.f32 %v2168, %v2169
    %2244 = vadd.xlane.f32.xlu0 %v2243
    %v2245 = vpop.xlane.xlu0 %2244
    %v2246 = vadd.f32 %v2170, %v2171
    %2247 = vadd.xlane.f32.xlu0 %v2246
    %v2248 = vpop.xlane.xlu0 %2247
    %v2249 = vadd.f32 %v2172, %v2173
    %2250 = vadd.xlane.f32.xlu0 %v2249
    %v2251 = vpop.xlane.xlu0 %2250
    %v2252 = vadd.f32 %v2174, %v2175
    %2253 = vadd.xlane.f32.xlu0 %v2252
    %v2254 = vpop.xlane.xlu0 %2253
    %v2255 = vadd.f32 %v2176, %v2177
    %2256 = vadd.xlane.f32.xlu0 %v2255
    %v2257 = vpop.xlane.xlu0 %2256
    %v2258 = vadd.f32 %v2178, %v2179
    %2259 = vadd.xlane.f32.xlu0 %v2258
    %v2260 = vpop.xlane.xlu0 %2259
    %v2261 = vadd.f32 %v2180, %v2181
    %2262 = vadd.xlane.f32.xlu0 %v2261
    %v2263 = vpop.xlane.xlu0 %2262
    %v2264 = vadd.f32 %v2182, %v2183
    %2265 = vadd.xlane.f32.xlu0 %v2264
    %v2266 = vpop.xlane.xlu0 %2265
    %v2267 = vadd.f32 %v2184, %v2185
    %2268 = vadd.xlane.f32.xlu0 %v2267
    %v2269 = vpop.xlane.xlu0 %2268
    %v2270 = vadd.f32 %v2186, %v2187
    %2271 = vadd.xlane.f32.xlu0 %v2270
    %v2272 = vpop.xlane.xlu0 %2271
    %v2273 = vadd.f32 %v2188, %v2189
    %2274 = vadd.xlane.f32.xlu0 %v2273
    %v2275 = vpop.xlane.xlu0 %2274
    %v2276 = vadd.f32 %v2190, %v2191
    %2277 = vadd.xlane.f32.xlu0 %v2276
    %v2278 = vpop.xlane.xlu0 %2277
    %v2279 = vadd.f32 %v2192, %v2193
    %2280 = vadd.xlane.f32.xlu0 %v2279
    %v2281 = vpop.xlane.xlu0 %2280
    %v2282 = vadd.f32 %v2194, %v2195
    %2283 = vadd.xlane.f32.xlu0 %v2282
    %v2284 = vpop.xlane.xlu0 %2283
    %v2285 = vadd.f32 %v2196, %v2197
    %2286 = vadd.xlane.f32.xlu0 %v2285
    %v2287 = vpop.xlane.xlu0 %2286
    %v2288 = vadd.f32 %v2198, %v2199
    %2289 = vadd.xlane.f32.xlu0 %v2288
    %v2290 = vpop.xlane.xlu0 %2289
    %v2291 = vadd.f32 %v2200, %v2201
    %2292 = vadd.xlane.f32.xlu0 %v2291
    %v2293 = vpop.xlane.xlu0 %2292
    %v2294 = vadd.f32 %v2202, %v2203
    %2295 = vadd.xlane.f32.xlu0 %v2294
    %v2296 = vpop.xlane.xlu0 %2295
    %v2297 = vadd.f32 %v2204, %v2205
    %2298 = vadd.xlane.f32.xlu0 %v2297
    %v2299 = vpop.xlane.xlu0 %2298
    %v2300 = vadd.f32 %v2206, %v2207
    %2301 = vadd.xlane.f32.xlu0 %v2300
    %v2302 = vpop.xlane.xlu0 %2301
    %v2303 = vadd.f32 %v2208, %v2209
    %2304 = vadd.xlane.f32.xlu0 %v2303
    %v2305 = vpop.xlane.xlu0 %2304
    %v2306 = vadd.f32 %v2050, %v2212
    %v2307 = vadd.f32 %v2051, %v2215
    %v2308 = vadd.f32 %v2052, %v2218
    %v2309 = vadd.f32 %v2053, %v2221
    %v2310 = vadd.f32 %v2054, %v2224
    %v2311 = vadd.f32 %v2055, %v2227
    %v2312 = vadd.f32 %v2056, %v2230
    %v2313 = vadd.f32 %v2057, %v2233
    %v2314 = vadd.f32 %v2058, %v2236
    %v2315 = vadd.f32 %v2059, %v2239
    %v2316 = vadd.f32 %v2060, %v2242
    %v2317 = vadd.f32 %v2061, %v2245
    %v2318 = vadd.f32 %v2062, %v2248
    %v2319 = vadd.f32 %v2063, %v2251
    %v2320 = vadd.f32 %v2064, %v2254
    %v2321 = vadd.f32 %v2065, %v2257
    %v2322 = vadd.f32 %v2066, %v2260
    %v2323 = vadd.f32 %v2067, %v2263
    %v2324 = vadd.f32 %v2068, %v2266
    %v2325 = vadd.f32 %v2069, %v2269
    %v2326 = vadd.f32 %v2070, %v2272
    %v2327 = vadd.f32 %v2071, %v2275
    %v2328 = vadd.f32 %v2072, %v2278
    %v2329 = vadd.f32 %v2073, %v2281
    %v2330 = vadd.f32 %v2074, %v2284
    %v2331 = vadd.f32 %v2075, %v2287
    %v2332 = vadd.f32 %v2076, %v2290
    %v2333 = vadd.f32 %v2077, %v2293
    %v2334 = vadd.f32 %v2078, %v2296
    %v2335 = vadd.f32 %v2079, %v2299
    %v2336 = vadd.f32 %v2080, %v2302
    %v2337 = vadd.f32 %v2081, %v2305
    %2338 = vst.msk [vmem:[#allocation5] sm:$0xff] %vm1647, %v2306
    %2339 = vst.msk [vmem:[#allocation5 + $0x8] sm:$0xff] %vm1647, %v2307
    %2340 = vst.msk [vmem:[#allocation5 + $0x10] sm:$0xff] %vm1647, %v2308
    %2341 = vst.msk [vmem:[#allocation5 + $0x18] sm:$0xff] %vm1647, %v2309
    %2342 = vst.msk [vmem:[#allocation5 + $0x20] sm:$0xff] %vm1647, %v2310
    %2343 = vst.msk [vmem:[#allocation5 + $0x28] sm:$0xff] %vm1647, %v2311
    %2344 = vst.msk [vmem:[#allocation5 + $0x30] sm:$0xff] %vm1647, %v2312
    %2345 = vst.msk [vmem:[#allocation5 + $0x38] sm:$0xff] %vm1647, %v2313
    %2346 = vst.msk [vmem:[#allocation5 + $0x40] sm:$0xff] %vm1647, %v2314
    %2347 = vst.msk [vmem:[#allocation5 + $0x48] sm:$0xff] %vm1647, %v2315
    %2348 = vst.msk [vmem:[#allocation5 + $0x50] sm:$0xff] %vm1647, %v2316
    %2349 = vst.msk [vmem:[#allocation5 + $0x58] sm:$0xff] %vm1647, %v2317
    %2350 = vst.msk [vmem:[#allocation5 + $0x60] sm:$0xff] %vm1647, %v2318
    %2351 = vst.msk [vmem:[#allocation5 + $0x68] sm:$0xff] %vm1647, %v2319
    %2352 = vst.msk [vmem:[#allocation5 + $0x70] sm:$0xff] %vm1647, %v2320
    %2353 = vst.msk [vmem:[#allocation5 + $0x78] sm:$0xff] %vm1647, %v2321
    %2354 = vst.msk [vmem:[#allocation5 + $0x80] sm:$0xff] %vm1647, %v2322
    %2355 = vst.msk [vmem:[#allocation5 + $0x88] sm:$0xff] %vm1647, %v2323
    %2356 = vst.msk [vmem:[#allocation5 + $0x90] sm:$0xff] %vm1647, %v2324
    %2357 = vst.msk [vmem:[#allocation5 + $0x98] sm:$0xff] %vm1647, %v2325
    %2358 = vst.msk [vmem:[#allocation5 + $0xa0] sm:$0xff] %vm1647, %v2326
    %2359 = vst.msk [vmem:[#allocation5 + $0xa8] sm:$0xff] %vm1647, %v2327
    %2360 = vst.msk [vmem:[#allocation5 + $0xb0] sm:$0xff] %vm1647, %v2328
    %2361 = vst.msk [vmem:[#allocation5 + $0xb8] sm:$0xff] %vm1647, %v2329
    %2362 = vst.msk [vmem:[#allocation5 + $0xc0] sm:$0xff] %vm1647, %v2330
    %2363 = vst.msk [vmem:[#allocation5 + $0xc8] sm:$0xff] %vm1647, %v2331
    %2364 = vst.msk [vmem:[#allocation5 + $0xd0] sm:$0xff] %vm1647, %v2332
    %2365 = vst.msk [vmem:[#allocation5 + $0xd8] sm:$0xff] %vm1647, %v2333
    %2366 = vst.msk [vmem:[#allocation5 + $0xe0] sm:$0xff] %vm1647, %v2334
    %2367 = vst.msk [vmem:[#allocation5 + $0xe8] sm:$0xff] %vm1647, %v2335
    %2368 = vst.msk [vmem:[#allocation5 + $0xf0] sm:$0xff] %vm1647, %v2336
    %2369 = vst.msk [vmem:[#allocation5 + $0xf8] sm:$0xff] %vm1647, %v2337
  $region29: #{tpu_custom_call.1} parent=0 // pred_fallthru
    _
  // Predicated region
  $region30: #{tpu_custom_call.1} parent=0 // pred_check
    %p2370 = pneg %p20
  $region31: #{tpu_custom_call.1} parent=0 // pred_check_branch
    %2372 = sbr.rel (%p2370) target = $region33
  $region32: #{tpu_custom_call.1} parent=0 // pred_region
    %v2373 = vld [vmem:[#allocation2] sm:$0xff]
    %v2374 = vld [vmem:[#allocation2 + $0x8] sm:$0xff]
    %v2375 = vld [vmem:[#allocation2 + $0x10] sm:$0xff]
    %v2376 = vld [vmem:[#allocation2 + $0x18] sm:$0xff]
    %v2377 = vld [vmem:[#allocation2 + $0x20] sm:$0xff]
    %v2378 = vld [vmem:[#allocation2 + $0x28] sm:$0xff]
    %v2379 = vld [vmem:[#allocation2 + $0x30] sm:$0xff]
    %v2380 = vld [vmem:[#allocation2 + $0x38] sm:$0xff]
    %v2381 = vld [vmem:[#allocation2 + $0x40] sm:$0xff]
    %v2382 = vld [vmem:[#allocation2 + $0x48] sm:$0xff]
    %v2383 = vld [vmem:[#allocation2 + $0x50] sm:$0xff]
    %v2384 = vld [vmem:[#allocation2 + $0x58] sm:$0xff]
    %v2385 = vld [vmem:[#allocation2 + $0x60] sm:$0xff]
    %v2386 = vld [vmem:[#allocation2 + $0x68] sm:$0xff]
    %v2387 = vld [vmem:[#allocation2 + $0x70] sm:$0xff]
    %v2388 = vld [vmem:[#allocation2 + $0x78] sm:$0xff]
    %v2389 = vld [vmem:[#allocation2 + $0x80] sm:$0xff]
    %v2390 = vld [vmem:[#allocation2 + $0x88] sm:$0xff]
    %v2391 = vld [vmem:[#allocation2 + $0x90] sm:$0xff]
    %v2392 = vld [vmem:[#allocation2 + $0x98] sm:$0xff]
    %v2393 = vld [vmem:[#allocation2 + $0xa0] sm:$0xff]
    %v2394 = vld [vmem:[#allocation2 + $0xa8] sm:$0xff]
    %v2395 = vld [vmem:[#allocation2 + $0xb0] sm:$0xff]
    %v2396 = vld [vmem:[#allocation2 + $0xb8] sm:$0xff]
    %v2397 = vld [vmem:[#allocation2 + $0xc0] sm:$0xff]
    %v2398 = vld [vmem:[#allocation2 + $0xc8] sm:$0xff]
    %v2399 = vld [vmem:[#allocation2 + $0xd0] sm:$0xff]
    %v2400 = vld [vmem:[#allocation2 + $0xd8] sm:$0xff]
    %v2401 = vld [vmem:[#allocation2 + $0xe0] sm:$0xff]
    %v2402 = vld [vmem:[#allocation2 + $0xe8] sm:$0xff]
    %v2403 = vld [vmem:[#allocation2 + $0xf0] sm:$0xff]
    %v2404 = vld [vmem:[#allocation2 + $0xf8] sm:$0xff]
    %v2405 = vld [vmem:[#allocation5] sm:$0xff]
    %v2406 = vld [vmem:[#allocation5 + $0x8] sm:$0xff]
    %v2407 = vld [vmem:[#allocation5 + $0x10] sm:$0xff]
    %v2408 = vld [vmem:[#allocation5 + $0x18] sm:$0xff]
    %v2409 = vld [vmem:[#allocation5 + $0x20] sm:$0xff]
    %v2410 = vld [vmem:[#allocation5 + $0x28] sm:$0xff]
    %v2411 = vld [vmem:[#allocation5 + $0x30] sm:$0xff]
    %v2412 = vld [vmem:[#allocation5 + $0x38] sm:$0xff]
    %v2413 = vld [vmem:[#allocation5 + $0x40] sm:$0xff]
    %v2414 = vld [vmem:[#allocation5 + $0x48] sm:$0xff]
    %v2415 = vld [vmem:[#allocation5 + $0x50] sm:$0xff]
    %v2416 = vld [vmem:[#allocation5 + $0x58] sm:$0xff]
    %v2417 = vld [vmem:[#allocation5 + $0x60] sm:$0xff]
    %v2418 = vld [vmem:[#allocation5 + $0x68] sm:$0xff]
    %v2419 = vld [vmem:[#allocation5 + $0x70] sm:$0xff]
    %v2420 = vld [vmem:[#allocation5 + $0x78] sm:$0xff]
    %v2421 = vld [vmem:[#allocation5 + $0x80] sm:$0xff]
    %v2422 = vld [vmem:[#allocation5 + $0x88] sm:$0xff]
    %v2423 = vld [vmem:[#allocation5 + $0x90] sm:$0xff]
    %v2424 = vld [vmem:[#allocation5 + $0x98] sm:$0xff]
    %v2425 = vld [vmem:[#allocation5 + $0xa0] sm:$0xff]
    %v2426 = vld [vmem:[#allocation5 + $0xa8] sm:$0xff]
    %v2427 = vld [vmem:[#allocation5 + $0xb0] sm:$0xff]
    %v2428 = vld [vmem:[#allocation5 + $0xb8] sm:$0xff]
    %v2429 = vld [vmem:[#allocation5 + $0xc0] sm:$0xff]
    %v2430 = vld [vmem:[#allocation5 + $0xc8] sm:$0xff]
    %v2431 = vld [vmem:[#allocation5 + $0xd0] sm:$0xff]
    %v2432 = vld [vmem:[#allocation5 + $0xd8] sm:$0xff]
    %v2433 = vld [vmem:[#allocation5 + $0xe0] sm:$0xff]
    %v2434 = vld [vmem:[#allocation5 + $0xe8] sm:$0xff]
    %v2435 = vld [vmem:[#allocation5 + $0xf0] sm:$0xff]
    %v2436 = vld [vmem:[#allocation5 + $0xf8] sm:$0xff]
    %v2437 = vld [vmem:[#allocation3] sm:$0xff]
    %v2438 = vld [vmem:[#allocation3 + $0x8] sm:$0xff]
    %v2439 = vld [vmem:[#allocation3 + $0x10] sm:$0xff]
    %v2440 = vld [vmem:[#allocation3 + $0x18] sm:$0xff]
    %v2441 = vld [vmem:[#allocation3 + $0x20] sm:$0xff]
    %v2442 = vld [vmem:[#allocation3 + $0x28] sm:$0xff]
    %v2443 = vld [vmem:[#allocation3 + $0x30] sm:$0xff]
    %v2444 = vld [vmem:[#allocation3 + $0x38] sm:$0xff]
    %v2445 = vld [vmem:[#allocation3 + $0x40] sm:$0xff]
    %v2446 = vld [vmem:[#allocation3 + $0x48] sm:$0xff]
    %v2447 = vld [vmem:[#allocation3 + $0x50] sm:$0xff]
    %v2448 = vld [vmem:[#allocation3 + $0x58] sm:$0xff]
    %v2449 = vld [vmem:[#allocation3 + $0x60] sm:$0xff]
    %v2450 = vld [vmem:[#allocation3 + $0x68] sm:$0xff]
    %v2451 = vld [vmem:[#allocation3 + $0x70] sm:$0xff]
    %v2452 = vld [vmem:[#allocation3 + $0x78] sm:$0xff]
    %v2453 = vld [vmem:[#allocation3 + $0x80] sm:$0xff]
    %v2454 = vld [vmem:[#allocation3 + $0x88] sm:$0xff]
    %v2455 = vld [vmem:[#allocation3 + $0x90] sm:$0xff]
    %v2456 = vld [vmem:[#allocation3 + $0x98] sm:$0xff]
    %v2457 = vld [vmem:[#allocation3 + $0xa0] sm:$0xff]
    %v2458 = vld [vmem:[#allocation3 + $0xa8] sm:$0xff]
    %v2459 = vld [vmem:[#allocation3 + $0xb0] sm:$0xff]
    %v2460 = vld [vmem:[#allocation3 + $0xb8] sm:$0xff]
    %v2461 = vld [vmem:[#allocation3 + $0xc0] sm:$0xff]
    %v2462 = vld [vmem:[#allocation3 + $0xc8] sm:$0xff]
    %v2463 = vld [vmem:[#allocation3 + $0xd0] sm:$0xff]
    %v2464 = vld [vmem:[#allocation3 + $0xd8] sm:$0xff]
    %v2465 = vld [vmem:[#allocation3 + $0xe0] sm:$0xff]
    %v2466 = vld [vmem:[#allocation3 + $0xe8] sm:$0xff]
    %v2467 = vld [vmem:[#allocation3 + $0xf0] sm:$0xff]
    %v2468 = vld [vmem:[#allocation3 + $0xf8] sm:$0xff]
    %v2469 = vsub.f32 %v2405, %v2373
    %v2470 = vsub.f32 %v2406, %v2374
    %v2471 = vsub.f32 %v2407, %v2375
    %v2472 = vsub.f32 %v2408, %v2376
    %v2473 = vsub.f32 %v2409, %v2377
    %v2474 = vsub.f32 %v2410, %v2378
    %v2475 = vsub.f32 %v2411, %v2379
    %v2476 = vsub.f32 %v2412, %v2380
    %v2477 = vsub.f32 %v2413, %v2381
    %v2478 = vsub.f32 %v2414, %v2382
    %v2479 = vsub.f32 %v2415, %v2383
    %v2480 = vsub.f32 %v2416, %v2384
    %v2481 = vsub.f32 %v2417, %v2385
    %v2482 = vsub.f32 %v2418, %v2386
    %v2483 = vsub.f32 %v2419, %v2387
    %v2484 = vsub.f32 %v2420, %v2388
    %v2485 = vsub.f32 %v2421, %v2389
    %v2486 = vsub.f32 %v2422, %v2390
    %v2487 = vsub.f32 %v2423, %v2391
    %v2488 = vsub.f32 %v2424, %v2392
    %v2489 = vsub.f32 %v2425, %v2393
    %v2490 = vsub.f32 %v2426, %v2394
    %v2491 = vsub.f32 %v2427, %v2395
    %v2492 = vsub.f32 %v2428, %v2396
    %v2493 = vsub.f32 %v2429, %v2397
    %v2494 = vsub.f32 %v2430, %v2398
    %v2495 = vsub.f32 %v2431, %v2399
    %v2496 = vsub.f32 %v2432, %v2400
    %v2497 = vsub.f32 %v2433, %v2401
    %v2498 = vsub.f32 %v2434, %v2402
    %v2499 = vsub.f32 %v2435, %v2403
    %v2500 = vsub.f32 %v2436, %v2404
    %v2501 = vmul.f32 %v2469, 1.442695
    %v2502 = vpow.pop %v2501
    %v2503 = vmul.f32 %v2470, 1.442695
    %v2504 = vpow.pop %v2503
    %v2505 = vmul.f32 %v2471, 1.442695
    %v2506 = vpow.pop %v2505
    %v2507 = vmul.f32 %v2472, 1.442695
    %v2508 = vpow.pop %v2507
    %v2509 = vmul.f32 %v2473, 1.442695
    %v2510 = vpow.pop %v2509
    %v2511 = vmul.f32 %v2474, 1.442695
    %v2512 = vpow.pop %v2511
    %v2513 = vmul.f32 %v2475, 1.442695
    %v2514 = vpow.pop %v2513
    %v2515 = vmul.f32 %v2476, 1.442695
    %v2516 = vpow.pop %v2515
    %v2517 = vmul.f32 %v2477, 1.442695
    %v2518 = vpow.pop %v2517
    %v2519 = vmul.f32 %v2478, 1.442695
    %v2520 = vpow.pop %v2519
    %v2521 = vmul.f32 %v2479, 1.442695
    %v2522 = vpow.pop %v2521
    %v2523 = vmul.f32 %v2480, 1.442695
    %v2524 = vpow.pop %v2523
    %v2525 = vmul.f32 %v2481, 1.442695
    %v2526 = vpow.pop %v2525
    %v2527 = vmul.f32 %v2482, 1.442695
    %v2528 = vpow.pop %v2527
    %v2529 = vmul.f32 %v2483, 1.442695
    %v2530 = vpow.pop %v2529
    %v2531 = vmul.f32 %v2484, 1.442695
    %v2532 = vpow.pop %v2531
    %v2533 = vmul.f32 %v2485, 1.442695
    %v2534 = vpow.pop %v2533
    %v2535 = vmul.f32 %v2486, 1.442695
    %v2536 = vpow.pop %v2535
    %v2537 = vmul.f32 %v2487, 1.442695
    %v2538 = vpow.pop %v2537
    %v2539 = vmul.f32 %v2488, 1.442695
    %v2540 = vpow.pop %v2539
    %v2541 = vmul.f32 %v2489, 1.442695
    %v2542 = vpow.pop %v2541
    %v2543 = vmul.f32 %v2490, 1.442695
    %v2544 = vpow.pop %v2543
    %v2545 = vmul.f32 %v2491, 1.442695
    %v2546 = vpow.pop %v2545
    %v2547 = vmul.f32 %v2492, 1.442695
    %v2548 = vpow.pop %v2547
    %v2549 = vmul.f32 %v2493, 1.442695
    %v2550 = vpow.pop %v2549
    %v2551 = vmul.f32 %v2494, 1.442695
    %v2552 = vpow.pop %v2551
    %v2553 = vmul.f32 %v2495, 1.442695
    %v2554 = vpow.pop %v2553
    %v2555 = vmul.f32 %v2496, 1.442695
    %v2556 = vpow.pop %v2555
    %v2557 = vmul.f32 %v2497, 1.442695
    %v2558 = vpow.pop %v2557
    %v2559 = vmul.f32 %v2498, 1.442695
    %v2560 = vpow.pop %v2559
    %v2561 = vmul.f32 %v2499, 1.442695
    %v2562 = vpow.pop %v2561
    %v2563 = vmul.f32 %v2500, 1.442695
    %v2564 = vpow.pop %v2563
    %v2565 = vsub.f32 %v2437, %v2502
    %v2566 = vsub.f32 %v2438, %v2504
    %v2567 = vsub.f32 %v2439, %v2506
    %v2568 = vsub.f32 %v2440, %v2508
    %v2569 = vsub.f32 %v2441, %v2510
    %v2570 = vsub.f32 %v2442, %v2512
    %v2571 = vsub.f32 %v2443, %v2514
    %v2572 = vsub.f32 %v2444, %v2516
    %v2573 = vsub.f32 %v2445, %v2518
    %v2574 = vsub.f32 %v2446, %v2520
    %v2575 = vsub.f32 %v2447, %v2522
    %v2576 = vsub.f32 %v2448, %v2524
    %v2577 = vsub.f32 %v2449, %v2526
    %v2578 = vsub.f32 %v2450, %v2528
    %v2579 = vsub.f32 %v2451, %v2530
    %v2580 = vsub.f32 %v2452, %v2532
    %v2581 = vsub.f32 %v2453, %v2534
    %v2582 = vsub.f32 %v2454, %v2536
    %v2583 = vsub.f32 %v2455, %v2538
    %v2584 = vsub.f32 %v2456, %v2540
    %v2585 = vsub.f32 %v2457, %v2542
    %v2586 = vsub.f32 %v2458, %v2544
    %v2587 = vsub.f32 %v2459, %v2546
    %v2588 = vsub.f32 %v2460, %v2548
    %v2589 = vsub.f32 %v2461, %v2550
    %v2590 = vsub.f32 %v2462, %v2552
    %v2591 = vsub.f32 %v2463, %v2554
    %v2592 = vsub.f32 %v2464, %v2556
    %v2593 = vsub.f32 %v2465, %v2558
    %v2594 = vsub.f32 %v2466, %v2560
    %v2595 = vsub.f32 %v2467, %v2562
    %v2596 = vsub.f32 %v2468, %v2564
    %v2597 = vsub.f32 0.0, %v2373
    %v2598 = vsub.f32 0.0, %v2374
    %v2599 = vsub.f32 0.0, %v2375
    %v2600 = vsub.f32 0.0, %v2376
    %v2601 = vsub.f32 0.0, %v2377
    %v2602 = vsub.f32 0.0, %v2378
    %v2603 = vsub.f32 0.0, %v2379
    %v2604 = vsub.f32 0.0, %v2380
    %v2605 = vsub.f32 0.0, %v2381
    %v2606 = vsub.f32 0.0, %v2382
    %v2607 = vsub.f32 0.0, %v2383
    %v2608 = vsub.f32 0.0, %v2384
    %v2609 = vsub.f32 0.0, %v2385
    %v2610 = vsub.f32 0.0, %v2386
    %v2611 = vsub.f32 0.0, %v2387
    %v2612 = vsub.f32 0.0, %v2388
    %v2613 = vsub.f32 0.0, %v2389
    %v2614 = vsub.f32 0.0, %v2390
    %v2615 = vsub.f32 0.0, %v2391
    %v2616 = vsub.f32 0.0, %v2392
    %v2617 = vsub.f32 0.0, %v2393
    %v2618 = vsub.f32 0.0, %v2394
    %v2619 = vsub.f32 0.0, %v2395
    %v2620 = vsub.f32 0.0, %v2396
    %v2621 = vsub.f32 0.0, %v2397
    %v2622 = vsub.f32 0.0, %v2398
    %v2623 = vsub.f32 0.0, %v2399
    %v2624 = vsub.f32 0.0, %v2400
    %v2625 = vsub.f32 0.0, %v2401
    %v2626 = vsub.f32 0.0, %v2402
    %v2627 = vsub.f32 0.0, %v2403
    %v2628 = vsub.f32 0.0, %v2404
    %v2629 = vmul.f32 %v2597, 1.442695
    %v2630 = vpow.pop %v2629
    %v2631 = vmul.f32 %v2598, 1.442695
    %v2632 = vpow.pop %v2631
    %v2633 = vmul.f32 %v2599, 1.442695
    %v2634 = vpow.pop %v2633
    %v2635 = vmul.f32 %v2600, 1.442695
    %v2636 = vpow.pop %v2635
    %v2637 = vmul.f32 %v2601, 1.442695
    %v2638 = vpow.pop %v2637
    %v2639 = vmul.f32 %v2602, 1.442695
    %v2640 = vpow.pop %v2639
    %v2641 = vmul.f32 %v2603, 1.442695
    %v2642 = vpow.pop %v2641
    %v2643 = vmul.f32 %v2604, 1.442695
    %v2644 = vpow.pop %v2643
    %v2645 = vmul.f32 %v2605, 1.442695
    %v2646 = vpow.pop %v2645
    %v2647 = vmul.f32 %v2606, 1.442695
    %v2648 = vpow.pop %v2647
    %v2649 = vmul.f32 %v2607, 1.442695
    %v2650 = vpow.pop %v2649
    %v2651 = vmul.f32 %v2608, 1.442695
    %v2652 = vpow.pop %v2651
    %v2653 = vmul.f32 %v2609, 1.442695
    %v2654 = vpow.pop %v2653
    %v2655 = vmul.f32 %v2610, 1.442695
    %v2656 = vpow.pop %v2655
    %v2657 = vmul.f32 %v2611, 1.442695
    %v2658 = vpow.pop %v2657
    %v2659 = vmul.f32 %v2612, 1.442695
    %v2660 = vpow.pop %v2659
    %v2661 = vmul.f32 %v2613, 1.442695
    %v2662 = vpow.pop %v2661
    %v2663 = vmul.f32 %v2614, 1.442695
    %v2664 = vpow.pop %v2663
    %v2665 = vmul.f32 %v2615, 1.442695
    %v2666 = vpow.pop %v2665
    %v2667 = vmul.f32 %v2616, 1.442695
    %v2668 = vpow.pop %v2667
    %v2669 = vmul.f32 %v2617, 1.442695
    %v2670 = vpow.pop %v2669
    %v2671 = vmul.f32 %v2618, 1.442695
    %v2672 = vpow.pop %v2671
    %v2673 = vmul.f32 %v2619, 1.442695
    %v2674 = vpow.pop %v2673
    %v2675 = vmul.f32 %v2620, 1.442695
    %v2676 = vpow.pop %v2675
    %v2677 = vmul.f32 %v2621, 1.442695
    %v2678 = vpow.pop %v2677
    %v2679 = vmul.f32 %v2622, 1.442695
    %v2680 = vpow.pop %v2679
    %v2681 = vmul.f32 %v2623, 1.442695
    %v2682 = vpow.pop %v2681
    %v2683 = vmul.f32 %v2624, 1.442695
    %v2684 = vpow.pop %v2683
    %v2685 = vmul.f32 %v2625, 1.442695
    %v2686 = vpow.pop %v2685
    %v2687 = vmul.f32 %v2626, 1.442695
    %v2688 = vpow.pop %v2687
    %v2689 = vmul.f32 %v2627, 1.442695
    %v2690 = vpow.pop %v2689
    %v2691 = vmul.f32 %v2628, 1.442695
    %v2692 = vpow.pop %v2691
    %v2693 = vmul.f32 %v2630, 56.0
    %v2694 = vmul.f32 %v2632, 56.0
    %v2695 = vmul.f32 %v2634, 56.0
    %v2696 = vmul.f32 %v2636, 56.0
    %v2697 = vmul.f32 %v2638, 56.0
    %v2698 = vmul.f32 %v2640, 56.0
    %v2699 = vmul.f32 %v2642, 56.0
    %v2700 = vmul.f32 %v2644, 56.0
    %v2701 = vmul.f32 %v2646, 56.0
    %v2702 = vmul.f32 %v2648, 56.0
    %v2703 = vmul.f32 %v2650, 56.0
    %v2704 = vmul.f32 %v2652, 56.0
    %v2705 = vmul.f32 %v2654, 56.0
    %v2706 = vmul.f32 %v2656, 56.0
    %v2707 = vmul.f32 %v2658, 56.0
    %v2708 = vmul.f32 %v2660, 56.0
    %v2709 = vmul.f32 %v2662, 56.0
    %v2710 = vmul.f32 %v2664, 56.0
    %v2711 = vmul.f32 %v2666, 56.0
    %v2712 = vmul.f32 %v2668, 56.0
    %v2713 = vmul.f32 %v2670, 56.0
    %v2714 = vmul.f32 %v2672, 56.0
    %v2715 = vmul.f32 %v2674, 56.0
    %v2716 = vmul.f32 %v2676, 56.0
    %v2717 = vmul.f32 %v2678, 56.0
    %v2718 = vmul.f32 %v2680, 56.0
    %v2719 = vmul.f32 %v2682, 56.0
    %v2720 = vmul.f32 %v2684, 56.0
    %v2721 = vmul.f32 %v2686, 56.0
    %v2722 = vmul.f32 %v2688, 56.0
    %v2723 = vmul.f32 %v2690, 56.0
    %v2724 = vmul.f32 %v2692, 56.0
    %v2725 = vsub.f32 %v2565, %v2693
    %v2726 = vsub.f32 %v2566, %v2694
    %v2727 = vsub.f32 %v2567, %v2695
    %v2728 = vsub.f32 %v2568, %v2696
    %v2729 = vsub.f32 %v2569, %v2697
    %v2730 = vsub.f32 %v2570, %v2698
    %v2731 = vsub.f32 %v2571, %v2699
    %v2732 = vsub.f32 %v2572, %v2700
    %v2733 = vsub.f32 %v2573, %v2701
    %v2734 = vsub.f32 %v2574, %v2702
    %v2735 = vsub.f32 %v2575, %v2703
    %v2736 = vsub.f32 %v2576, %v2704
    %v2737 = vsub.f32 %v2577, %v2705
    %v2738 = vsub.f32 %v2578, %v2706
    %v2739 = vsub.f32 %v2579, %v2707
    %v2740 = vsub.f32 %v2580, %v2708
    %v2741 = vsub.f32 %v2581, %v2709
    %v2742 = vsub.f32 %v2582, %v2710
    %v2743 = vsub.f32 %v2583, %v2711
    %v2744 = vsub.f32 %v2584, %v2712
    %v2745 = vsub.f32 %v2585, %v2713
    %v2746 = vsub.f32 %v2586, %v2714
    %v2747 = vsub.f32 %v2587, %v2715
    %v2748 = vsub.f32 %v2588, %v2716
    %v2749 = vsub.f32 %v2589, %v2717
    %v2750 = vsub.f32 %v2590, %v2718
    %v2751 = vsub.f32 %v2591, %v2719
    %v2752 = vsub.f32 %v2592, %v2720
    %v2753 = vsub.f32 %v2593, %v2721
    %v2754 = vsub.f32 %v2594, %v2722
    %v2755 = vsub.f32 %v2595, %v2723
    %v2756 = vsub.f32 %v2596, %v2724
    %v2757 = vld [vmem:[#allocation4] sm:$0xff]
    %v2758 = vld [vmem:[#allocation4 + $0x8] sm:$0xff]
    %v2759 = vld [vmem:[#allocation4 + $0x10] sm:$0xff]
    %v2760 = vld [vmem:[#allocation4 + $0x18] sm:$0xff]
    %v2761 = vld [vmem:[#allocation4 + $0x20] sm:$0xff]
    %v2762 = vld [vmem:[#allocation4 + $0x28] sm:$0xff]
    %v2763 = vld [vmem:[#allocation4 + $0x30] sm:$0xff]
    %v2764 = vld [vmem:[#allocation4 + $0x38] sm:$0xff]
    %v2765 = vld [vmem:[#allocation4 + $0x40] sm:$0xff]
    %v2766 = vld [vmem:[#allocation4 + $0x48] sm:$0xff]
    %v2767 = vld [vmem:[#allocation4 + $0x50] sm:$0xff]
    %v2768 = vld [vmem:[#allocation4 + $0x58] sm:$0xff]
    %v2769 = vld [vmem:[#allocation4 + $0x60] sm:$0xff]
    %v2770 = vld [vmem:[#allocation4 + $0x68] sm:$0xff]
    %v2771 = vld [vmem:[#allocation4 + $0x70] sm:$0xff]
    %v2772 = vld [vmem:[#allocation4 + $0x78] sm:$0xff]
    %v2773 = vld [vmem:[#allocation4 + $0x80] sm:$0xff]
    %v2774 = vld [vmem:[#allocation4 + $0x88] sm:$0xff]
    %v2775 = vld [vmem:[#allocation4 + $0x90] sm:$0xff]
    %v2776 = vld [vmem:[#allocation4 + $0x98] sm:$0xff]
    %v2777 = vld [vmem:[#allocation4 + $0xa0] sm:$0xff]
    %v2778 = vld [vmem:[#allocation4 + $0xa8] sm:$0xff]
    %v2779 = vld [vmem:[#allocation4 + $0xb0] sm:$0xff]
    %v2780 = vld [vmem:[#allocation4 + $0xb8] sm:$0xff]
    %v2781 = vld [vmem:[#allocation4 + $0xc0] sm:$0xff]
    %v2782 = vld [vmem:[#allocation4 + $0xc8] sm:$0xff]
    %v2783 = vld [vmem:[#allocation4 + $0xd0] sm:$0xff]
    %v2784 = vld [vmem:[#allocation4 + $0xd8] sm:$0xff]
    %v2785 = vld [vmem:[#allocation4 + $0xe0] sm:$0xff]
    %v2786 = vld [vmem:[#allocation4 + $0xe8] sm:$0xff]
    %v2787 = vld [vmem:[#allocation4 + $0xf0] sm:$0xff]
    %v2788 = vld [vmem:[#allocation4 + $0xf8] sm:$0xff]
    %v2789 = vsub.f32 %v2757, %v2405
    %v2790 = vsub.f32 %v2758, %v2406
    %v2791 = vsub.f32 %v2759, %v2407
    %v2792 = vsub.f32 %v2760, %v2408
    %v2793 = vsub.f32 %v2761, %v2409
    %v2794 = vsub.f32 %v2762, %v2410
    %v2795 = vsub.f32 %v2763, %v2411
    %v2796 = vsub.f32 %v2764, %v2412
    %v2797 = vsub.f32 %v2765, %v2413
    %v2798 = vsub.f32 %v2766, %v2414
    %v2799 = vsub.f32 %v2767, %v2415
    %v2800 = vsub.f32 %v2768, %v2416
    %v2801 = vsub.f32 %v2769, %v2417
    %v2802 = vsub.f32 %v2770, %v2418
    %v2803 = vsub.f32 %v2771, %v2419
    %v2804 = vsub.f32 %v2772, %v2420
    %v2805 = vsub.f32 %v2773, %v2421
    %v2806 = vsub.f32 %v2774, %v2422
    %v2807 = vsub.f32 %v2775, %v2423
    %v2808 = vsub.f32 %v2776, %v2424
    %v2809 = vsub.f32 %v2777, %v2425
    %v2810 = vsub.f32 %v2778, %v2426
    %v2811 = vsub.f32 %v2779, %v2427
    %v2812 = vsub.f32 %v2780, %v2428
    %v2813 = vsub.f32 %v2781, %v2429
    %v2814 = vsub.f32 %v2782, %v2430
    %v2815 = vsub.f32 %v2783, %v2431
    %v2816 = vsub.f32 %v2784, %v2432
    %v2817 = vsub.f32 %v2785, %v2433
    %v2818 = vsub.f32 %v2786, %v2434
    %v2819 = vsub.f32 %v2787, %v2435
    %v2820 = vsub.f32 %v2788, %v2436
    %v2821 = vld [vmem:[%s4] sm:$0xff]
    %v2822 = vld [vmem:[%s4 + $0x8] sm:$0xff]
    %v2823 = vld [vmem:[%s4 + $0x10] sm:$0xff]
    %v2824 = vld [vmem:[%s4 + $0x18] sm:$0xff]
    %v2825 = vld [vmem:[%s4 + $0x20] sm:$0xff]
    %v2826 = vld [vmem:[%s4 + $0x28] sm:$0xff]
    %v2827 = vld [vmem:[%s4 + $0x30] sm:$0xff]
    %v2828 = vld [vmem:[%s4 + $0x38] sm:$0xff]
    %v2829 = vld [vmem:[%s4 + $0x40] sm:$0xff]
    %v2830 = vld [vmem:[%s4 + $0x48] sm:$0xff]
    %v2831 = vld [vmem:[%s4 + $0x50] sm:$0xff]
    %v2832 = vld [vmem:[%s4 + $0x58] sm:$0xff]
    %v2833 = vld [vmem:[%s4 + $0x60] sm:$0xff]
    %v2834 = vld [vmem:[%s4 + $0x68] sm:$0xff]
    %v2835 = vld [vmem:[%s4 + $0x70] sm:$0xff]
    %v2836 = vld [vmem:[%s4 + $0x78] sm:$0xff]
    %v2837 = vld [vmem:[%s4 + $0x80] sm:$0xff]
    %v2838 = vld [vmem:[%s4 + $0x88] sm:$0xff]
    %v2839 = vld [vmem:[%s4 + $0x90] sm:$0xff]
    %v2840 = vld [vmem:[%s4 + $0x98] sm:$0xff]
    %v2841 = vld [vmem:[%s4 + $0xa0] sm:$0xff]
    %v2842 = vld [vmem:[%s4 + $0xa8] sm:$0xff]
    %v2843 = vld [vmem:[%s4 + $0xb0] sm:$0xff]
    %v2844 = vld [vmem:[%s4 + $0xb8] sm:$0xff]
    %v2845 = vld [vmem:[%s4 + $0xc0] sm:$0xff]
    %v2846 = vld [vmem:[%s4 + $0xc8] sm:$0xff]
    %v2847 = vld [vmem:[%s4 + $0xd0] sm:$0xff]
    %v2848 = vld [vmem:[%s4 + $0xd8] sm:$0xff]
    %v2849 = vld [vmem:[%s4 + $0xe0] sm:$0xff]
    %v2850 = vld [vmem:[%s4 + $0xe8] sm:$0xff]
    %v2851 = vld [vmem:[%s4 + $0xf0] sm:$0xff]
    %v2852 = vld [vmem:[%s4 + $0xf8] sm:$0xff]
    %vm2853 = vcmp.lt.f32.partialorder %v2821, 0.5
    %vm2854 = vcmp.lt.f32.partialorder %v2822, 0.5
    %vm2855 = vcmp.lt.f32.partialorder %v2823, 0.5
    %vm2856 = vcmp.lt.f32.partialorder %v2824, 0.5
    %vm2857 = vcmp.lt.f32.partialorder %v2825, 0.5
    %vm2858 = vcmp.lt.f32.partialorder %v2826, 0.5
    %vm2859 = vcmp.lt.f32.partialorder %v2827, 0.5
    %vm2860 = vcmp.lt.f32.partialorder %v2828, 0.5
    %vm2861 = vcmp.lt.f32.partialorder %v2829, 0.5
    %vm2862 = vcmp.lt.f32.partialorder %v2830, 0.5
    %vm2863 = vcmp.lt.f32.partialorder %v2831, 0.5
    %vm2864 = vcmp.lt.f32.partialorder %v2832, 0.5
    %vm2865 = vcmp.lt.f32.partialorder %v2833, 0.5
    %vm2866 = vcmp.lt.f32.partialorder %v2834, 0.5
    %vm2867 = vcmp.lt.f32.partialorder %v2835, 0.5
    %vm2868 = vcmp.lt.f32.partialorder %v2836, 0.5
    %vm2869 = vcmp.lt.f32.partialorder %v2837, 0.5
    %vm2870 = vcmp.lt.f32.partialorder %v2838, 0.5
    %vm2871 = vcmp.lt.f32.partialorder %v2839, 0.5
    %vm2872 = vcmp.lt.f32.partialorder %v2840, 0.5
    %vm2873 = vcmp.lt.f32.partialorder %v2841, 0.5
    %vm2874 = vcmp.lt.f32.partialorder %v2842, 0.5
    %vm2875 = vcmp.lt.f32.partialorder %v2843, 0.5
    %vm2876 = vcmp.lt.f32.partialorder %v2844, 0.5
    %vm2877 = vcmp.lt.f32.partialorder %v2845, 0.5
    %vm2878 = vcmp.lt.f32.partialorder %v2846, 0.5
    %vm2879 = vcmp.lt.f32.partialorder %v2847, 0.5
    %vm2880 = vcmp.lt.f32.partialorder %v2848, 0.5
    %vm2881 = vcmp.lt.f32.partialorder %v2849, 0.5
    %vm2882 = vcmp.lt.f32.partialorder %v2850, 0.5
    %vm2883 = vcmp.lt.f32.partialorder %v2851, 0.5
    %vm2884 = vcmp.lt.f32.partialorder %v2852, 0.5
    %v2885 = vsel %vm2853, 1.0, %v2821
    %v2886 = vsel %vm2854, 1.0, %v2822
    %v2887 = vsel %vm2855, 1.0, %v2823
    %v2888 = vsel %vm2856, 1.0, %v2824
    %v2889 = vsel %vm2857, 1.0, %v2825
    %v2890 = vsel %vm2858, 1.0, %v2826
    %v2891 = vsel %vm2859, 1.0, %v2827
    %v2892 = vsel %vm2860, 1.0, %v2828
    %v2893 = vsel %vm2861, 1.0, %v2829
    %v2894 = vsel %vm2862, 1.0, %v2830
    %v2895 = vsel %vm2863, 1.0, %v2831
    %v2896 = vsel %vm2864, 1.0, %v2832
    %v2897 = vsel %vm2865, 1.0, %v2833
    %v2898 = vsel %vm2866, 1.0, %v2834
    %v2899 = vsel %vm2867, 1.0, %v2835
    %v2900 = vsel %vm2868, 1.0, %v2836
    %v2901 = vsel %vm2869, 1.0, %v2837
    %v2902 = vsel %vm2870, 1.0, %v2838
    %v2903 = vsel %vm2871, 1.0, %v2839
    %v2904 = vsel %vm2872, 1.0, %v2840
    %v2905 = vsel %vm2873, 1.0, %v2841
    %v2906 = vsel %vm2874, 1.0, %v2842
    %v2907 = vsel %vm2875, 1.0, %v2843
    %v2908 = vsel %vm2876, 1.0, %v2844
    %v2909 = vsel %vm2877, 1.0, %v2845
    %v2910 = vsel %vm2878, 1.0, %v2846
    %v2911 = vsel %vm2879, 1.0, %v2847
    %v2912 = vsel %vm2880, 1.0, %v2848
    %v2913 = vsel %vm2881, 1.0, %v2849
    %v2914 = vsel %vm2882, 1.0, %v2850
    %v2915 = vsel %vm2883, 1.0, %v2851
    %v2916 = vsel %vm2884, 1.0, %v2852
    %v2917 = vadd.f32 %v2725, 1e-08
    %v2918 = vadd.f32 %v2726, 1e-08
    %v2919 = vadd.f32 %v2727, 1e-08
    %v2920 = vadd.f32 %v2728, 1e-08
    %v2921 = vadd.f32 %v2729, 1e-08
    %v2922 = vadd.f32 %v2730, 1e-08
    %v2923 = vadd.f32 %v2731, 1e-08
    %v2924 = vadd.f32 %v2732, 1e-08
    %v2925 = vadd.f32 %v2733, 1e-08
    %v2926 = vadd.f32 %v2734, 1e-08
    %v2927 = vadd.f32 %v2735, 1e-08
    %v2928 = vadd.f32 %v2736, 1e-08
    %v2929 = vadd.f32 %v2737, 1e-08
    %v2930 = vadd.f32 %v2738, 1e-08
    %v2931 = vadd.f32 %v2739, 1e-08
    %v2932 = vadd.f32 %v2740, 1e-08
    %v2933 = vadd.f32 %v2741, 1e-08
    %v2934 = vadd.f32 %v2742, 1e-08
    %v2935 = vadd.f32 %v2743, 1e-08
    %v2936 = vadd.f32 %v2744, 1e-08
    %v2937 = vadd.f32 %v2745, 1e-08
    %v2938 = vadd.f32 %v2746, 1e-08
    %v2939 = vadd.f32 %v2747, 1e-08
    %v2940 = vadd.f32 %v2748, 1e-08
    %v2941 = vadd.f32 %v2749, 1e-08
    %v2942 = vadd.f32 %v2750, 1e-08
    %v2943 = vadd.f32 %v2751, 1e-08
    %v2944 = vadd.f32 %v2752, 1e-08
    %v2945 = vadd.f32 %v2753, 1e-08
    %v2946 = vadd.f32 %v2754, 1e-08
    %v2947 = vadd.f32 %v2755, 1e-08
    %v2948 = vadd.f32 %v2756, 1e-08
    %v2949 = vlog2.pop %v2917
    %v2950 = vmul.f32 %v2949, 0.6931472
    %v2951 = vlog2.pop %v2918
    %v2952 = vmul.f32 %v2951, 0.6931472
    %v2953 = vlog2.pop %v2919
    %v2954 = vmul.f32 %v2953, 0.6931472
    %v2955 = vlog2.pop %v2920
    %v2956 = vmul.f32 %v2955, 0.6931472
    %v2957 = vlog2.pop %v2921
    %v2958 = vmul.f32 %v2957, 0.6931472
    %v2959 = vlog2.pop %v2922
    %v2960 = vmul.f32 %v2959, 0.6931472
    %v2961 = vlog2.pop %v2923
    %v2962 = vmul.f32 %v2961, 0.6931472
    %v2963 = vlog2.pop %v2924
    %v2964 = vmul.f32 %v2963, 0.6931472
    %v2965 = vlog2.pop %v2925
    %v2966 = vmul.f32 %v2965, 0.6931472
    %v2967 = vlog2.pop %v2926
    %v2968 = vmul.f32 %v2967, 0.6931472
    %v2969 = vlog2.pop %v2927
    %v2970 = vmul.f32 %v2969, 0.6931472
    %v2971 = vlog2.pop %v2928
    %v2972 = vmul.f32 %v2971, 0.6931472
    %v2973 = vlog2.pop %v2929
    %v2974 = vmul.f32 %v2973, 0.6931472
    %v2975 = vlog2.pop %v2930
    %v2976 = vmul.f32 %v2975, 0.6931472
    %v2977 = vlog2.pop %v2931
    %v2978 = vmul.f32 %v2977, 0.6931472
    %v2979 = vlog2.pop %v2932
    %v2980 = vmul.f32 %v2979, 0.6931472
    %v2981 = vlog2.pop %v2933
    %v2982 = vmul.f32 %v2981, 0.6931472
    %v2983 = vlog2.pop %v2934
    %v2984 = vmul.f32 %v2983, 0.6931472
    %v2985 = vlog2.pop %v2935
    %v2986 = vmul.f32 %v2985, 0.6931472
    %v2987 = vlog2.pop %v2936
    %v2988 = vmul.f32 %v2987, 0.6931472
    %v2989 = vlog2.pop %v2937
    %v2990 = vmul.f32 %v2989, 0.6931472
    %v2991 = vlog2.pop %v2938
    %v2992 = vmul.f32 %v2991, 0.6931472
    %v2993 = vlog2.pop %v2939
    %v2994 = vmul.f32 %v2993, 0.6931472
    %v2995 = vlog2.pop %v2940
    %v2996 = vmul.f32 %v2995, 0.6931472
    %v2997 = vlog2.pop %v2941
    %v2998 = vmul.f32 %v2997, 0.6931472
    %v2999 = vlog2.pop %v2942
    %v3000 = vmul.f32 %v2999, 0.6931472
    %v3001 = vlog2.pop %v2943
    %v3002 = vmul.f32 %v3001, 0.6931472
    %v3003 = vlog2.pop %v2944
    %v3004 = vmul.f32 %v3003, 0.6931472
    %v3005 = vlog2.pop %v2945
    %v3006 = vmul.f32 %v3005, 0.6931472
    %v3007 = vlog2.pop %v2946
    %v3008 = vmul.f32 %v3007, 0.6931472
    %v3009 = vlog2.pop %v2947
    %v3010 = vmul.f32 %v3009, 0.6931472
    %v3011 = vlog2.pop %v2948
    %v3012 = vmul.f32 %v3011, 0.6931472
    %v3013 = vadd.f32 %v2373, %v2950
    %v3014 = vadd.f32 %v2374, %v2952
    %v3015 = vadd.f32 %v2375, %v2954
    %v3016 = vadd.f32 %v2376, %v2956
    %v3017 = vadd.f32 %v2377, %v2958
    %v3018 = vadd.f32 %v2378, %v2960
    %v3019 = vadd.f32 %v2379, %v2962
    %v3020 = vadd.f32 %v2380, %v2964
    %v3021 = vadd.f32 %v2381, %v2966
    %v3022 = vadd.f32 %v2382, %v2968
    %v3023 = vadd.f32 %v2383, %v2970
    %v3024 = vadd.f32 %v2384, %v2972
    %v3025 = vadd.f32 %v2385, %v2974
    %v3026 = vadd.f32 %v2386, %v2976
    %v3027 = vadd.f32 %v2387, %v2978
    %v3028 = vadd.f32 %v2388, %v2980
    %v3029 = vadd.f32 %v2389, %v2982
    %v3030 = vadd.f32 %v2390, %v2984
    %v3031 = vadd.f32 %v2391, %v2986
    %v3032 = vadd.f32 %v2392, %v2988
    %v3033 = vadd.f32 %v2393, %v2990
    %v3034 = vadd.f32 %v2394, %v2992
    %v3035 = vadd.f32 %v2395, %v2994
    %v3036 = vadd.f32 %v2396, %v2996
    %v3037 = vadd.f32 %v2397, %v2998
    %v3038 = vadd.f32 %v2398, %v3000
    %v3039 = vadd.f32 %v2399, %v3002
    %v3040 = vadd.f32 %v2400, %v3004
    %v3041 = vadd.f32 %v2401, %v3006
    %v3042 = vadd.f32 %v2402, %v3008
    %v3043 = vadd.f32 %v2403, %v3010
    %v3044 = vadd.f32 %v2404, %v3012
    %v3045 = vmul.f32 %v2821, %v3013
    %v3046 = vmul.f32 %v2822, %v3014
    %v3047 = vmul.f32 %v2823, %v3015
    %v3048 = vmul.f32 %v2824, %v3016
    %v3049 = vmul.f32 %v2825, %v3017
    %v3050 = vmul.f32 %v2826, %v3018
    %v3051 = vmul.f32 %v2827, %v3019
    %v3052 = vmul.f32 %v2828, %v3020
    %v3053 = vmul.f32 %v2829, %v3021
    %v3054 = vmul.f32 %v2830, %v3022
    %v3055 = vmul.f32 %v2831, %v3023
    %v3056 = vmul.f32 %v2832, %v3024
    %v3057 = vmul.f32 %v2833, %v3025
    %v3058 = vmul.f32 %v2834, %v3026
    %v3059 = vmul.f32 %v2835, %v3027
    %v3060 = vmul.f32 %v2836, %v3028
    %v3061 = vmul.f32 %v2837, %v3029
    %v3062 = vmul.f32 %v2838, %v3030
    %v3063 = vmul.f32 %v2839, %v3031
    %v3064 = vmul.f32 %v2840, %v3032
    %v3065 = vmul.f32 %v2841, %v3033
    %v3066 = vmul.f32 %v2842, %v3034
    %v3067 = vmul.f32 %v2843, %v3035
    %v3068 = vmul.f32 %v2844, %v3036
    %v3069 = vmul.f32 %v2845, %v3037
    %v3070 = vmul.f32 %v2846, %v3038
    %v3071 = vmul.f32 %v2847, %v3039
    %v3072 = vmul.f32 %v2848, %v3040
    %v3073 = vmul.f32 %v2849, %v3041
    %v3074 = vmul.f32 %v2850, %v3042
    %v3075 = vmul.f32 %v2851, %v3043
    %v3076 = vmul.f32 %v2852, %v3044
    %v3077 = vsub.f32 %v2789, %v3045
    %v3078 = vsub.f32 %v2790, %v3046
    %v3079 = vsub.f32 %v2791, %v3047
    %v3080 = vsub.f32 %v2792, %v3048
    %v3081 = vsub.f32 %v2793, %v3049
    %v3082 = vsub.f32 %v2794, %v3050
    %v3083 = vsub.f32 %v2795, %v3051
    %v3084 = vsub.f32 %v2796, %v3052
    %v3085 = vsub.f32 %v2797, %v3053
    %v3086 = vsub.f32 %v2798, %v3054
    %v3087 = vsub.f32 %v2799, %v3055
    %v3088 = vsub.f32 %v2800, %v3056
    %v3089 = vsub.f32 %v2801, %v3057
    %v3090 = vsub.f32 %v2802, %v3058
    %v3091 = vsub.f32 %v2803, %v3059
    %v3092 = vsub.f32 %v2804, %v3060
    %v3093 = vsub.f32 %v2805, %v3061
    %v3094 = vsub.f32 %v2806, %v3062
    %v3095 = vsub.f32 %v2807, %v3063
    %v3096 = vsub.f32 %v2808, %v3064
    %v3097 = vsub.f32 %v2809, %v3065
    %v3098 = vsub.f32 %v2810, %v3066
    %v3099 = vsub.f32 %v2811, %v3067
    %v3100 = vsub.f32 %v2812, %v3068
    %v3101 = vsub.f32 %v2813, %v3069
    %v3102 = vsub.f32 %v2814, %v3070
    %v3103 = vsub.f32 %v2815, %v3071
    %v3104 = vsub.f32 %v2816, %v3072
    %v3105 = vsub.f32 %v2817, %v3073
    %v3106 = vsub.f32 %v2818, %v3074
    %v3107 = vsub.f32 %v2819, %v3075
    %v3108 = vsub.f32 %v2820, %v3076
    %v3109 = vrcp.pop %v2885
    %v3110 = vmul.f32 %v2885, %v3109
    %v3111 = vsub.f32 1.0, %v3110
    %v3112 = vmul.f32 %v3109, %v3111
    %v3113 = vadd.f32 %v3109, %v3112
    %vm3114 = vweird.f32 %v2885
    %vm3115 = vweird.f32 %v3109
    %vm3116 = vmor %vm3114, %vm3115
    %v3117 = vsel %vm3116, %v3109, %v3113
    %v3118 = vand.u32 2147483647, %v2885
    %vm3119 = vcmp.eq.f32.partialorder %v3118, 8.507059e+37
    %v3120 = vand.u32 %v2885, 2147483648
    %v3121 = vor.u32 1.1754944e-38, %v3120
    %v3122 = vsel %vm3119, %v3121, %v3117
    %v3123 = vmul.f32 %v3077, %v3122
    %v3124 = vrcp.pop %v2886
    %v3125 = vmul.f32 %v2886, %v3124
    %v3126 = vsub.f32 1.0, %v3125
    %v3127 = vmul.f32 %v3124, %v3126
    %v3128 = vadd.f32 %v3124, %v3127
    %vm3129 = vweird.f32 %v2886
    %vm3130 = vweird.f32 %v3124
    %vm3131 = vmor %vm3129, %vm3130
    %v3132 = vsel %vm3131, %v3124, %v3128
    %v3133 = vand.u32 2147483647, %v2886
    %vm3134 = vcmp.eq.f32.partialorder %v3133, 8.507059e+37
    %v3135 = vand.u32 %v2886, 2147483648
    %v3136 = vor.u32 1.1754944e-38, %v3135
    %v3137 = vsel %vm3134, %v3136, %v3132
    %v3138 = vmul.f32 %v3078, %v3137
    %v3139 = vrcp.pop %v2887
    %v3140 = vmul.f32 %v2887, %v3139
    %v3141 = vsub.f32 1.0, %v3140
    %v3142 = vmul.f32 %v3139, %v3141
    %v3143 = vadd.f32 %v3139, %v3142
    %vm3144 = vweird.f32 %v2887
    %vm3145 = vweird.f32 %v3139
    %vm3146 = vmor %vm3144, %vm3145
    %v3147 = vsel %vm3146, %v3139, %v3143
    %v3148 = vand.u32 2147483647, %v2887
    %vm3149 = vcmp.eq.f32.partialorder %v3148, 8.507059e+37
    %v3150 = vand.u32 %v2887, 2147483648
    %v3151 = vor.u32 1.1754944e-38, %v3150
    %v3152 = vsel %vm3149, %v3151, %v3147
    %v3153 = vmul.f32 %v3079, %v3152
    %v3154 = vrcp.pop %v2888
    %v3155 = vmul.f32 %v2888, %v3154
    %v3156 = vsub.f32 1.0, %v3155
    %v3157 = vmul.f32 %v3154, %v3156
    %v3158 = vadd.f32 %v3154, %v3157
    %vm3159 = vweird.f32 %v2888
    %vm3160 = vweird.f32 %v3154
    %vm3161 = vmor %vm3159, %vm3160
    %v3162 = vsel %vm3161, %v3154, %v3158
    %v3163 = vand.u32 2147483647, %v2888
    %vm3164 = vcmp.eq.f32.partialorder %v3163, 8.507059e+37
    %v3165 = vand.u32 %v2888, 2147483648
    %v3166 = vor.u32 1.1754944e-38, %v3165
    %v3167 = vsel %vm3164, %v3166, %v3162
    %v3168 = vmul.f32 %v3080, %v3167
    %v3169 = vrcp.pop %v2889
    %v3170 = vmul.f32 %v2889, %v3169
    %v3171 = vsub.f32 1.0, %v3170
    %v3172 = vmul.f32 %v3169, %v3171
    %v3173 = vadd.f32 %v3169, %v3172
    %vm3174 = vweird.f32 %v2889
    %vm3175 = vweird.f32 %v3169
    %vm3176 = vmor %vm3174, %vm3175
    %v3177 = vsel %vm3176, %v3169, %v3173
    %v3178 = vand.u32 2147483647, %v2889
    %vm3179 = vcmp.eq.f32.partialorder %v3178, 8.507059e+37
    %v3180 = vand.u32 %v2889, 2147483648
    %v3181 = vor.u32 1.1754944e-38, %v3180
    %v3182 = vsel %vm3179, %v3181, %v3177
    %v3183 = vmul.f32 %v3081, %v3182
    %v3184 = vrcp.pop %v2890
    %v3185 = vmul.f32 %v2890, %v3184
    %v3186 = vsub.f32 1.0, %v3185
    %v3187 = vmul.f32 %v3184, %v3186
    %v3188 = vadd.f32 %v3184, %v3187
    %vm3189 = vweird.f32 %v2890
    %vm3190 = vweird.f32 %v3184
    %vm3191 = vmor %vm3189, %vm3190
    %v3192 = vsel %vm3191, %v3184, %v3188
    %v3193 = vand.u32 2147483647, %v2890
    %vm3194 = vcmp.eq.f32.partialorder %v3193, 8.507059e+37
    %v3195 = vand.u32 %v2890, 2147483648
    %v3196 = vor.u32 1.1754944e-38, %v3195
    %v3197 = vsel %vm3194, %v3196, %v3192
    %v3198 = vmul.f32 %v3082, %v3197
    %v3199 = vrcp.pop %v2891
    %v3200 = vmul.f32 %v2891, %v3199
    %v3201 = vsub.f32 1.0, %v3200
    %v3202 = vmul.f32 %v3199, %v3201
    %v3203 = vadd.f32 %v3199, %v3202
    %vm3204 = vweird.f32 %v2891
    %vm3205 = vweird.f32 %v3199
    %vm3206 = vmor %vm3204, %vm3205
    %v3207 = vsel %vm3206, %v3199, %v3203
    %v3208 = vand.u32 2147483647, %v2891
    %vm3209 = vcmp.eq.f32.partialorder %v3208, 8.507059e+37
    %v3210 = vand.u32 %v2891, 2147483648
    %v3211 = vor.u32 1.1754944e-38, %v3210
    %v3212 = vsel %vm3209, %v3211, %v3207
    %v3213 = vmul.f32 %v3083, %v3212
    %v3214 = vrcp.pop %v2892
    %v3215 = vmul.f32 %v2892, %v3214
    %v3216 = vsub.f32 1.0, %v3215
    %v3217 = vmul.f32 %v3214, %v3216
    %v3218 = vadd.f32 %v3214, %v3217
    %vm3219 = vweird.f32 %v2892
    %vm3220 = vweird.f32 %v3214
    %vm3221 = vmor %vm3219, %vm3220
    %v3222 = vsel %vm3221, %v3214, %v3218
    %v3223 = vand.u32 2147483647, %v2892
    %vm3224 = vcmp.eq.f32.partialorder %v3223, 8.507059e+37
    %v3225 = vand.u32 %v2892, 2147483648
    %v3226 = vor.u32 1.1754944e-38, %v3225
    %v3227 = vsel %vm3224, %v3226, %v3222
    %v3228 = vmul.f32 %v3084, %v3227
    %v3229 = vrcp.pop %v2893
    %v3230 = vmul.f32 %v2893, %v3229
    %v3231 = vsub.f32 1.0, %v3230
    %v3232 = vmul.f32 %v3229, %v3231
    %v3233 = vadd.f32 %v3229, %v3232
    %vm3234 = vweird.f32 %v2893
    %vm3235 = vweird.f32 %v3229
    %vm3236 = vmor %vm3234, %vm3235
    %v3237 = vsel %vm3236, %v3229, %v3233
    %v3238 = vand.u32 2147483647, %v2893
    %vm3239 = vcmp.eq.f32.partialorder %v3238, 8.507059e+37
    %v3240 = vand.u32 %v2893, 2147483648
    %v3241 = vor.u32 1.1754944e-38, %v3240
    %v3242 = vsel %vm3239, %v3241, %v3237
    %v3243 = vmul.f32 %v3085, %v3242
    %v3244 = vrcp.pop %v2894
    %v3245 = vmul.f32 %v2894, %v3244
    %v3246 = vsub.f32 1.0, %v3245
    %v3247 = vmul.f32 %v3244, %v3246
    %v3248 = vadd.f32 %v3244, %v3247
    %vm3249 = vweird.f32 %v2894
    %vm3250 = vweird.f32 %v3244
    %vm3251 = vmor %vm3249, %vm3250
    %v3252 = vsel %vm3251, %v3244, %v3248
    %v3253 = vand.u32 2147483647, %v2894
    %vm3254 = vcmp.eq.f32.partialorder %v3253, 8.507059e+37
    %v3255 = vand.u32 %v2894, 2147483648
    %v3256 = vor.u32 1.1754944e-38, %v3255
    %v3257 = vsel %vm3254, %v3256, %v3252
    %v3258 = vmul.f32 %v3086, %v3257
    %v3259 = vrcp.pop %v2895
    %v3260 = vmul.f32 %v2895, %v3259
    %v3261 = vsub.f32 1.0, %v3260
    %v3262 = vmul.f32 %v3259, %v3261
    %v3263 = vadd.f32 %v3259, %v3262
    %vm3264 = vweird.f32 %v2895
    %vm3265 = vweird.f32 %v3259
    %vm3266 = vmor %vm3264, %vm3265
    %v3267 = vsel %vm3266, %v3259, %v3263
    %v3268 = vand.u32 2147483647, %v2895
    %vm3269 = vcmp.eq.f32.partialorder %v3268, 8.507059e+37
    %v3270 = vand.u32 %v2895, 2147483648
    %v3271 = vor.u32 1.1754944e-38, %v3270
    %v3272 = vsel %vm3269, %v3271, %v3267
    %v3273 = vmul.f32 %v3087, %v3272
    %v3274 = vrcp.pop %v2896
    %v3275 = vmul.f32 %v2896, %v3274
    %v3276 = vsub.f32 1.0, %v3275
    %v3277 = vmul.f32 %v3274, %v3276
    %v3278 = vadd.f32 %v3274, %v3277
    %vm3279 = vweird.f32 %v2896
    %vm3280 = vweird.f32 %v3274
    %vm3281 = vmor %vm3279, %vm3280
    %v3282 = vsel %vm3281, %v3274, %v3278
    %v3283 = vand.u32 2147483647, %v2896
    %vm3284 = vcmp.eq.f32.partialorder %v3283, 8.507059e+37
    %v3285 = vand.u32 %v2896, 2147483648
    %v3286 = vor.u32 1.1754944e-38, %v3285
    %v3287 = vsel %vm3284, %v3286, %v3282
    %v3288 = vmul.f32 %v3088, %v3287
    %v3289 = vrcp.pop %v2897
    %v3290 = vmul.f32 %v2897, %v3289
    %v3291 = vsub.f32 1.0, %v3290
    %v3292 = vmul.f32 %v3289, %v3291
    %v3293 = vadd.f32 %v3289, %v3292
    %vm3294 = vweird.f32 %v2897
    %vm3295 = vweird.f32 %v3289
    %vm3296 = vmor %vm3294, %vm3295
    %v3297 = vsel %vm3296, %v3289, %v3293
    %v3298 = vand.u32 2147483647, %v2897
    %vm3299 = vcmp.eq.f32.partialorder %v3298, 8.507059e+37
    %v3300 = vand.u32 %v2897, 2147483648
    %v3301 = vor.u32 1.1754944e-38, %v3300
    %v3302 = vsel %vm3299, %v3301, %v3297
    %v3303 = vmul.f32 %v3089, %v3302
    %v3304 = vrcp.pop %v2898
    %v3305 = vmul.f32 %v2898, %v3304
    %v3306 = vsub.f32 1.0, %v3305
    %v3307 = vmul.f32 %v3304, %v3306
    %v3308 = vadd.f32 %v3304, %v3307
    %vm3309 = vweird.f32 %v2898
    %vm3310 = vweird.f32 %v3304
    %vm3311 = vmor %vm3309, %vm3310
    %v3312 = vsel %vm3311, %v3304, %v3308
    %v3313 = vand.u32 2147483647, %v2898
    %vm3314 = vcmp.eq.f32.partialorder %v3313, 8.507059e+37
    %v3315 = vand.u32 %v2898, 2147483648
    %v3316 = vor.u32 1.1754944e-38, %v3315
    %v3317 = vsel %vm3314, %v3316, %v3312
    %v3318 = vmul.f32 %v3090, %v3317
    %v3319 = vrcp.pop %v2899
    %v3320 = vmul.f32 %v2899, %v3319
    %v3321 = vsub.f32 1.0, %v3320
    %v3322 = vmul.f32 %v3319, %v3321
    %v3323 = vadd.f32 %v3319, %v3322
    %vm3324 = vweird.f32 %v2899
    %vm3325 = vweird.f32 %v3319
    %vm3326 = vmor %vm3324, %vm3325
    %v3327 = vsel %vm3326, %v3319, %v3323
    %v3328 = vand.u32 2147483647, %v2899
    %vm3329 = vcmp.eq.f32.partialorder %v3328, 8.507059e+37
    %v3330 = vand.u32 %v2899, 2147483648
    %v3331 = vor.u32 1.1754944e-38, %v3330
    %v3332 = vsel %vm3329, %v3331, %v3327
    %v3333 = vmul.f32 %v3091, %v3332
    %v3334 = vrcp.pop %v2900
    %v3335 = vmul.f32 %v2900, %v3334
    %v3336 = vsub.f32 1.0, %v3335
    %v3337 = vmul.f32 %v3334, %v3336
    %v3338 = vadd.f32 %v3334, %v3337
    %vm3339 = vweird.f32 %v2900
    %vm3340 = vweird.f32 %v3334
    %vm3341 = vmor %vm3339, %vm3340
    %v3342 = vsel %vm3341, %v3334, %v3338
    %v3343 = vand.u32 2147483647, %v2900
    %vm3344 = vcmp.eq.f32.partialorder %v3343, 8.507059e+37
    %v3345 = vand.u32 %v2900, 2147483648
    %v3346 = vor.u32 1.1754944e-38, %v3345
    %v3347 = vsel %vm3344, %v3346, %v3342
    %v3348 = vmul.f32 %v3092, %v3347
    %v3349 = vrcp.pop %v2901
    %v3350 = vmul.f32 %v2901, %v3349
    %v3351 = vsub.f32 1.0, %v3350
    %v3352 = vmul.f32 %v3349, %v3351
    %v3353 = vadd.f32 %v3349, %v3352
    %vm3354 = vweird.f32 %v2901
    %vm3355 = vweird.f32 %v3349
    %vm3356 = vmor %vm3354, %vm3355
    %v3357 = vsel %vm3356, %v3349, %v3353
    %v3358 = vand.u32 2147483647, %v2901
    %vm3359 = vcmp.eq.f32.partialorder %v3358, 8.507059e+37
    %v3360 = vand.u32 %v2901, 2147483648
    %v3361 = vor.u32 1.1754944e-38, %v3360
    %v3362 = vsel %vm3359, %v3361, %v3357
    %v3363 = vmul.f32 %v3093, %v3362
    %v3364 = vrcp.pop %v2902
    %v3365 = vmul.f32 %v2902, %v3364
    %v3366 = vsub.f32 1.0, %v3365
    %v3367 = vmul.f32 %v3364, %v3366
    %v3368 = vadd.f32 %v3364, %v3367
    %vm3369 = vweird.f32 %v2902
    %vm3370 = vweird.f32 %v3364
    %vm3371 = vmor %vm3369, %vm3370
    %v3372 = vsel %vm3371, %v3364, %v3368
    %v3373 = vand.u32 2147483647, %v2902
    %vm3374 = vcmp.eq.f32.partialorder %v3373, 8.507059e+37
    %v3375 = vand.u32 %v2902, 2147483648
    %v3376 = vor.u32 1.1754944e-38, %v3375
    %v3377 = vsel %vm3374, %v3376, %v3372
    %v3378 = vmul.f32 %v3094, %v3377
    %v3379 = vrcp.pop %v2903
    %v3380 = vmul.f32 %v2903, %v3379
    %v3381 = vsub.f32 1.0, %v3380
    %v3382 = vmul.f32 %v3379, %v3381
    %v3383 = vadd.f32 %v3379, %v3382
    %vm3384 = vweird.f32 %v2903
    %vm3385 = vweird.f32 %v3379
    %vm3386 = vmor %vm3384, %vm3385
    %v3387 = vsel %vm3386, %v3379, %v3383
    %v3388 = vand.u32 2147483647, %v2903
    %vm3389 = vcmp.eq.f32.partialorder %v3388, 8.507059e+37
    %v3390 = vand.u32 %v2903, 2147483648
    %v3391 = vor.u32 1.1754944e-38, %v3390
    %v3392 = vsel %vm3389, %v3391, %v3387
    %v3393 = vmul.f32 %v3095, %v3392
    %v3394 = vrcp.pop %v2904
    %v3395 = vmul.f32 %v2904, %v3394
    %v3396 = vsub.f32 1.0, %v3395
    %v3397 = vmul.f32 %v3394, %v3396
    %v3398 = vadd.f32 %v3394, %v3397
    %vm3399 = vweird.f32 %v2904
    %vm3400 = vweird.f32 %v3394
    %vm3401 = vmor %vm3399, %vm3400
    %v3402 = vsel %vm3401, %v3394, %v3398
    %v3403 = vand.u32 2147483647, %v2904
    %vm3404 = vcmp.eq.f32.partialorder %v3403, 8.507059e+37
    %v3405 = vand.u32 %v2904, 2147483648
    %v3406 = vor.u32 1.1754944e-38, %v3405
    %v3407 = vsel %vm3404, %v3406, %v3402
    %v3408 = vmul.f32 %v3096, %v3407
    %v3409 = vrcp.pop %v2905
    %v3410 = vmul.f32 %v2905, %v3409
    %v3411 = vsub.f32 1.0, %v3410
    %v3412 = vmul.f32 %v3409, %v3411
    %v3413 = vadd.f32 %v3409, %v3412
    %vm3414 = vweird.f32 %v2905
    %vm3415 = vweird.f32 %v3409
    %vm3416 = vmor %vm3414, %vm3415
    %v3417 = vsel %vm3416, %v3409, %v3413
    %v3418 = vand.u32 2147483647, %v2905
    %vm3419 = vcmp.eq.f32.partialorder %v3418, 8.507059e+37
    %v3420 = vand.u32 %v2905, 2147483648
    %v3421 = vor.u32 1.1754944e-38, %v3420
    %v3422 = vsel %vm3419, %v3421, %v3417
    %v3423 = vmul.f32 %v3097, %v3422
    %v3424 = vrcp.pop %v2906
    %v3425 = vmul.f32 %v2906, %v3424
    %v3426 = vsub.f32 1.0, %v3425
    %v3427 = vmul.f32 %v3424, %v3426
    %v3428 = vadd.f32 %v3424, %v3427
    %vm3429 = vweird.f32 %v2906
    %vm3430 = vweird.f32 %v3424
    %vm3431 = vmor %vm3429, %vm3430
    %v3432 = vsel %vm3431, %v3424, %v3428
    %v3433 = vand.u32 2147483647, %v2906
    %vm3434 = vcmp.eq.f32.partialorder %v3433, 8.507059e+37
    %v3435 = vand.u32 %v2906, 2147483648
    %v3436 = vor.u32 1.1754944e-38, %v3435
    %v3437 = vsel %vm3434, %v3436, %v3432
    %v3438 = vmul.f32 %v3098, %v3437
    %v3439 = vrcp.pop %v2907
    %v3440 = vmul.f32 %v2907, %v3439
    %v3441 = vsub.f32 1.0, %v3440
    %v3442 = vmul.f32 %v3439, %v3441
    %v3443 = vadd.f32 %v3439, %v3442
    %vm3444 = vweird.f32 %v2907
    %vm3445 = vweird.f32 %v3439
    %vm3446 = vmor %vm3444, %vm3445
    %v3447 = vsel %vm3446, %v3439, %v3443
    %v3448 = vand.u32 2147483647, %v2907
    %vm3449 = vcmp.eq.f32.partialorder %v3448, 8.507059e+37
    %v3450 = vand.u32 %v2907, 2147483648
    %v3451 = vor.u32 1.1754944e-38, %v3450
    %v3452 = vsel %vm3449, %v3451, %v3447
    %v3453 = vmul.f32 %v3099, %v3452
    %v3454 = vrcp.pop %v2908
    %v3455 = vmul.f32 %v2908, %v3454
    %v3456 = vsub.f32 1.0, %v3455
    %v3457 = vmul.f32 %v3454, %v3456
    %v3458 = vadd.f32 %v3454, %v3457
    %vm3459 = vweird.f32 %v2908
    %vm3460 = vweird.f32 %v3454
    %vm3461 = vmor %vm3459, %vm3460
    %v3462 = vsel %vm3461, %v3454, %v3458
    %v3463 = vand.u32 2147483647, %v2908
    %vm3464 = vcmp.eq.f32.partialorder %v3463, 8.507059e+37
    %v3465 = vand.u32 %v2908, 2147483648
    %v3466 = vor.u32 1.1754944e-38, %v3465
    %v3467 = vsel %vm3464, %v3466, %v3462
    %v3468 = vmul.f32 %v3100, %v3467
    %v3469 = vrcp.pop %v2909
    %v3470 = vmul.f32 %v2909, %v3469
    %v3471 = vsub.f32 1.0, %v3470
    %v3472 = vmul.f32 %v3469, %v3471
    %v3473 = vadd.f32 %v3469, %v3472
    %vm3474 = vweird.f32 %v2909
    %vm3475 = vweird.f32 %v3469
    %vm3476 = vmor %vm3474, %vm3475
    %v3477 = vsel %vm3476, %v3469, %v3473
    %v3478 = vand.u32 2147483647, %v2909
    %vm3479 = vcmp.eq.f32.partialorder %v3478, 8.507059e+37
    %v3480 = vand.u32 %v2909, 2147483648
    %v3481 = vor.u32 1.1754944e-38, %v3480
    %v3482 = vsel %vm3479, %v3481, %v3477
    %v3483 = vmul.f32 %v3101, %v3482
    %v3484 = vrcp.pop %v2910
    %v3485 = vmul.f32 %v2910, %v3484
    %v3486 = vsub.f32 1.0, %v3485
    %v3487 = vmul.f32 %v3484, %v3486
    %v3488 = vadd.f32 %v3484, %v3487
    %vm3489 = vweird.f32 %v2910
    %vm3490 = vweird.f32 %v3484
    %vm3491 = vmor %vm3489, %vm3490
    %v3492 = vsel %vm3491, %v3484, %v3488
    %v3493 = vand.u32 2147483647, %v2910
    %vm3494 = vcmp.eq.f32.partialorder %v3493, 8.507059e+37
    %v3495 = vand.u32 %v2910, 2147483648
    %v3496 = vor.u32 1.1754944e-38, %v3495
    %v3497 = vsel %vm3494, %v3496, %v3492
    %v3498 = vmul.f32 %v3102, %v3497
    %v3499 = vrcp.pop %v2911
    %v3500 = vmul.f32 %v2911, %v3499
    %v3501 = vsub.f32 1.0, %v3500
    %v3502 = vmul.f32 %v3499, %v3501
    %v3503 = vadd.f32 %v3499, %v3502
    %vm3504 = vweird.f32 %v2911
    %vm3505 = vweird.f32 %v3499
    %vm3506 = vmor %vm3504, %vm3505
    %v3507 = vsel %vm3506, %v3499, %v3503
    %v3508 = vand.u32 2147483647, %v2911
    %vm3509 = vcmp.eq.f32.partialorder %v3508, 8.507059e+37
    %v3510 = vand.u32 %v2911, 2147483648
    %v3511 = vor.u32 1.1754944e-38, %v3510
    %v3512 = vsel %vm3509, %v3511, %v3507
    %v3513 = vmul.f32 %v3103, %v3512
    %v3514 = vrcp.pop %v2912
    %v3515 = vmul.f32 %v2912, %v3514
    %v3516 = vsub.f32 1.0, %v3515
    %v3517 = vmul.f32 %v3514, %v3516
    %v3518 = vadd.f32 %v3514, %v3517
    %vm3519 = vweird.f32 %v2912
    %vm3520 = vweird.f32 %v3514
    %vm3521 = vmor %vm3519, %vm3520
    %v3522 = vsel %vm3521, %v3514, %v3518
    %v3523 = vand.u32 2147483647, %v2912
    %vm3524 = vcmp.eq.f32.partialorder %v3523, 8.507059e+37
    %v3525 = vand.u32 %v2912, 2147483648
    %v3526 = vor.u32 1.1754944e-38, %v3525
    %v3527 = vsel %vm3524, %v3526, %v3522
    %v3528 = vmul.f32 %v3104, %v3527
    %v3529 = vrcp.pop %v2913
    %v3530 = vmul.f32 %v2913, %v3529
    %v3531 = vsub.f32 1.0, %v3530
    %v3532 = vmul.f32 %v3529, %v3531
    %v3533 = vadd.f32 %v3529, %v3532
    %vm3534 = vweird.f32 %v2913
    %vm3535 = vweird.f32 %v3529
    %vm3536 = vmor %vm3534, %vm3535
    %v3537 = vsel %vm3536, %v3529, %v3533
    %v3538 = vand.u32 2147483647, %v2913
    %vm3539 = vcmp.eq.f32.partialorder %v3538, 8.507059e+37
    %v3540 = vand.u32 %v2913, 2147483648
    %v3541 = vor.u32 1.1754944e-38, %v3540
    %v3542 = vsel %vm3539, %v3541, %v3537
    %v3543 = vmul.f32 %v3105, %v3542
    %v3544 = vrcp.pop %v2914
    %v3545 = vmul.f32 %v2914, %v3544
    %v3546 = vsub.f32 1.0, %v3545
    %v3547 = vmul.f32 %v3544, %v3546
    %v3548 = vadd.f32 %v3544, %v3547
    %vm3549 = vweird.f32 %v2914
    %vm3550 = vweird.f32 %v3544
    %vm3551 = vmor %vm3549, %vm3550
    %v3552 = vsel %vm3551, %v3544, %v3548
    %v3553 = vand.u32 2147483647, %v2914
    %vm3554 = vcmp.eq.f32.partialorder %v3553, 8.507059e+37
    %v3555 = vand.u32 %v2914, 2147483648
    %v3556 = vor.u32 1.1754944e-38, %v3555
    %v3557 = vsel %vm3554, %v3556, %v3552
    %v3558 = vmul.f32 %v3106, %v3557
    %v3559 = vrcp.pop %v2915
    %v3560 = vmul.f32 %v2915, %v3559
    %v3561 = vsub.f32 1.0, %v3560
    %v3562 = vmul.f32 %v3559, %v3561
    %v3563 = vadd.f32 %v3559, %v3562
    %vm3564 = vweird.f32 %v2915
    %vm3565 = vweird.f32 %v3559
    %vm3566 = vmor %vm3564, %vm3565
    %v3567 = vsel %vm3566, %v3559, %v3563
    %v3568 = vand.u32 2147483647, %v2915
    %vm3569 = vcmp.eq.f32.partialorder %v3568, 8.507059e+37
    %v3570 = vand.u32 %v2915, 2147483648
    %v3571 = vor.u32 1.1754944e-38, %v3570
    %v3572 = vsel %vm3569, %v3571, %v3567
    %v3573 = vmul.f32 %v3107, %v3572
    %v3574 = vrcp.pop %v2916
    %v3575 = vmul.f32 %v2916, %v3574
    %v3576 = vsub.f32 1.0, %v3575
    %v3577 = vmul.f32 %v3574, %v3576
    %v3578 = vadd.f32 %v3574, %v3577
    %vm3579 = vweird.f32 %v2916
    %vm3580 = vweird.f32 %v3574
    %vm3581 = vmor %vm3579, %vm3580
    %v3582 = vsel %vm3581, %v3574, %v3578
    %v3583 = vand.u32 2147483647, %v2916
    %vm3584 = vcmp.eq.f32.partialorder %v3583, 8.507059e+37
    %v3585 = vand.u32 %v2916, 2147483648
    %v3586 = vor.u32 1.1754944e-38, %v3585
    %v3587 = vsel %vm3584, %v3586, %v3582
    %v3588 = vmul.f32 %v3108, %v3587
    %v3589 = vmul.f32 %v3123, -1.0
    %v3590 = vmul.f32 %v3138, -1.0
    %v3591 = vmul.f32 %v3153, -1.0
    %v3592 = vmul.f32 %v3168, -1.0
    %v3593 = vmul.f32 %v3183, -1.0
    %v3594 = vmul.f32 %v3198, -1.0
    %v3595 = vmul.f32 %v3213, -1.0
    %v3596 = vmul.f32 %v3228, -1.0
    %v3597 = vmul.f32 %v3243, -1.0
    %v3598 = vmul.f32 %v3258, -1.0
    %v3599 = vmul.f32 %v3273, -1.0
    %v3600 = vmul.f32 %v3288, -1.0
    %v3601 = vmul.f32 %v3303, -1.0
    %v3602 = vmul.f32 %v3318, -1.0
    %v3603 = vmul.f32 %v3333, -1.0
    %v3604 = vmul.f32 %v3348, -1.0
    %v3605 = vmul.f32 %v3363, -1.0
    %v3606 = vmul.f32 %v3378, -1.0
    %v3607 = vmul.f32 %v3393, -1.0
    %v3608 = vmul.f32 %v3408, -1.0
    %v3609 = vmul.f32 %v3423, -1.0
    %v3610 = vmul.f32 %v3438, -1.0
    %v3611 = vmul.f32 %v3453, -1.0
    %v3612 = vmul.f32 %v3468, -1.0
    %v3613 = vmul.f32 %v3483, -1.0
    %v3614 = vmul.f32 %v3498, -1.0
    %v3615 = vmul.f32 %v3513, -1.0
    %v3616 = vmul.f32 %v3528, -1.0
    %v3617 = vmul.f32 %v3543, -1.0
    %v3618 = vmul.f32 %v3558, -1.0
    %v3619 = vmul.f32 %v3573, -1.0
    %v3620 = vmul.f32 %v3588, -1.0
    %3621 = vst.msk [vmem:[%s5] sm:$0xff] %vm1647, %v3589
    %3622 = vst.msk [vmem:[%s5 + $0x8] sm:$0xff] %vm1647, %v3590
    %3623 = vst.msk [vmem:[%s5 + $0x10] sm:$0xff] %vm1647, %v3591
    %3624 = vst.msk [vmem:[%s5 + $0x18] sm:$0xff] %vm1647, %v3592
    %3625 = vst.msk [vmem:[%s5 + $0x20] sm:$0xff] %vm1647, %v3593
    %3626 = vst.msk [vmem:[%s5 + $0x28] sm:$0xff] %vm1647, %v3594
    %3627 = vst.msk [vmem:[%s5 + $0x30] sm:$0xff] %vm1647, %v3595
    %3628 = vst.msk [vmem:[%s5 + $0x38] sm:$0xff] %vm1647, %v3596
    %3629 = vst.msk [vmem:[%s5 + $0x40] sm:$0xff] %vm1647, %v3597
    %3630 = vst.msk [vmem:[%s5 + $0x48] sm:$0xff] %vm1647, %v3598
    %3631 = vst.msk [vmem:[%s5 + $0x50] sm:$0xff] %vm1647, %v3599
    %3632 = vst.msk [vmem:[%s5 + $0x58] sm:$0xff] %vm1647, %v3600
    %3633 = vst.msk [vmem:[%s5 + $0x60] sm:$0xff] %vm1647, %v3601
    %3634 = vst.msk [vmem:[%s5 + $0x68] sm:$0xff] %vm1647, %v3602
    %3635 = vst.msk [vmem:[%s5 + $0x70] sm:$0xff] %vm1647, %v3603
    %3636 = vst.msk [vmem:[%s5 + $0x78] sm:$0xff] %vm1647, %v3604
    %3637 = vst.msk [vmem:[%s5 + $0x80] sm:$0xff] %vm1647, %v3605
    %3638 = vst.msk [vmem:[%s5 + $0x88] sm:$0xff] %vm1647, %v3606
    %3639 = vst.msk [vmem:[%s5 + $0x90] sm:$0xff] %vm1647, %v3607
    %3640 = vst.msk [vmem:[%s5 + $0x98] sm:$0xff] %vm1647, %v3608
    %3641 = vst.msk [vmem:[%s5 + $0xa0] sm:$0xff] %vm1647, %v3609
    %3642 = vst.msk [vmem:[%s5 + $0xa8] sm:$0xff] %vm1647, %v3610
    %3643 = vst.msk [vmem:[%s5 + $0xb0] sm:$0xff] %vm1647, %v3611
    %3644 = vst.msk [vmem:[%s5 + $0xb8] sm:$0xff] %vm1647, %v3612
    %3645 = vst.msk [vmem:[%s5 + $0xc0] sm:$0xff] %vm1647, %v3613
    %3646 = vst.msk [vmem:[%s5 + $0xc8] sm:$0xff] %vm1647, %v3614
    %3647 = vst.msk [vmem:[%s5 + $0xd0] sm:$0xff] %vm1647, %v3615
    %3648 = vst.msk [vmem:[%s5 + $0xd8] sm:$0xff] %vm1647, %v3616
    %3649 = vst.msk [vmem:[%s5 + $0xe0] sm:$0xff] %vm1647, %v3617
    %3650 = vst.msk [vmem:[%s5 + $0xe8] sm:$0xff] %vm1647, %v3618
    %3651 = vst.msk [vmem:[%s5 + $0xf0] sm:$0xff] %vm1647, %v3619
    %3652 = vst.msk [vmem:[%s5 + $0xf8] sm:$0xff] %vm1647, %v3620
  $region33: #{tpu_custom_call.1} parent=0 // pred_fallthru
    _
  // Predicated region
  $region34: #{tpu_custom_call.1} parent=0 // pred_check
    _
  $region35: #{tpu_custom_call.1} parent=0 // pred_check_branch
    %3654 = sbr.rel (0) target = $region37
  $region36: #{tpu_custom_call.1} parent=0 // pred_region
    _
  $region37: #{tpu_custom_call.1} parent=0 // pred_fallthru
    _
  // Predicated region
  $region38: #{tpu_custom_call.1} parent=0 // pred_check
    _
  $region39: #{tpu_custom_call.1} parent=0 // pred_check_branch
    %3656 = sbr.rel (0) target = $region41
  $region40: #{tpu_custom_call.1} parent=0 // pred_region
    _
  $region41: #{tpu_custom_call.1} parent=0 // pred_fallthru
    _

</llo_original>
